<compile_context>
chip_gen: v5e
topology: v5e:2x2
jax: 0.10.0
libtpu: 0.0.40
codegen_flags: <defaults>
</compile_context>

<pallas_src>
import numpy as np
import jax
import jax.numpy as jnp
from jax.experimental import pallas as pl
from jax.experimental.pallas import tpu as pltpu


# Geometry pinned by the module: Linear(128*7*7) => input is (N, 1, 28, 28).
H_IN = 28          # input spatial
OH2 = 7            # conv2 output spatial (28 -> 14 -> 7)
C1 = 64            # conv1 channels
C2 = 128           # conv2 channels
KK = 16            # 4x4 taps
LEAK = 0.2
BN_EPS = 1e-5
PAD = 8            # max |row shift| for the implicit conv2 GEMM (7*|dh| + |dw| <= 8)


def _tap_table():
    """Decompose conv2 (k=4, s=2, p=1) over the parity of the conv1 output grid.

    For tap (kh, kw): row parity pi = (kh-1) % 2, row shift dh = (kh-1-pi) // 2
    (same for columns).  Returns 16 taps grouped as 4 parity blocks of 4 taps:
    [(p, kh, kw, dh, dw)] with p = pi*2 + pj.
    """
    taps = []
    for p in range(4):
        pi, pj = p // 2, p % 2
        khs = [kh for kh in range(4) if (kh - 1) % 2 == pi]
        kws = [kw for kw in range(4) if (kw - 1) % 2 == pj]
        for kh in khs:
            for kw in kws:
                dh = (kh - 1 - pi) // 2
                dw = (kw - 1 - pj) // 2
                taps.append((p, kh, kw, dh, dw))
    return taps


_TAPS = _tap_table()   # static python data, closed over by the kernel


def _boundary_masks(n):
    """(n*49, 16) f32 validity masks: masks[r, p*4+t] = 1 iff tap t of parity p
    reads an in-range conv1 pixel for conv2 output row r = (image, oh, ow)."""
    r = np.arange(n * OH2 * OH2)
    oh = (r % (OH2 * OH2)) // OH2
    ow = r % OH2
    m = np.zeros((r.size, 16), np.float32)
    for idx, (_, _, _, dh, dw) in enumerate(_TAPS):
        ok = ((oh + dh >= 0) & (oh + dh <= OH2 - 1) &
              (ow + dw >= 0) & (ow + dw <= OH2 - 1))
        m[:, idx] = ok.astype(np.float32)
    return jnp.asarray(m)


# ---------------------------------------------------------------------------
# The single fused kernel
# ---------------------------------------------------------------------------

def _disc_kernel(p1_ref, w1_ref, w2_ref, mask_ref, gamma_ref, beta_ref,
                 wl_ref, sel_ref, bl_ref, out_ref, pad_ref):
    """Whole Discriminator forward, fully resident in VMEM.

      p1_ref   (4, R, 16)   bf16  conv1 im2col patches, parity-grouped rows (n,a,b)
      w1_ref   (16, 64)     bf16  conv1 weight as (kh*4+kw, cout)
      w2_ref   (4, 64, 512) bf16  conv2 weights: per parity, 4 taps of (cin, cout)
      mask_ref (R, 16)      f32   per-tap row validity masks
      gamma/beta (1, 128)   f32   BatchNorm2d affine parameters
      wl_ref   (R, 128)     f32   Linear weight, NCHW-flatten folded in, tiled over N
      sel_ref  (N, R)       f32   per-image row selector (segment sum)
      bl_ref   (1, 1)       f32   Linear bias
      out_ref  (N, 1)       f32   sigmoid(logit) per image
      pad_ref  (R+16, 512)  f32   scratch: zero-halo buffer for the implicit GEMM
    """
    R = mask_ref.shape[0]
    w1 = w1_ref[...]
    masks = mask_ref[...]

    # Zero ONLY the halo rows.  Rows [PAD, PAD+R) are fully overwritten every
    # parity iteration before being read; halo rows only feed masked taps, but
    # must be finite so 0 * halo stays 0 (VMEM scratch is uninitialized).
    zeros_halo = jnp.zeros((PAD, pad_ref.shape[1]), jnp.float32)
    pad_ref[0:PAD, :] = zeros_halo
    pad_ref[PAD + R:PAD + R + PAD, :] = zeros_halo

    acc = jnp.zeros((R, C2), jnp.float32)           # conv2 pre-BN accumulator
    for p in range(4):
        # conv1 (as matmul) + LeakyReLU for this parity block; never leaves VMEM.
        # (K=16 is shallow for the MXU but conv1 is <1 MFLOP total.)
        b = jnp.dot(p1_ref[p], w1, preferred_element_type=jnp.float32)     # (R, 64)
        b = jnp.maximum(b, LEAK * b).astype(jnp.bfloat16)
        # All 4 conv2 taps of this parity in one MXU call: (R,64)@(64,512).
        z = jnp.dot(b, w2_ref[p], preferred_element_type=jnp.float32)      # (R, 512)
        pad_ref[PAD:PAD + R, :] = z
        for t in range(4):
            _, _, _, dh, dw = _TAPS[p * 4 + t]
            s = OH2 * dh + dw                       # static row shift (implicit GEMM)
            zt = pad_ref[PAD + s:PAD + s + R, t * C2:(t + 1) * C2]         # (R, 128)
            if dh == 0 and dw == 0:
                acc = acc + zt
            else:
                acc = acc + zt * masks[:, p * 4 + t:p * 4 + t + 1]

    # BatchNorm2d over (batch, spatial) per channel, training semantics.
    inv_m = 1.0 / R
    mean = jnp.sum(acc, axis=0, keepdims=True) * inv_m
    xc = acc - mean                                 # hoisted (x - mean) temporary
    var = jnp.sum(xc * xc, axis=0, keepdims=True) * inv_m        # biased variance
    y = xc * jax.lax.rsqrt(var + BN_EPS)
    y = y * gamma_ref[...] + beta_ref[...]
    y = jnp.maximum(y, LEAK * y)                    # LeakyReLU(0.2)

    # Linear(6272, 1) + Sigmoid.  The NCHW flatten permutation is already folded
    # into wl_ref, so this is a VPU multiply + per-image reduction (no activation
    # transpose, no width-1 MXU matmul / lane-sparse store of the big activation).
    prod = y * wl_ref[...]                                               # (R, 128)
    per_img = jnp.dot(sel_ref[...], prod,
                      preferred_element_type=jnp.float32)                # (N, 128)
    z_out = jnp.sum(per_img, axis=1, keepdims=True) + bl_ref[...]        # (N, 1)
    out_ref[...] = jax.nn.sigmoid(z_out)


# ---------------------------------------------------------------------------
# Trace-time preparation (tiny JAX glue: conv1 im2col + weight re-layouts)
# ---------------------------------------------------------------------------

def _prep_inputs(x_nchw, params):
    n = x_nchw.shape[0]
    r = n * OH2 * OH2

    # conv1 im2col on the raw 1-channel 28x28 input (only ~25 KB), tap = kh*4+kw.
    x = x_nchw[:, 0].astype(jnp.float32)                        # (N, 28, 28)
    xpad = jnp.pad(x, ((0, 0), (1, 1), (1, 1)))                 # (N, 30, 30)
    taps = [xpad[:, kh:kh + H_IN:2, kw:kw + H_IN:2]
            for kh in range(4) for kw in range(4)]
    p1 = jnp.stack(taps, axis=-1)                               # (N, 14, 14, 16)
    # Group rows by the parity of the conv1 output position: i = 2a+pi, j = 2b+pj,
    # so conv2's stride-2 taps become static row shifts inside the kernel.
    p1 = p1.reshape(n, OH2, 2, OH2, 2, KK)                      # (n, a, pi, b, pj, t)
    p1 = jnp.transpose(p1, (2, 4, 0, 1, 3, 5)).reshape(4, r, KK)
    p1 = p1.astype(jnp.bfloat16)

    # --- weight re-layouts: one-time cost in a real deployment (cacheable) ---
    # conv1 weight (64,1,4,4) -> (kh*4+kw, cout), bf16 for the MXU.
    w1 = jnp.transpose(params["w1"], (2, 3, 1, 0)).reshape(KK, C1).astype(jnp.bfloat16)

    # conv2 weight (128,64,4,4): per parity, concat its 4 taps as (64, 4*128).
    w2 = params["w2"]
    w2p = jnp.stack([
        jnp.concatenate(
            [w2[:, :, kh, kw].T for (_, kh, kw, _, _) in _TAPS[p * 4:(p + 1) * 4]],
            axis=1)
        for p in range(4)], axis=0).astype(jnp.bfloat16)        # (4, 64, 512)

    masks = _boundary_masks(n)                                  # (R, 16) f32

    gamma = params["bn_gamma"].reshape(1, C2).astype(jnp.float32)
    beta = params["bn_beta"].reshape(1, C2).astype(jnp.float32)

    # Linear weight (1, 6272): PyTorch flattening order is (c, oh, ow); fold that
    # permutation here (trace time) so the kernel keeps the activation lane-dense.
    wl = params["wl"].reshape(C2, OH2, OH2)
    wl = jnp.transpose(wl, (1, 2, 0)).reshape(OH2 * OH2, C2)
    wl = jnp.tile(wl, (n, 1)).astype(jnp.float32)               # (R, 128)

    sel = jnp.repeat(jnp.eye(n, dtype=jnp.float32), OH2 * OH2, axis=1)   # (N, R)
    bl = params["bl"].reshape(1, 1).astype(jnp.float32)
    return p1, w1, w2p, masks, gamma, beta, wl, sel, bl


def discriminator_forward(x_nchw, params):
    n = x_nchw.shape[0]
    r = n * OH2 * OH2
    inputs = _prep_inputs(x_nchw, params)
    vmem = lambda: pl.BlockSpec(memory_space=pltpu.MemorySpace.VMEM)
    # TODO(synk): for large batches, grid the row axis in multiples of 8, mark it
    # "parallel" in dimension_semantics (2 TensorCores on v7x), do BN in a
    # two-pass / cross-step accumulator, and set vmem_limit_bytes explicitly;
    # at batch=2 the whole problem (< 1 MiB of activations) fits VMEM.
    out = pl.pallas_call(
        _disc_kernel,
        out_shape=jax.ShapeDtypeStruct((n, 1), jnp.float32),
        in_specs=[vmem() for _ in range(len(inputs))],
        out_specs=vmem(),
        scratch_shapes=[pltpu.VMEM((r + 2 * PAD, 4 * C2), jnp.float32)],
    )(*inputs)
    return out.reshape(-1)


# ---------------------------------------------------------------------------
# Parameters and a pure-JAX reference (semantics check)
# ---------------------------------------------------------------------------

def init_params(key):
    k1, k2, k3 = jax.random.split(key, 3)
    return {
        "w1": 0.02 * jax.random.normal(k1, (C1, 1, 4, 4), jnp.float32),
        "w2": 0.02 * jax.random.normal(k2, (C2, C1, 4, 4), jnp.float32),
        "bn_gamma": jnp.ones((C2,), jnp.float32),
        "bn_beta": jnp.zeros((C2,), jnp.float32),
        "wl": 0.02 * jax.random.normal(k3, (1, C2 * OH2 * OH2), jnp.float32),
        "bl": jnp.zeros((1,), jnp.float32),
    }


def reference_forward(x_nchw, params):
    dn = ("NCHW", "OIHW", "NCHW")
    y = jax.lax.conv_general_dilated(x_nchw, params["w1"], (2, 2),
                                     ((1, 1), (1, 1)), dimension_numbers=dn)
    y = jnp.where(y >= 0, y, LEAK * y)
    y = jax.lax.conv_general_dilated(y, params["w2"], (2, 2),
                                     ((1, 1), (1, 1)), dimension_numbers=dn)
    mean = jnp.mean(y, axis=(0, 2, 3), keepdims=True)
    var = jnp.mean((y - mean) ** 2, axis=(0, 2, 3), keepdims=True)
    y = (y - mean) * jax.lax.rsqrt(var + BN_EPS)
    y = y * params["bn_gamma"].reshape(1, -1, 1, 1) + params["bn_beta"].reshape(1, -1, 1, 1)
    y = jnp.where(y >= 0, y, LEAK * y)
    flat = y.reshape(y.shape[0], -1)
    z = flat @ params["wl"].T + params["bl"]
    return jax.nn.sigmoid(z).reshape(-1)


if __name__ == "__main__":
    key = jax.random.PRNGKey(0)
    pkey, xkey = jax.random.split(key)
    params = init_params(pkey)
    # Linear(128*7*7) pins the spatial size to 1x28x28 (MNIST digits); batch=2.
    x = jax.random.normal(xkey, (2, 1, 28, 28), jnp.float32)

    out = jax.jit(discriminator_forward)(x, params)
    out = jax.block_until_ready(out)

    ref = reference_forward(x, params)

    assert out.shape == (2,), out.shape
    assert bool(jnp.all(jnp.isfinite(out))), out
    assert bool(jnp.all((out > 0.0) & (out < 1.0))), out
    # bf16 MXU inputs with f32 accumulation -> tight agreement with the f32 reference.
    assert bool(jnp.allclose(out, ref, atol=3e-2, rtol=3e-2)), (out, ref)
    print("KERNEL_OK")
</pallas_src>

<mosaic_0001>
module attributes {stable_mosaic.version = 11 : i64} {
  func.func @_disc_kernel(%arg0: memref<4x98x16xbf16, #tpu.memory_space<vmem>>, %arg1: memref<16x64xbf16, #tpu.memory_space<vmem>>, %arg2: memref<4x64x512xbf16, #tpu.memory_space<vmem>>, %arg3: memref<98x16xf32, #tpu.memory_space<vmem>>, %arg4: memref<1x128xf32, #tpu.memory_space<vmem>>, %arg5: memref<1x128xf32, #tpu.memory_space<vmem>>, %arg6: memref<98x128xf32, #tpu.memory_space<vmem>>, %arg7: memref<2x98xf32, #tpu.memory_space<vmem>>, %arg8: memref<1x1xf32, #tpu.memory_space<vmem>>, %arg9: memref<2x1xf32, #tpu.memory_space<vmem>>, %arg10: memref<114x512xf32, #tpu.memory_space<vmem>>) attributes {dimension_semantics = [], scalar_prefetch = 0 : i64, scratch_operands = 1 : i64, tpu.core_type = #tpu.core_type<tc>} {
    %c0 = arith.constant 0 : index
    %c0_0 = arith.constant 0 : index
    %0 = vector.load %arg1[%c0, %c0_0] : memref<16x64xbf16, #tpu.memory_space<vmem>>, vector<16x64xbf16>
    %c0_1 = arith.constant 0 : index
    %c0_2 = arith.constant 0 : index
    %1 = vector.load %arg3[%c0_1, %c0_2] : memref<98x16xf32, #tpu.memory_space<vmem>>, vector<98x16xf32>
    %cst = arith.constant 0.000000e+00 : f32
    %2 = vector.broadcast %cst : f32 to vector<8x512xf32>
    %c0_3 = arith.constant 0 : index
    %c0_4 = arith.constant 0 : index
    %3 = vector.load %arg10[%c0_3, %c0_4] : memref<114x512xf32, #tpu.memory_space<vmem>>, vector<8x512xf32>
    tpu.vector_store %arg10[%c0_3, %c0_4], %2 {strides = array<i32>} : memref<114x512xf32, #tpu.memory_space<vmem>>, vector<8x512xf32>,
    %c106 = arith.constant 106 : index
    %c0_5 = arith.constant 0 : index
    %4 = vector.load %arg10[%c106, %c0_5] : memref<114x512xf32, #tpu.memory_space<vmem>>, vector<8x512xf32>
    tpu.vector_store %arg10[%c106, %c0_5], %2 {strides = array<i32>} : memref<114x512xf32, #tpu.memory_space<vmem>>, vector<8x512xf32>,
    %cst_6 = arith.constant 0.000000e+00 : f32
    %5 = vector.broadcast %cst_6 : f32 to vector<98x128xf32>
    %c0_7 = arith.constant 0 : index
    %c0_8 = arith.constant 0 : index
    %c0_9 = arith.constant 0 : index
    %6 = vector.load %arg0[%c0_7, %c0_8, %c0_9] : memref<4x98x16xbf16, #tpu.memory_space<vmem>>, vector<1x98x16xbf16>
    %7 = vector.shape_cast %6 : vector<1x98x16xbf16> to vector<98x16xbf16>
    %cst_10 = arith.constant dense<0.000000e+00> : vector<98x64xf32>
    %8 = tpu.matmul %7, %0, %cst_10 {dimension_numbers = #tpu.dot_dimension_numbers<[1], [0], [0], [1], [0, 0, 1, 1], [], []>} : vector<98x16xbf16>, vector<16x64xbf16>, vector<98x64xf32> -> vector<98x64xf32>
    %cst_11 = arith.constant 2.000000e-01 : f32
    %9 = vector.broadcast %cst_11 : f32 to vector<98x64xf32>
    %10 = arith.mulf %9, %8 : vector<98x64xf32>
    %11 = arith.maximumf %8, %10 : vector<98x64xf32>
    %12 = arith.truncf %11 : vector<98x64xf32> to vector<98x64xbf16>
    %c0_12 = arith.constant 0 : index
    %c0_13 = arith.constant 0 : index
    %c0_14 = arith.constant 0 : index
    %13 = vector.load %arg2[%c0_12, %c0_13, %c0_14] : memref<4x64x512xbf16, #tpu.memory_space<vmem>>, vector<1x64x512xbf16>
    %14 = vector.shape_cast %13 : vector<1x64x512xbf16> to vector<64x512xbf16>
    %cst_15 = arith.constant dense<0.000000e+00> : vector<98x512xf32>
    %15 = tpu.matmul %12, %14, %cst_15 {dimension_numbers = #tpu.dot_dimension_numbers<[1], [0], [0], [1], [0, 0, 1, 1], [], []>} : vector<98x64xbf16>, vector<64x512xbf16>, vector<98x512xf32> -> vector<98x512xf32>
    %c8 = arith.constant 8 : index
    %c0_16 = arith.constant 0 : index
    %16 = vector.load %arg10[%c8, %c0_16] : memref<114x512xf32, #tpu.memory_space<vmem>>, vector<98x512xf32>
    tpu.vector_store %arg10[%c8, %c0_16], %15 {strides = array<i32>} : memref<114x512xf32, #tpu.memory_space<vmem>>, vector<98x512xf32>,
    %c8_17 = arith.constant 8 : index
    %c0_18 = arith.constant 0 : index
    %17 = vector.load %arg10[%c8_17, %c0_18] : memref<114x512xf32, #tpu.memory_space<vmem>>, vector<98x128xf32>
    %18 = arith.addf %5, %17 : vector<98x128xf32>
    %c9 = arith.constant 9 : index
    %c128 = arith.constant 128 : index
    %19 = vector.load %arg10[%c9, %c128] : memref<114x512xf32, #tpu.memory_space<vmem>>, vector<98x128xf32>
    %20 = vector.extract_strided_slice %1 {offsets = [0, 1], sizes = [98, 1], strides = [1, 1]} : vector<98x16xf32> to vector<98x1xf32>
    %21 = vector.broadcast %20 : vector<98x1xf32> to vector<98x128xf32>
    %22 = arith.mulf %19, %21 : vector<98x128xf32>
    %23 = arith.addf %18, %22 : vector<98x128xf32>
    %c15 = arith.constant 15 : index
    %c256 = arith.constant 256 : index
    %24 = vector.load %arg10[%c15, %c256] : memref<114x512xf32, #tpu.memory_space<vmem>>, vector<98x128xf32>
    %25 = vector.extract_strided_slice %1 {offsets = [0, 2], sizes = [98, 1], strides = [1, 1]} : vector<98x16xf32> to vector<98x1xf32>
    %26 = vector.broadcast %25 : vector<98x1xf32> to vector<98x128xf32>
    %27 = arith.mulf %24, %26 : vector<98x128xf32>
    %28 = arith.addf %23, %27 : vector<98x128xf32>
    %c16 = arith.constant 16 : index
    %c384 = arith.constant 384 : index
    %29 = vector.load %arg10[%c16, %c384] : memref<114x512xf32, #tpu.memory_space<vmem>>, vector<98x128xf32>
    %30 = vector.extract_strided_slice %1 {offsets = [0, 3], sizes = [98, 1], strides = [1, 1]} : vector<98x16xf32> to vector<98x1xf32>
    %31 = vector.broadcast %30 : vector<98x1xf32> to vector<98x128xf32>
    %32 = arith.mulf %29, %31 : vector<98x128xf32>
    %33 = arith.addf %28, %32 : vector<98x128xf32>
    %c1 = arith.constant 1 : index
    %c0_19 = arith.constant 0 : index
    %c0_20 = arith.constant 0 : index
    %34 = vector.load %arg0[%c1, %c0_19, %c0_20] : memref<4x98x16xbf16, #tpu.memory_space<vmem>>, vector<1x98x16xbf16>
    %35 = vector.shape_cast %34 : vector<1x98x16xbf16> to vector<98x16xbf16>
    %cst_21 = arith.constant dense<0.000000e+00> : vector<98x64xf32>
    %36 = tpu.matmul %35, %0, %cst_21 {dimension_numbers = #tpu.dot_dimension_numbers<[1], [0], [0], [1], [0, 0, 1, 1], [], []>} : vector<98x16xbf16>, vector<16x64xbf16>, vector<98x64xf32> -> vector<98x64xf32>
    %cst_22 = arith.constant 2.000000e-01 : f32
    %37 = vector.broadcast %cst_22 : f32 to vector<98x64xf32>
    %38 = arith.mulf %37, %36 : vector<98x64xf32>
    %39 = arith.maximumf %36, %38 : vector<98x64xf32>
    %40 = arith.truncf %39 : vector<98x64xf32> to vector<98x64xbf16>
    %c1_23 = arith.constant 1 : index
    %c0_24 = arith.constant 0 : index
    %c0_25 = arith.constant 0 : index
    %41 = vector.load %arg2[%c1_23, %c0_24, %c0_25] : memref<4x64x512xbf16, #tpu.memory_space<vmem>>, vector<1x64x512xbf16>
    %42 = vector.shape_cast %41 : vector<1x64x512xbf16> to vector<64x512xbf16>
    %cst_26 = arith.constant dense<0.000000e+00> : vector<98x512xf32>
    %43 = tpu.matmul %40, %42, %cst_26 {dimension_numbers = #tpu.dot_dimension_numbers<[1], [0], [0], [1], [0, 0, 1, 1], [], []>} : vector<98x64xbf16>, vector<64x512xbf16>, vector<98x512xf32> -> vector<98x512xf32>
    %c8_27 = arith.constant 8 : index
    %c0_28 = arith.constant 0 : index
    %44 = vector.load %arg10[%c8_27, %c0_28] : memref<114x512xf32, #tpu.memory_space<vmem>>, vector<98x512xf32>
    tpu.vector_store %arg10[%c8_27, %c0_28], %43 {strides = array<i32>} : memref<114x512xf32, #tpu.memory_space<vmem>>, vector<98x512xf32>,
    %c7 = arith.constant 7 : index
    %c0_29 = arith.constant 0 : index
    %45 = vector.load %arg10[%c7, %c0_29] : memref<114x512xf32, #tpu.memory_space<vmem>>, vector<98x128xf32>
    %46 = vector.extract_strided_slice %1 {offsets = [0, 4], sizes = [98, 1], strides = [1, 1]} : vector<98x16xf32> to vector<98x1xf32>
    %47 = vector.broadcast %46 : vector<98x1xf32> to vector<98x128xf32>
    %48 = arith.mulf %45, %47 : vector<98x128xf32>
    %49 = arith.addf %33, %48 : vector<98x128xf32>
    %c8_30 = arith.constant 8 : index
    %c128_31 = arith.constant 128 : index
    %50 = vector.load %arg10[%c8_30, %c128_31] : memref<114x512xf32, #tpu.memory_space<vmem>>, vector<98x128xf32>
    %51 = arith.addf %49, %50 : vector<98x128xf32>
    %c14 = arith.constant 14 : index
    %c256_32 = arith.constant 256 : index
    %52 = vector.load %arg10[%c14, %c256_32] : memref<114x512xf32, #tpu.memory_space<vmem>>, vector<98x128xf32>
    %53 = vector.extract_strided_slice %1 {offsets = [0, 6], sizes = [98, 1], strides = [1, 1]} : vector<98x16xf32> to vector<98x1xf32>
    %54 = vector.broadcast %53 : vector<98x1xf32> to vector<98x128xf32>
    %55 = arith.mulf %52, %54 : vector<98x128xf32>
    %56 = arith.addf %51, %55 : vector<98x128xf32>
    %c15_33 = arith.constant 15 : index
    %c384_34 = arith.constant 384 : index
    %57 = vector.load %arg10[%c15_33, %c384_34] : memref<114x512xf32, #tpu.memory_space<vmem>>, vector<98x128xf32>
    %58 = vector.extract_strided_slice %1 {offsets = [0, 7], sizes = [98, 1], strides = [1, 1]} : vector<98x16xf32> to vector<98x1xf32>
    %59 = vector.broadcast %58 : vector<98x1xf32> to vector<98x128xf32>
    %60 = arith.mulf %57, %59 : vector<98x128xf32>
    %61 = arith.addf %56, %60 : vector<98x128xf32>
    %c2 = arith.constant 2 : index
    %c0_35 = arith.constant 0 : index
    %c0_36 = arith.constant 0 : index
    %62 = vector.load %arg0[%c2, %c0_35, %c0_36] : memref<4x98x16xbf16, #tpu.memory_space<vmem>>, vector<1x98x16xbf16>
    %63 = vector.shape_cast %62 : vector<1x98x16xbf16> to vector<98x16xbf16>
    %cst_37 = arith.constant dense<0.000000e+00> : vector<98x64xf32>
    %64 = tpu.matmul %63, %0, %cst_37 {dimension_numbers = #tpu.dot_dimension_numbers<[1], [0], [0], [1], [0, 0, 1, 1], [], []>} : vector<98x16xbf16>, vector<16x64xbf16>, vector<98x64xf32> -> vector<98x64xf32>
    %cst_38 = arith.constant 2.000000e-01 : f32
    %65 = vector.broadcast %cst_38 : f32 to vector<98x64xf32>
    %66 = arith.mulf %65, %64 : vector<98x64xf32>
    %67 = arith.maximumf %64, %66 : vector<98x64xf32>
    %68 = arith.truncf %67 : vector<98x64xf32> to vector<98x64xbf16>
    %c2_39 = arith.constant 2 : index
    %c0_40 = arith.constant 0 : index
    %c0_41 = arith.constant 0 : index
    %69 = vector.load %arg2[%c2_39, %c0_40, %c0_41] : memref<4x64x512xbf16, #tpu.memory_space<vmem>>, vector<1x64x512xbf16>
    %70 = vector.shape_cast %69 : vector<1x64x512xbf16> to vector<64x512xbf16>
    %cst_42 = arith.constant dense<0.000000e+00> : vector<98x512xf32>
    %71 = tpu.matmul %68, %70, %cst_42 {dimension_numbers = #tpu.dot_dimension_numbers<[1], [0], [0], [1], [0, 0, 1, 1], [], []>} : vector<98x64xbf16>, vector<64x512xbf16>, vector<98x512xf32> -> vector<98x512xf32>
    %c8_43 = arith.constant 8 : index
    %c0_44 = arith.constant 0 : index
    %72 = vector.load %arg10[%c8_43, %c0_44] : memref<114x512xf32, #tpu.memory_space<vmem>>, vector<98x512xf32>
    tpu.vector_store %arg10[%c8_43, %c0_44], %71 {strides = array<i32>} : memref<114x512xf32, #tpu.memory_space<vmem>>, vector<98x512xf32>,
    %c1_45 = arith.constant 1 : index
    %c0_46 = arith.constant 0 : index
    %73 = vector.load %arg10[%c1_45, %c0_46] : memref<114x512xf32, #tpu.memory_space<vmem>>, vector<98x128xf32>
    %74 = vector.extract_strided_slice %1 {offsets = [0, 8], sizes = [98, 1], strides = [1, 1]} : vector<98x16xf32> to vector<98x1xf32>
    %75 = vector.broadcast %74 : vector<98x1xf32> to vector<98x128xf32>
    %76 = arith.mulf %73, %75 : vector<98x128xf32>
    %77 = arith.addf %61, %76 : vector<98x128xf32>
    %c2_47 = arith.constant 2 : index
    %c128_48 = arith.constant 128 : index
    %78 = vector.load %arg10[%c2_47, %c128_48] : memref<114x512xf32, #tpu.memory_space<vmem>>, vector<98x128xf32>
    %79 = vector.extract_strided_slice %1 {offsets = [0, 9], sizes = [98, 1], strides = [1, 1]} : vector<98x16xf32> to vector<98x1xf32>
    %80 = vector.broadcast %79 : vector<98x1xf32> to vector<98x128xf32>
    %81 = arith.mulf %78, %80 : vector<98x128xf32>
    %82 = arith.addf %77, %81 : vector<98x128xf32>
    %c8_49 = arith.constant 8 : index
    %c256_50 = arith.constant 256 : index
    %83 = vector.load %arg10[%c8_49, %c256_50] : memref<114x512xf32, #tpu.memory_space<vmem>>, vector<98x128xf32>
    %84 = arith.addf %82, %83 : vector<98x128xf32>
    %c9_51 = arith.constant 9 : index
    %c384_52 = arith.constant 384 : index
    %85 = vector.load %arg10[%c9_51, %c384_52] : memref<114x512xf32, #tpu.memory_space<vmem>>, vector<98x128xf32>
    %86 = vector.extract_strided_slice %1 {offsets = [0, 11], sizes = [98, 1], strides = [1, 1]} : vector<98x16xf32> to vector<98x1xf32>
    %87 = vector.broadcast %86 : vector<98x1xf32> to vector<98x128xf32>
    %88 = arith.mulf %85, %87 : vector<98x128xf32>
    %89 = arith.addf %84, %88 : vector<98x128xf32>
    %c3 = arith.constant 3 : index
    %c0_53 = arith.constant 0 : index
    %c0_54 = arith.constant 0 : index
    %90 = vector.load %arg0[%c3, %c0_53, %c0_54] : memref<4x98x16xbf16, #tpu.memory_space<vmem>>, vector<1x98x16xbf16>
    %91 = vector.shape_cast %90 : vector<1x98x16xbf16> to vector<98x16xbf16>
    %cst_55 = arith.constant dense<0.000000e+00> : vector<98x64xf32>
    %92 = tpu.matmul %91, %0, %cst_55 {dimension_numbers = #tpu.dot_dimension_numbers<[1], [0], [0], [1], [0, 0, 1, 1], [], []>} : vector<98x16xbf16>, vector<16x64xbf16>, vector<98x64xf32> -> vector<98x64xf32>
    %cst_56 = arith.constant 2.000000e-01 : f32
    %93 = vector.broadcast %cst_56 : f32 to vector<98x64xf32>
    %94 = arith.mulf %93, %92 : vector<98x64xf32>
    %95 = arith.maximumf %92, %94 : vector<98x64xf32>
    %96 = arith.truncf %95 : vector<98x64xf32> to vector<98x64xbf16>
    %c3_57 = arith.constant 3 : index
    %c0_58 = arith.constant 0 : index
    %c0_59 = arith.constant 0 : index
    %97 = vector.load %arg2[%c3_57, %c0_58, %c0_59] : memref<4x64x512xbf16, #tpu.memory_space<vmem>>, vector<1x64x512xbf16>
    %98 = vector.shape_cast %97 : vector<1x64x512xbf16> to vector<64x512xbf16>
    %cst_60 = arith.constant dense<0.000000e+00> : vector<98x512xf32>
    %99 = tpu.matmul %96, %98, %cst_60 {dimension_numbers = #tpu.dot_dimension_numbers<[1], [0], [0], [1], [0, 0, 1, 1], [], []>} : vector<98x64xbf16>, vector<64x512xbf16>, vector<98x512xf32> -> vector<98x512xf32>
    %c8_61 = arith.constant 8 : index
    %c0_62 = arith.constant 0 : index
    %100 = vector.load %arg10[%c8_61, %c0_62] : memref<114x512xf32, #tpu.memory_space<vmem>>, vector<98x512xf32>
    tpu.vector_store %arg10[%c8_61, %c0_62], %99 {strides = array<i32>} : memref<114x512xf32, #tpu.memory_space<vmem>>, vector<98x512xf32>,
    %c0_63 = arith.constant 0 : index
    %c0_64 = arith.constant 0 : index
    %101 = vector.load %arg10[%c0_63, %c0_64] : memref<114x512xf32, #tpu.memory_space<vmem>>, vector<98x128xf32>
    %102 = vector.extract_strided_slice %1 {offsets = [0, 12], sizes = [98, 1], strides = [1, 1]} : vector<98x16xf32> to vector<98x1xf32>
    %103 = vector.broadcast %102 : vector<98x1xf32> to vector<98x128xf32>
    %104 = arith.mulf %101, %103 : vector<98x128xf32>
    %105 = arith.addf %89, %104 : vector<98x128xf32>
    %c1_65 = arith.constant 1 : index
    %c128_66 = arith.constant 128 : index
    %106 = vector.load %arg10[%c1_65, %c128_66] : memref<114x512xf32, #tpu.memory_space<vmem>>, vector<98x128xf32>
    %107 = vector.extract_strided_slice %1 {offsets = [0, 13], sizes = [98, 1], strides = [1, 1]} : vector<98x16xf32> to vector<98x1xf32>
    %108 = vector.broadcast %107 : vector<98x1xf32> to vector<98x128xf32>
    %109 = arith.mulf %106, %108 : vector<98x128xf32>
    %110 = arith.addf %105, %109 : vector<98x128xf32>
    %c7_67 = arith.constant 7 : index
    %c256_68 = arith.constant 256 : index
    %111 = vector.load %arg10[%c7_67, %c256_68] : memref<114x512xf32, #tpu.memory_space<vmem>>, vector<98x128xf32>
    %112 = vector.extract_strided_slice %1 {offsets = [0, 14], sizes = [98, 1], strides = [1, 1]} : vector<98x16xf32> to vector<98x1xf32>
    %113 = vector.broadcast %112 : vector<98x1xf32> to vector<98x128xf32>
    %114 = arith.mulf %111, %113 : vector<98x128xf32>
    %115 = arith.addf %110, %114 : vector<98x128xf32>
    %c8_69 = arith.constant 8 : index
    %c384_70 = arith.constant 384 : index
    %116 = vector.load %arg10[%c8_69, %c384_70] : memref<114x512xf32, #tpu.memory_space<vmem>>, vector<98x128xf32>
    %117 = arith.addf %115, %116 : vector<98x128xf32>
    %cst_71 = arith.constant dense<0.000000e+00> : vector<128xf32>
    %118 = vector.multi_reduction <add>, %117, %cst_71 [0] : vector<98x128xf32> to vector<128xf32>
    %119 = vector.shape_cast %118 : vector<128xf32> to vector<1x128xf32>
    %cst_72 = arith.constant 0.0102040814 : f32
    %120 = vector.broadcast %cst_72 : f32 to vector<1x128xf32>
    %121 = arith.mulf %119, %120 : vector<1x128xf32>
    %122 = vector.broadcast %121 : vector<1x128xf32> to vector<98x128xf32>
    %123 = arith.subf %117, %122 : vector<98x128xf32>
    %124 = arith.mulf %123, %123 : vector<98x128xf32>
    %cst_73 = arith.constant dense<0.000000e+00> : vector<128xf32>
    %125 = vector.multi_reduction <add>, %124, %cst_73 [0] : vector<98x128xf32> to vector<128xf32>
    %126 = vector.shape_cast %125 : vector<128xf32> to vector<1x128xf32>
    %cst_74 = arith.constant 0.0102040814 : f32
    %127 = vector.broadcast %cst_74 : f32 to vector<1x128xf32>
    %128 = arith.mulf %126, %127 : vector<1x128xf32>
    %cst_75 = arith.constant 9.99999974E-6 : f32
    %129 = vector.broadcast %cst_75 : f32 to vector<1x128xf32>
    %130 = arith.addf %128, %129 : vector<1x128xf32>
    %131 = math.rsqrt %130 : vector<1x128xf32>
    %132 = vector.broadcast %131 : vector<1x128xf32> to vector<98x128xf32>
    %133 = arith.mulf %123, %132 : vector<98x128xf32>
    %c0_76 = arith.constant 0 : index
    %c0_77 = arith.constant 0 : index
    %134 = vector.load %arg4[%c0_76, %c0_77] : memref<1x128xf32, #tpu.memory_space<vmem>>, vector<1x128xf32>
    %135 = vector.broadcast %134 : vector<1x128xf32> to vector<98x128xf32>
    %136 = arith.mulf %133, %135 : vector<98x128xf32>
    %c0_78 = arith.constant 0 : index
    %c0_79 = arith.constant 0 : index
    %137 = vector.load %arg5[%c0_78, %c0_79] : memref<1x128xf32, #tpu.memory_space<vmem>>, vector<1x128xf32>
    %138 = vector.broadcast %137 : vector<1x128xf32> to vector<98x128xf32>
    %139 = arith.addf %136, %138 : vector<98x128xf32>
    %cst_80 = arith.constant 2.000000e-01 : f32
    %140 = vector.broadcast %cst_80 : f32 to vector<98x128xf32>
    %141 = arith.mulf %140, %139 : vector<98x128xf32>
    %142 = arith.maximumf %139, %141 : vector<98x128xf32>
    %c0_81 = arith.constant 0 : index
    %c0_82 = arith.constant 0 : index
    %143 = vector.load %arg6[%c0_81, %c0_82] : memref<98x128xf32, #tpu.memory_space<vmem>>, vector<98x128xf32>
    %144 = arith.mulf %142, %143 : vector<98x128xf32>
    %c0_83 = arith.constant 0 : index
    %c0_84 = arith.constant 0 : index
    %145 = vector.load %arg7[%c0_83, %c0_84] : memref<2x98xf32, #tpu.memory_space<vmem>>, vector<2x98xf32>
    %cst_85 = arith.constant dense<0.000000e+00> : vector<2x128xf32>
    %146 = tpu.matmul %145, %144, %cst_85 {dimension_numbers = #tpu.dot_dimension_numbers<[1], [0], [0], [1], [0, 0, 1, 1], [], []>} : vector<2x98xf32>, vector<98x128xf32>, vector<2x128xf32> -> vector<2x128xf32>
    %cst_86 = arith.constant dense<0.000000e+00> : vector<2xf32>
    %147 = vector.multi_reduction <add>, %146, %cst_86 [1] : vector<2x128xf32> to vector<2xf32>
    %148 = vector.shape_cast %147 : vector<2xf32> to vector<2x1xf32>
    %c0_87 = arith.constant 0 : index
    %c0_88 = arith.constant 0 : index
    %149 = vector.load %arg8[%c0_87, %c0_88] : memref<1x1xf32, #tpu.memory_space<vmem>>, vector<1x1xf32>
    %150 = vector.broadcast %149 : vector<1x1xf32> to vector<2x1xf32>
    %151 = arith.addf %148, %150 : vector<2x1xf32>
    %152 = arith.negf %151 : vector<2x1xf32>
    %153 = math.exp %152 : vector<2x1xf32>
    %cst_89 = arith.constant 1.000000e+00 : f32
    %154 = vector.broadcast %cst_89 : f32 to vector<2x1xf32>
    %155 = arith.addf %154, %153 : vector<2x1xf32>
    %156 = arith.divf %154, %155 : vector<2x1xf32>
    %c0_90 = arith.constant 0 : index
    %c0_91 = arith.constant 0 : index
    %157 = vector.load %arg9[%c0_90, %c0_91] : memref<2x1xf32, #tpu.memory_space<vmem>>, vector<2x1xf32>
    tpu.vector_store %arg9[%c0_90, %c0_91], %156 {strides = array<i32>} : memref<2x1xf32, #tpu.memory_space<vmem>>, vector<2x1xf32>,
    return
  }
}

</mosaic_0001>

<llo_original>
// kernel: tile.7
$region0: #{tile.7}
  %s0 = inlined_call_operand.vmem [shape: f32[2,49,128], index: 0, kind: input, shape index: {}]
  %s1 = inlined_call_operand.vmem [shape: f32[98,128], index: 1, kind: output, shape index: {}]
  %v2 = vld [vmem:[%s0] sm:$0xff]
  %3 = vst [vmem:[%s1] sm:$0xff] %v2
  %s4 = scalar_lea.vmem %s0, 8
  %v5 = vld [vmem:[%s4] sm:$0xff]
  %s6 = scalar_lea.vmem %s1, 8
  %7 = vst [vmem:[%s6] sm:$0xff] %v5
  %s8 = scalar_lea.vmem %s0, 16
  %v9 = vld [vmem:[%s8] sm:$0xff]
  %s10 = scalar_lea.vmem %s1, 16
  %11 = vst [vmem:[%s10] sm:$0xff] %v9
  %s12 = scalar_lea.vmem %s0, 24
  %v13 = vld [vmem:[%s12] sm:$0xff]
  %s14 = scalar_lea.vmem %s1, 24
  %15 = vst [vmem:[%s14] sm:$0xff] %v13
  %s16 = scalar_lea.vmem %s0, 32
  %v17 = vld [vmem:[%s16] sm:$0xff]
  %s18 = scalar_lea.vmem %s1, 32
  %19 = vst [vmem:[%s18] sm:$0xff] %v17
  %s20 = scalar_lea.vmem %s0, 40
  %v21 = vld [vmem:[%s20] sm:$0xff]
  %s22 = scalar_lea.vmem %s1, 40
  %23 = vst [vmem:[%s22] sm:$0xff] %v21
  %s24 = scalar_lea.vmem %s0, 48
  %s25 = smov 3
  %v26 = vld [vmem:[%s24] ss:$8 sm:%s25]
  %s27 = scalar_lea.vmem %s1, 48
  %28 = vst [vmem:[%s27] sm:$0x3] %v26
  %s29 = scalar_lea.vmem %s0, 57
  %v30 = vld [vmem:[%s29] sm:$0xff]
  %s31 = scalar_lea.vmem %s1, 50
  %32 = vst [vmem:[%s31] sm:$0xff] %v30
  %s33 = scalar_lea.vmem %s0, 65
  %v34 = vld [vmem:[%s33] sm:$0xff]
  %s35 = scalar_lea.vmem %s1, 58
  %36 = vst [vmem:[%s35] sm:$0xff] %v34
  %s37 = scalar_lea.vmem %s0, 73
  %v38 = vld [vmem:[%s37] sm:$0xff]
  %s39 = scalar_lea.vmem %s1, 66
  %40 = vst [vmem:[%s39] sm:$0xff] %v38
  %s41 = scalar_lea.vmem %s0, 81
  %v42 = vld [vmem:[%s41] sm:$0xff]
  %s43 = scalar_lea.vmem %s1, 74
  %44 = vst [vmem:[%s43] sm:$0xff] %v42
  %s45 = scalar_lea.vmem %s0, 89
  %v46 = vld [vmem:[%s45] sm:$0xff]
  %s47 = scalar_lea.vmem %s1, 82
  %48 = vst [vmem:[%s47] sm:$0xff] %v46
  %s49 = scalar_lea.vmem %s0, 97
  %v50 = vld [vmem:[%s49] sm:$0xff]
  %s51 = scalar_lea.vmem %s1, 90
  %52 = vst [vmem:[%s51] sm:$0xff] %v50

// kernel: discriminator_forward.1
$region0: #{discriminator_forward.1}
  #allocation0 [shape = 'u32[]', space=smem, size = 0x4, offset = 0x4, fixed_abs, tag = 'smem constant byte address 0x4 - core index']
  #allocation1 [shape = 'u32[72,128]{1,0:T(1,128)}', space=vmem, size = 0x9000, scoped, tag = 'internal scratch']
  #allocation2 [shape = 'f32[114,512]{1,0:T(8,128)}', space=vmem, size = 0x3c000, scoped, tag = 'scratch operand']
  #allocation3 [shape = 'f32[1,1]{1,0:T(1,128)S(1)}', space=vmem, size = 0x200, scoped, tag = 'scoped memory for discriminator_forward.1']
  %s0 = inlined_call_operand.vmem [shape: bf16[4,98,16], index: 0, kind: input, shape index: {}]
  %s1 = inlined_call_operand.vmem [shape: bf16[16,64], index: 1, kind: input, shape index: {}]
  %s2 = inlined_call_operand.vmem [shape: bf16[4,64,512], index: 2, kind: input, shape index: {}]
  %s3 = inlined_call_operand.vmem [shape: f32[98,16], index: 3, kind: input, shape index: {}]
  %s4 = inlined_call_operand.vmem [shape: f32[1,128], index: 4, kind: input, shape index: {}]
  %s5 = inlined_call_operand.vmem [shape: f32[1,128], index: 5, kind: input, shape index: {}]
  %s6 = inlined_call_operand.vmem [shape: f32[98,128], index: 6, kind: input, shape index: {}]
  %s7 = inlined_call_operand.vmem [shape: f32[2,98], index: 7, kind: input, shape index: {}]
  %s8 = inlined_call_operand.<no memory space> [shape: f32[1,1], index: 8, kind: input, shape index: {}]
  %s9 = inlined_call_operand.vmem [shape: f32[2,1], index: 9, kind: output, shape index: {}]
  %s10 = sld [smem:[#allocation0]]
  $region46: #{discriminator_forward.1} parent=0
    _
  %s12 = ssub.s32 1, %s10
  %s13 = scalar_select 0, %s12, %s10
  %v14 = vstv %s8
  %15 = vst [vmem:[#allocation3] sm:$0x1] %v14
  // Predicated region
  $region2: #{discriminator_forward.1} parent=0 // pred_check
    _
  $region3: #{discriminator_forward.1} parent=0 // pred_check_branch
    %17 = sbr.rel (0) target = $region5
  $region4: #{discriminator_forward.1} parent=0 // pred_region
    _
  $region5: #{discriminator_forward.1} parent=0 // pred_fallthru
    _
  // Predicated region
  $region6: #{discriminator_forward.1} parent=0 // pred_check
    _
  $region7: #{discriminator_forward.1} parent=0 // pred_check_branch
    %19 = sbr.rel (0) target = $region9
  $region8: #{discriminator_forward.1} parent=0 // pred_region
    _
  $region9: #{discriminator_forward.1} parent=0 // pred_fallthru
    _
  // Predicated region
  $region10: #{discriminator_forward.1} parent=0 // pred_check
    _
  $region11: #{discriminator_forward.1} parent=0 // pred_check_branch
    %21 = sbr.rel (0) target = $region13
  $region12: #{discriminator_forward.1} parent=0 // pred_region
    _
  $region13: #{discriminator_forward.1} parent=0 // pred_fallthru
    _
  // Predicated region
  $region14: #{discriminator_forward.1} parent=0 // pred_check
    _
  $region15: #{discriminator_forward.1} parent=0 // pred_check_branch
    %23 = sbr.rel (0) target = $region17
  $region16: #{discriminator_forward.1} parent=0 // pred_region
    _
  $region17: #{discriminator_forward.1} parent=0 // pred_fallthru
    _
  // Predicated region
  $region18: #{discriminator_forward.1} parent=0 // pred_check
    _
  $region19: #{discriminator_forward.1} parent=0 // pred_check_branch
    %25 = sbr.rel (0) target = $region21
  $region20: #{discriminator_forward.1} parent=0 // pred_region
    _
  $region21: #{discriminator_forward.1} parent=0 // pred_fallthru
    _
  // Predicated region
  $region22: #{discriminator_forward.1} parent=0 // pred_check
    _
  $region23: #{discriminator_forward.1} parent=0 // pred_check_branch
    %27 = sbr.rel (0) target = $region25
  $region24: #{discriminator_forward.1} parent=0 // pred_region
    _
  $region25: #{discriminator_forward.1} parent=0 // pred_fallthru
    _
  // Predicated region
  $region26: #{discriminator_forward.1} parent=0 // pred_check
    _
  $region27: #{discriminator_forward.1} parent=0 // pred_check_branch
    %29 = sbr.rel (0) target = $region29
  $region28: #{discriminator_forward.1} parent=0 // pred_region
    _
  $region29: #{discriminator_forward.1} parent=0 // pred_fallthru
    _
  // Predicated region
  $region30: #{discriminator_forward.1} parent=0 // pred_check
    _
  $region31: #{discriminator_forward.1} parent=0 // pred_check_branch
    %31 = sbr.rel (0) target = $region33
  $region32: #{discriminator_forward.1} parent=0 // pred_region
    _
  $region33: #{discriminator_forward.1} parent=0 // pred_fallthru
    _
  // Predicated region
  $region34: #{discriminator_forward.1} parent=0 // pred_check
    _
  $region35: #{discriminator_forward.1} parent=0 // pred_check_branch
    %33 = sbr.rel (0) target = $region37
  $region36: #{discriminator_forward.1} parent=0 // pred_region
    _
  $region37: #{discriminator_forward.1} parent=0 // pred_fallthru
    _
  %v35 = vld [vmem:[%s1] sm:$0xf]
  %v36 = vld [vmem:[%s1 + $0x4] sm:$0xf]
  %v37 = vld [vmem:[%s3] sm:$0xff]
  %v38 = vld [vmem:[%s3 + $0x8] sm:$0xff]
  %v39 = vld [vmem:[%s3 + $0x10] sm:$0xff]
  %v40 = vld [vmem:[%s3 + $0x18] sm:$0xff]
  %v41 = vld [vmem:[%s3 + $0x20] sm:$0xff]
  %v42 = vld [vmem:[%s3 + $0x28] sm:$0xff]
  %v43 = vld [vmem:[%s3 + $0x30] sm:$0xff]
  %v44 = vld [vmem:[%s3 + $0x38] sm:$0xff]
  %v45 = vld [vmem:[%s3 + $0x40] sm:$0xff]
  %v46 = vld [vmem:[%s3 + $0x48] sm:$0xff]
  %v47 = vld [vmem:[%s3 + $0x50] sm:$0xff]
  %v48 = vld [vmem:[%s3 + $0x58] sm:$0xff]
  %v49 = vld [vmem:[%s3 + $0x60] sm:$0x3]
  %50 = vst [vmem:[#allocation2] sm:$0xff] 0.0
  %51 = vst [vmem:[#allocation2 + $0x8] sm:$0xff] 0.0
  %52 = vst [vmem:[#allocation2 + $0x10] sm:$0xff] 0.0
  %53 = vst [vmem:[#allocation2 + $0x18] sm:$0xff] 0.0
  %54 = vst [vmem:[#allocation2 + $0x1a0] sm:$0xfc] 0.0
  %55 = vst [vmem:[#allocation2 + $0x1a8] sm:$0xfc] 0.0
  %56 = vst [vmem:[#allocation2 + $0x1b0] sm:$0xfc] 0.0
  %57 = vst [vmem:[#allocation2 + $0x1b8] sm:$0xfc] 0.0
  %58 = vst [vmem:[#allocation2 + $0x1c0] sm:$0x3] 0.0
  %59 = vst [vmem:[#allocation2 + $0x1c8] sm:$0x3] 0.0
  %60 = vst [vmem:[#allocation2 + $0x1d0] sm:$0x3] 0.0
  %61 = vst [vmem:[#allocation2 + $0x1d8] sm:$0x3] 0.0
  %v62 = vld [vmem:[%s0] sm:$0xf]
  %v63 = vld [vmem:[%s0 + $0x4] sm:$0xf]
  %v64 = vld [vmem:[%s0 + $0x8] sm:$0xf]
  %v65 = vld [vmem:[%s0 + $0xc] sm:$0xf]
  %v66 = vld [vmem:[%s0 + $0x10] sm:$0xf]
  %v67 = vld [vmem:[%s0 + $0x14] sm:$0xf]
  %v68 = vld [vmem:[%s0 + $0x18] sm:$0xf]
  %v69 = vld [vmem:[%s0 + $0x1c] sm:$0xf]
  %v70 = vld [vmem:[%s0 + $0x20] sm:$0xf]
  %v71 = vld [vmem:[%s0 + $0x24] sm:$0xf]
  %v72 = vld [vmem:[%s0 + $0x28] sm:$0xf]
  %v73 = vld [vmem:[%s0 + $0x2c] sm:$0xf]
  %v74 = vld [vmem:[%s0 + $0x30] sm:$0x1]
  %v88 = vunpack.c.l.b16 %v62
  %v89 = vunpack.c.l.b16 %v63
  %v90 = vunpack.c.l.b16 %v64
  %v91 = vunpack.c.l.b16 %v65
  %v92 = vunpack.c.l.b16 %v66
  %v93 = vunpack.c.l.b16 %v67
  %v94 = vunpack.c.l.b16 %v68
  %v95 = vunpack.c.l.b16 %v69
  %v96 = vunpack.c.l.b16 %v70
  %v97 = vunpack.c.l.b16 %v71
  %v98 = vunpack.c.l.b16 %v72
  %v99 = vunpack.c.l.b16 %v73
  %v100 = vunpack.c.l.b16 %v74
  %v101 = vpack.c.b16 %v89, %v88
  %v102 = vpack.c.b16 %v91, %v90
  %v103 = vpack.c.b16 %v93, %v92
  %v104 = vpack.c.b16 %v95, %v94
  %v105 = vpack.c.b16 %v97, %v96
  %v106 = vpack.c.b16 %v99, %v98
  %v107 = vpack.c.b16 %v100, %v100
  %v110 = vunpack.c.l.b16 %v35
  %v111 = vunpack.c.l.b16 %v36
  %v112 = vpack.c.b16 %v111, %v110
  %vm114 = vcmask 130048
  %v116 = vsel %vm114, %v101, 0
  %v119 = vsel %vm114, %v102, 0
  %v122 = vsel %vm114, %v103, 0
  %v125 = vsel %vm114, %v104, 0
  %v128 = vsel %vm114, %v105, 0
  %v131 = vsel %vm114, %v106, 0
  %v134 = vsel %vm114, %v107, 0
  %136 = vmatpush.bf16.msra.mxu0 0
  %137 = vmatpush.bf16.msra.mxu0 0
  %138 = vmatpush.bf16.msra.mxu0 0
  %139 = vmatpush.bf16.msra.mxu0 0
  %140 = vmatpush.bf16.msra.mxu0 0
  %141 = vmatpush.bf16.msra.mxu0 0
  %142 = vmatpush.bf16.msra.mxu0 0
  %143 = vmatpush.bf16.msra.mxu0 %v112
  %144 = vmatmul.bf16.gmra.mxu0 %v116
  %v145 = vpop.f32.mrf.mxu0
  %v146 = vadd.f32 0.0, %v145
  %v147 = vpop.f32.mrf.mxu0
  %v148 = vadd.f32 0.0, %v147
  %149 = vmatmul.bf16.gmra.mxu0 %v119
  %v150 = vpop.f32.mrf.mxu0
  %v151 = vadd.f32 0.0, %v150
  %v152 = vpop.f32.mrf.mxu0
  %v153 = vadd.f32 0.0, %v152
  %154 = vmatmul.bf16.gmra.mxu0 %v122
  %v155 = vpop.f32.mrf.mxu0
  %v156 = vadd.f32 0.0, %v155
  %v157 = vpop.f32.mrf.mxu0
  %v158 = vadd.f32 0.0, %v157
  %159 = vmatmul.bf16.gmra.mxu0 %v125
  %v160 = vpop.f32.mrf.mxu0
  %v161 = vadd.f32 0.0, %v160
  %v162 = vpop.f32.mrf.mxu0
  %v163 = vadd.f32 0.0, %v162
  %164 = vmatmul.bf16.gmra.mxu0 %v128
  %v165 = vpop.f32.mrf.mxu0
  %v166 = vadd.f32 0.0, %v165
  %v167 = vpop.f32.mrf.mxu0
  %v168 = vadd.f32 0.0, %v167
  %169 = vmatmul.bf16.gmra.mxu0 %v131
  %v170 = vpop.f32.mrf.mxu0
  %v171 = vadd.f32 0.0, %v170
  %v172 = vpop.f32.mrf.mxu0
  %v173 = vadd.f32 0.0, %v172
  %174 = vmatmul.bf16.gmra.mxu0 %v134
  %v175 = vpop.f32.mrf.mxu0
  %v176 = vadd.f32 0.0, %v175
  %v177 = vpop.f32.mrf.mxu0
  %178 = vdwg.mxu0
  %v179 = vmul.f32 %v146, 0.2
  %v180 = vmul.f32 %v148, 0.2
  %v181 = vmul.f32 %v151, 0.2
  %v182 = vmul.f32 %v153, 0.2
  %v183 = vmul.f32 %v156, 0.2
  %v184 = vmul.f32 %v158, 0.2
  %v185 = vmul.f32 %v161, 0.2
  %v186 = vmul.f32 %v163, 0.2
  %v187 = vmul.f32 %v166, 0.2
  %v188 = vmul.f32 %v168, 0.2
  %v189 = vmul.f32 %v171, 0.2
  %v190 = vmul.f32 %v173, 0.2
  %v191 = vmul.f32 %v176, 0.2
  %v192 = vmax.f32 %v146, %v179
  %v193 = vmax.f32 %v148, %v180
  %v194 = vmax.f32 %v151, %v181
  %v195 = vmax.f32 %v153, %v182
  %v196 = vmax.f32 %v156, %v183
  %v197 = vmax.f32 %v158, %v184
  %v198 = vmax.f32 %v161, %v185
  %v199 = vmax.f32 %v163, %v186
  %v200 = vmax.f32 %v166, %v187
  %v201 = vmax.f32 %v168, %v188
  %v202 = vmax.f32 %v171, %v189
  %v203 = vmax.f32 %v173, %v190
  %v204 = vmax.f32 %v176, %v191
  %v205 = vpack.c.bf16 %v193, %v192
  %v206 = vpack.c.bf16 %v195, %v194
  %v207 = vpack.c.bf16 %v197, %v196
  %v208 = vpack.c.bf16 %v199, %v198
  %v209 = vpack.c.bf16 %v201, %v200
  %v210 = vpack.c.bf16 %v203, %v202
  %v211 = vpack.c.bf16 %v204, %v204
  %v212 = vld [vmem:[%s2] sm:$0xff]
  %v213 = vld [vmem:[%s2 + $0x8] sm:$0xff]
  %v214 = vld [vmem:[%s2 + $0x10] sm:$0xff]
  %v215 = vld [vmem:[%s2 + $0x18] sm:$0xff]
  %v216 = vld [vmem:[%s2 + $0x20] sm:$0xff]
  %v217 = vld [vmem:[%s2 + $0x28] sm:$0xff]
  %v218 = vld [vmem:[%s2 + $0x30] sm:$0xff]
  %v219 = vld [vmem:[%s2 + $0x38] sm:$0xff]
  %v220 = vld [vmem:[%s2 + $0x40] sm:$0xff]
  %v221 = vld [vmem:[%s2 + $0x48] sm:$0xff]
  %v222 = vld [vmem:[%s2 + $0x50] sm:$0xff]
  %v223 = vld [vmem:[%s2 + $0x58] sm:$0xff]
  %v224 = vld [vmem:[%s2 + $0x60] sm:$0xff]
  %v225 = vld [vmem:[%s2 + $0x68] sm:$0xff]
  %v226 = vld [vmem:[%s2 + $0x70] sm:$0xff]
  %v227 = vld [vmem:[%s2 + $0x78] sm:$0xff]
  %v244 = vunpack.c.l.b16 %v212
  %v245 = vunpack.c.h.b16 %v212
  %v246 = vunpack.c.l.b16 %v213
  %v247 = vunpack.c.h.b16 %v213
  %v248 = vunpack.c.l.b16 %v214
  %v249 = vunpack.c.h.b16 %v214
  %v250 = vunpack.c.l.b16 %v215
  %v251 = vunpack.c.h.b16 %v215
  %v252 = vunpack.c.l.b16 %v216
  %v253 = vunpack.c.h.b16 %v216
  %v254 = vunpack.c.l.b16 %v217
  %v255 = vunpack.c.h.b16 %v217
  %v256 = vunpack.c.l.b16 %v218
  %v257 = vunpack.c.h.b16 %v218
  %v258 = vunpack.c.l.b16 %v219
  %v259 = vunpack.c.h.b16 %v219
  %v260 = vunpack.c.l.b16 %v220
  %v261 = vunpack.c.h.b16 %v220
  %v262 = vunpack.c.l.b16 %v221
  %v263 = vunpack.c.h.b16 %v221
  %v264 = vunpack.c.l.b16 %v222
  %v265 = vunpack.c.h.b16 %v222
  %v266 = vunpack.c.l.b16 %v223
  %v267 = vunpack.c.h.b16 %v223
  %v268 = vunpack.c.l.b16 %v224
  %v269 = vunpack.c.h.b16 %v224
  %v270 = vunpack.c.l.b16 %v225
  %v271 = vunpack.c.h.b16 %v225
  %v272 = vunpack.c.l.b16 %v226
  %v273 = vunpack.c.h.b16 %v226
  %v274 = vunpack.c.l.b16 %v227
  %v275 = vunpack.c.h.b16 %v227
  %v276 = vpack.c.b16 %v248, %v244
  %v277 = vpack.c.b16 %v249, %v245
  %v278 = vpack.c.b16 %v250, %v246
  %v279 = vpack.c.b16 %v251, %v247
  %v280 = vpack.c.b16 %v256, %v252
  %v281 = vpack.c.b16 %v257, %v253
  %v282 = vpack.c.b16 %v258, %v254
  %v283 = vpack.c.b16 %v259, %v255
  %v284 = vpack.c.b16 %v264, %v260
  %v285 = vpack.c.b16 %v265, %v261
  %v286 = vpack.c.b16 %v266, %v262
  %v287 = vpack.c.b16 %v267, %v263
  %v288 = vpack.c.b16 %v272, %v268
  %v289 = vpack.c.b16 %v273, %v269
  %v290 = vpack.c.b16 %v274, %v270
  %v291 = vpack.c.b16 %v275, %v271
  %vm308 = vcmask 523264
  %v310 = vsel %vm308, %v205, 0
  %v313 = vsel %vm308, %v206, 0
  %v316 = vsel %vm308, %v207, 0
  %v319 = vsel %vm308, %v208, 0
  %v322 = vsel %vm308, %v209, 0
  %v325 = vsel %vm308, %v210, 0
  %v328 = vsel %vm308, %v211, 0
  %330 = vmatpush.bf16.msra.mxu0 0
  %331 = vmatpush.bf16.msra.mxu0 0
  %332 = vmatpush.bf16.msra.mxu0 0
  %333 = vmatpush.bf16.msra.mxu0 0
  %334 = vmatpush.bf16.msra.mxu0 %v288
  %335 = vmatpush.bf16.msra.mxu0 %v284
  %336 = vmatpush.bf16.msra.mxu0 %v280
  %337 = vmatpush.bf16.msra.mxu0 %v276
  %338 = vmatmul.bf16.gmra.mxu0 %v310
  %v339 = vpop.f32.mrf.mxu0
  %v340 = vadd.f32 0.0, %v339
  %v341 = vpop.f32.mrf.mxu0
  %v342 = vadd.f32 0.0, %v341
  %343 = vmatmul.bf16.gmra.mxu0 %v313
  %v344 = vpop.f32.mrf.mxu0
  %v345 = vadd.f32 0.0, %v344
  %v346 = vpop.f32.mrf.mxu0
  %v347 = vadd.f32 0.0, %v346
  %348 = vmatmul.bf16.gmra.mxu0 %v316
  %v349 = vpop.f32.mrf.mxu0
  %v350 = vadd.f32 0.0, %v349
  %v351 = vpop.f32.mrf.mxu0
  %v352 = vadd.f32 0.0, %v351
  %353 = vmatmul.bf16.gmra.mxu0 %v319
  %v354 = vpop.f32.mrf.mxu0
  %v355 = vadd.f32 0.0, %v354
  %v356 = vpop.f32.mrf.mxu0
  %v357 = vadd.f32 0.0, %v356
  %358 = vmatmul.bf16.gmra.mxu0 %v322
  %v359 = vpop.f32.mrf.mxu0
  %v360 = vadd.f32 0.0, %v359
  %v361 = vpop.f32.mrf.mxu0
  %v362 = vadd.f32 0.0, %v361
  %363 = vmatmul.bf16.gmra.mxu0 %v325
  %v364 = vpop.f32.mrf.mxu0
  %v365 = vadd.f32 0.0, %v364
  %v366 = vpop.f32.mrf.mxu0
  %v367 = vadd.f32 0.0, %v366
  %368 = vmatmul.bf16.gmra.mxu0 %v328
  %v369 = vpop.f32.mrf.mxu0
  %v370 = vadd.f32 0.0, %v369
  %v371 = vpop.f32.mrf.mxu0
  %372 = vdwg.mxu0
  %373 = vmatpush.bf16.msra.mxu0 0
  %374 = vmatpush.bf16.msra.mxu0 0
  %375 = vmatpush.bf16.msra.mxu0 0
  %376 = vmatpush.bf16.msra.mxu0 0
  %377 = vmatpush.bf16.msra.mxu0 %v289
  %378 = vmatpush.bf16.msra.mxu0 %v285
  %379 = vmatpush.bf16.msra.mxu0 %v281
  %380 = vmatpush.bf16.msra.mxu0 %v277
  %381 = vmatmul.bf16.gmra.mxu0 %v310
  %v382 = vpop.f32.mrf.mxu0
  %v383 = vadd.f32 0.0, %v382
  %v384 = vpop.f32.mrf.mxu0
  %v385 = vadd.f32 0.0, %v384
  %386 = vmatmul.bf16.gmra.mxu0 %v313
  %v387 = vpop.f32.mrf.mxu0
  %v388 = vadd.f32 0.0, %v387
  %v389 = vpop.f32.mrf.mxu0
  %v390 = vadd.f32 0.0, %v389
  %391 = vmatmul.bf16.gmra.mxu0 %v316
  %v392 = vpop.f32.mrf.mxu0
  %v393 = vadd.f32 0.0, %v392
  %v394 = vpop.f32.mrf.mxu0
  %v395 = vadd.f32 0.0, %v394
  %396 = vmatmul.bf16.gmra.mxu0 %v319
  %v397 = vpop.f32.mrf.mxu0
  %v398 = vadd.f32 0.0, %v397
  %v399 = vpop.f32.mrf.mxu0
  %v400 = vadd.f32 0.0, %v399
  %401 = vmatmul.bf16.gmra.mxu0 %v322
  %v402 = vpop.f32.mrf.mxu0
  %v403 = vadd.f32 0.0, %v402
  %v404 = vpop.f32.mrf.mxu0
  %v405 = vadd.f32 0.0, %v404
  %406 = vmatmul.bf16.gmra.mxu0 %v325
  %v407 = vpop.f32.mrf.mxu0
  %v408 = vadd.f32 0.0, %v407
  %v409 = vpop.f32.mrf.mxu0
  %v410 = vadd.f32 0.0, %v409
  %411 = vmatmul.bf16.gmra.mxu0 %v328
  %v412 = vpop.f32.mrf.mxu0
  %v413 = vadd.f32 0.0, %v412
  %v414 = vpop.f32.mrf.mxu0
  %415 = vdwg.mxu0
  %416 = vmatpush.bf16.msra.mxu0 0
  %417 = vmatpush.bf16.msra.mxu0 0
  %418 = vmatpush.bf16.msra.mxu0 0
  %419 = vmatpush.bf16.msra.mxu0 0
  %420 = vmatpush.bf16.msra.mxu0 %v290
  %421 = vmatpush.bf16.msra.mxu0 %v286
  %422 = vmatpush.bf16.msra.mxu0 %v282
  %423 = vmatpush.bf16.msra.mxu0 %v278
  %424 = vmatmul.bf16.gmra.mxu0 %v310
  %v425 = vpop.f32.mrf.mxu0
  %v426 = vadd.f32 0.0, %v425
  %v427 = vpop.f32.mrf.mxu0
  %v428 = vadd.f32 0.0, %v427
  %429 = vmatmul.bf16.gmra.mxu0 %v313
  %v430 = vpop.f32.mrf.mxu0
  %v431 = vadd.f32 0.0, %v430
  %v432 = vpop.f32.mrf.mxu0
  %v433 = vadd.f32 0.0, %v432
  %434 = vmatmul.bf16.gmra.mxu0 %v316
  %v435 = vpop.f32.mrf.mxu0
  %v436 = vadd.f32 0.0, %v435
  %v437 = vpop.f32.mrf.mxu0
  %v438 = vadd.f32 0.0, %v437
  %439 = vmatmul.bf16.gmra.mxu0 %v319
  %v440 = vpop.f32.mrf.mxu0
  %v441 = vadd.f32 0.0, %v440
  %v442 = vpop.f32.mrf.mxu0
  %v443 = vadd.f32 0.0, %v442
  %444 = vmatmul.bf16.gmra.mxu0 %v322
  %v445 = vpop.f32.mrf.mxu0
  %v446 = vadd.f32 0.0, %v445
  %v447 = vpop.f32.mrf.mxu0
  %v448 = vadd.f32 0.0, %v447
  %449 = vmatmul.bf16.gmra.mxu0 %v325
  %v450 = vpop.f32.mrf.mxu0
  %v451 = vadd.f32 0.0, %v450
  %v452 = vpop.f32.mrf.mxu0
  %v453 = vadd.f32 0.0, %v452
  %454 = vmatmul.bf16.gmra.mxu0 %v328
  %v455 = vpop.f32.mrf.mxu0
  %v456 = vadd.f32 0.0, %v455
  %v457 = vpop.f32.mrf.mxu0
  %458 = vdwg.mxu0
  %459 = vmatpush.bf16.msra.mxu0 0
  %460 = vmatpush.bf16.msra.mxu0 0
  %461 = vmatpush.bf16.msra.mxu0 0
  %462 = vmatpush.bf16.msra.mxu0 0
  %463 = vmatpush.bf16.msra.mxu0 %v291
  %464 = vmatpush.bf16.msra.mxu0 %v287
  %465 = vmatpush.bf16.msra.mxu0 %v283
  %466 = vmatpush.bf16.msra.mxu0 %v279
  %467 = vmatmul.bf16.gmra.mxu0 %v310
  %v468 = vpop.f32.mrf.mxu0
  %v469 = vadd.f32 0.0, %v468
  %v470 = vpop.f32.mrf.mxu0
  %v471 = vadd.f32 0.0, %v470
  %472 = vmatmul.bf16.gmra.mxu0 %v313
  %v473 = vpop.f32.mrf.mxu0
  %v474 = vadd.f32 0.0, %v473
  %v475 = vpop.f32.mrf.mxu0
  %v476 = vadd.f32 0.0, %v475
  %477 = vmatmul.bf16.gmra.mxu0 %v316
  %v478 = vpop.f32.mrf.mxu0
  %v479 = vadd.f32 0.0, %v478
  %v480 = vpop.f32.mrf.mxu0
  %v481 = vadd.f32 0.0, %v480
  %482 = vmatmul.bf16.gmra.mxu0 %v319
  %v483 = vpop.f32.mrf.mxu0
  %v484 = vadd.f32 0.0, %v483
  %v485 = vpop.f32.mrf.mxu0
  %v486 = vadd.f32 0.0, %v485
  %487 = vmatmul.bf16.gmra.mxu0 %v322
  %v488 = vpop.f32.mrf.mxu0
  %v489 = vadd.f32 0.0, %v488
  %v490 = vpop.f32.mrf.mxu0
  %v491 = vadd.f32 0.0, %v490
  %492 = vmatmul.bf16.gmra.mxu0 %v325
  %v493 = vpop.f32.mrf.mxu0
  %v494 = vadd.f32 0.0, %v493
  %v495 = vpop.f32.mrf.mxu0
  %v496 = vadd.f32 0.0, %v495
  %497 = vmatmul.bf16.gmra.mxu0 %v328
  %v498 = vpop.f32.mrf.mxu0
  %v499 = vadd.f32 0.0, %v498
  %v500 = vpop.f32.mrf.mxu0
  %501 = vdwg.mxu0
  %502 = vst [vmem:[#allocation2 + $0x20] sm:$0xff] %v340
  %503 = vst [vmem:[#allocation2 + $0x28] sm:$0xff] %v383
  %504 = vst [vmem:[#allocation2 + $0x30] sm:$0xff] %v426
  %505 = vst [vmem:[#allocation2 + $0x38] sm:$0xff] %v469
  %506 = vst [vmem:[#allocation2 + $0x40] sm:$0xff] %v342
  %507 = vst [vmem:[#allocation2 + $0x48] sm:$0xff] %v385
  %508 = vst [vmem:[#allocation2 + $0x50] sm:$0xff] %v428
  %509 = vst [vmem:[#allocation2 + $0x58] sm:$0xff] %v471
  %510 = vst [vmem:[#allocation2 + $0x60] sm:$0xff] %v345
  %511 = vst [vmem:[#allocation2 + $0x68] sm:$0xff] %v388
  %512 = vst [vmem:[#allocation2 + $0x70] sm:$0xff] %v431
  %513 = vst [vmem:[#allocation2 + $0x78] sm:$0xff] %v474
  %514 = vst [vmem:[#allocation2 + $0x80] sm:$0xff] %v347
  %515 = vst [vmem:[#allocation2 + $0x88] sm:$0xff] %v390
  %516 = vst [vmem:[#allocation2 + $0x90] sm:$0xff] %v433
  %517 = vst [vmem:[#allocation2 + $0x98] sm:$0xff] %v476
  %518 = vst [vmem:[#allocation2 + $0xa0] sm:$0xff] %v350
  %519 = vst [vmem:[#allocation2 + $0xa8] sm:$0xff] %v393
  %520 = vst [vmem:[#allocation2 + $0xb0] sm:$0xff] %v436
  %521 = vst [vmem:[#allocation2 + $0xb8] sm:$0xff] %v479
  %522 = vst [vmem:[#allocation2 + $0xc0] sm:$0xff] %v352
  %523 = vst [vmem:[#allocation2 + $0xc8] sm:$0xff] %v395
  %524 = vst [vmem:[#allocation2 + $0xd0] sm:$0xff] %v438
  %525 = vst [vmem:[#allocation2 + $0xd8] sm:$0xff] %v481
  %526 = vst [vmem:[#allocation2 + $0xe0] sm:$0xff] %v355
  %527 = vst [vmem:[#allocation2 + $0xe8] sm:$0xff] %v398
  %528 = vst [vmem:[#allocation2 + $0xf0] sm:$0xff] %v441
  %529 = vst [vmem:[#allocation2 + $0xf8] sm:$0xff] %v484
  %530 = vst [vmem:[#allocation2 + $0x100] sm:$0xff] %v357
  %531 = vst [vmem:[#allocation2 + $0x108] sm:$0xff] %v400
  %532 = vst [vmem:[#allocation2 + $0x110] sm:$0xff] %v443
  %533 = vst [vmem:[#allocation2 + $0x118] sm:$0xff] %v486
  %534 = vst [vmem:[#allocation2 + $0x120] sm:$0xff] %v360
  %535 = vst [vmem:[#allocation2 + $0x128] sm:$0xff] %v403
  %536 = vst [vmem:[#allocation2 + $0x130] sm:$0xff] %v446
  %537 = vst [vmem:[#allocation2 + $0x138] sm:$0xff] %v489
  %538 = vst [vmem:[#allocation2 + $0x140] sm:$0xff] %v362
  %539 = vst [vmem:[#allocation2 + $0x148] sm:$0xff] %v405
  %540 = vst [vmem:[#allocation2 + $0x150] sm:$0xff] %v448
  %541 = vst [vmem:[#allocation2 + $0x158] sm:$0xff] %v491
  %542 = vst [vmem:[#allocation2 + $0x160] sm:$0xff] %v365
  %543 = vst [vmem:[#allocation2 + $0x168] sm:$0xff] %v408
  %544 = vst [vmem:[#allocation2 + $0x170] sm:$0xff] %v451
  %545 = vst [vmem:[#allocation2 + $0x178] sm:$0xff] %v494
  %546 = vst [vmem:[#allocation2 + $0x180] sm:$0xff] %v367
  %547 = vst [vmem:[#allocation2 + $0x188] sm:$0xff] %v410
  %548 = vst [vmem:[#allocation2 + $0x190] sm:$0xff] %v453
  %549 = vst [vmem:[#allocation2 + $0x198] sm:$0xff] %v496
  %550 = vst [vmem:[#allocation2 + $0x1a0] sm:$0x3] %v370
  %551 = vst [vmem:[#allocation2 + $0x1a8] sm:$0x3] %v413
  %552 = vst [vmem:[#allocation2 + $0x1b0] sm:$0x3] %v456
  %553 = vst [vmem:[#allocation2 + $0x1b8] sm:$0x3] %v499
  %v554 = vld [vmem:[#allocation2 + $0x20] sm:$0xff]
  %v555 = vld [vmem:[#allocation2 + $0x40] sm:$0xff]
  %v556 = vld [vmem:[#allocation2 + $0x60] sm:$0xff]
  %v557 = vld [vmem:[#allocation2 + $0x80] sm:$0xff]
  %v558 = vld [vmem:[#allocation2 + $0xa0] sm:$0xff]
  %v559 = vld [vmem:[#allocation2 + $0xc0] sm:$0xff]
  %v560 = vld [vmem:[#allocation2 + $0xe0] sm:$0xff]
  %v561 = vld [vmem:[#allocation2 + $0x100] sm:$0xff]
  %v562 = vld [vmem:[#allocation2 + $0x120] sm:$0xff]
  %v563 = vld [vmem:[#allocation2 + $0x140] sm:$0xff]
  %v564 = vld [vmem:[#allocation2 + $0x160] sm:$0xff]
  %v565 = vld [vmem:[#allocation2 + $0x180] sm:$0xff]
  %v566 = vld [vmem:[#allocation2 + $0x1a0] sm:$0x3]
  %v567 = vadd.f32 %v554, 0.0
  %v568 = vadd.f32 %v555, 0.0
  %v569 = vadd.f32 %v556, 0.0
  %v570 = vadd.f32 %v557, 0.0
  %v571 = vadd.f32 %v558, 0.0
  %v572 = vadd.f32 %v559, 0.0
  %v573 = vadd.f32 %v560, 0.0
  %v574 = vadd.f32 %v561, 0.0
  %v575 = vadd.f32 %v562, 0.0
  %v576 = vadd.f32 %v563, 0.0
  %v577 = vadd.f32 %v564, 0.0
  %v578 = vadd.f32 %v565, 0.0
  %v579 = vadd.f32 %v566, 0.0
  %v580 = vld [vmem:[#allocation2 + $0x28] sm:$0xfe]
  %v581 = vld [vmem:[#allocation2 + $0x48] sm:$0xff]
  %v582 = vld [vmem:[#allocation2 + $0x68] sm:$0xff]
  %v583 = vld [vmem:[#allocation2 + $0x88] sm:$0xff]
  %v584 = vld [vmem:[#allocation2 + $0xa8] sm:$0xff]
  %v585 = vld [vmem:[#allocation2 + $0xc8] sm:$0xff]
  %v586 = vld [vmem:[#allocation2 + $0xe8] sm:$0xff]
  %v587 = vld [vmem:[#allocation2 + $0x108] sm:$0xff]
  %v588 = vld [vmem:[#allocation2 + $0x128] sm:$0xff]
  %v589 = vld [vmem:[#allocation2 + $0x148] sm:$0xff]
  %v590 = vld [vmem:[#allocation2 + $0x168] sm:$0xff]
  %v591 = vld [vmem:[#allocation2 + $0x188] sm:$0xff]
  %v592 = vld [vmem:[#allocation2 + $0x1a8] sm:$0x7]
  %594 = vset.pattern.permute.xlu0 1
  %595 = vperm.xlu0 %594, %v37
  %v596 = vpop.permute.xlu0 %595
  %598 = vset.pattern.permute.xlu0 1
  %599 = vperm.xlu0 %598, %v38
  %v600 = vpop.permute.xlu0 %599
  %602 = vset.pattern.permute.xlu0 1
  %603 = vperm.xlu0 %602, %v39
  %v604 = vpop.permute.xlu0 %603
  %606 = vset.pattern.permute.xlu0 1
  %607 = vperm.xlu0 %606, %v40
  %v608 = vpop.permute.xlu0 %607
  %610 = vset.pattern.permute.xlu0 1
  %611 = vperm.xlu0 %610, %v41
  %v612 = vpop.permute.xlu0 %611
  %614 = vset.pattern.permute.xlu0 1
  %615 = vperm.xlu0 %614, %v42
  %v616 = vpop.permute.xlu0 %615
  %618 = vset.pattern.permute.xlu0 1
  %619 = vperm.xlu0 %618, %v43
  %v620 = vpop.permute.xlu0 %619
  %622 = vset.pattern.permute.xlu0 1
  %623 = vperm.xlu0 %622, %v44
  %v624 = vpop.permute.xlu0 %623
  %626 = vset.pattern.permute.xlu0 1
  %627 = vperm.xlu0 %626, %v45
  %v628 = vpop.permute.xlu0 %627
  %630 = vset.pattern.permute.xlu0 1
  %631 = vperm.xlu0 %630, %v46
  %v632 = vpop.permute.xlu0 %631
  %634 = vset.pattern.permute.xlu0 1
  %635 = vperm.xlu0 %634, %v47
  %v636 = vpop.permute.xlu0 %635
  %638 = vset.pattern.permute.xlu0 1
  %639 = vperm.xlu0 %638, %v48
  %v640 = vpop.permute.xlu0 %639
  %642 = vset.pattern.permute.xlu0 1
  %643 = vperm.xlu0 %642, %v49
  %v644 = vpop.permute.xlu0 %643
  %vm645 = vcmask 1040384
  %v646 = vrot.slane %v596, 7
  %v647 = vrot.slane %v600, 7
  %v648 = vsel %vm645, %v646, %v647
  %v649 = vrot.slane %v604, 7
  %v650 = vsel %vm645, %v647, %v649
  %v651 = vrot.slane %v608, 7
  %v652 = vsel %vm645, %v649, %v651
  %v653 = vrot.slane %v612, 7
  %v654 = vsel %vm645, %v651, %v653
  %v655 = vrot.slane %v616, 7
  %v656 = vsel %vm645, %v653, %v655
  %v657 = vrot.slane %v620, 7
  %v658 = vsel %vm645, %v655, %v657
  %v659 = vrot.slane %v624, 7
  %v660 = vsel %vm645, %v657, %v659
  %v661 = vrot.slane %v628, 7
  %v662 = vsel %vm645, %v659, %v661
  %v663 = vrot.slane %v632, 7
  %v664 = vsel %vm645, %v661, %v663
  %v665 = vrot.slane %v636, 7
  %v666 = vsel %vm645, %v663, %v665
  %v667 = vrot.slane %v640, 7
  %v668 = vsel %vm645, %v665, %v667
  %v669 = vrot.slane %v644, 7
  %v670 = vsel %vm645, %v667, %v669
  %v684 = vmul.f32 %v580, %v646
  %v685 = vmul.f32 %v581, %v648
  %v686 = vmul.f32 %v582, %v650
  %v687 = vmul.f32 %v583, %v652
  %v688 = vmul.f32 %v584, %v654
  %v689 = vmul.f32 %v585, %v656
  %v690 = vmul.f32 %v586, %v658
  %v691 = vmul.f32 %v587, %v660
  %v692 = vmul.f32 %v588, %v662
  %v693 = vmul.f32 %v589, %v664
  %v694 = vmul.f32 %v590, %v666
  %v695 = vmul.f32 %v591, %v668
  %v696 = vmul.f32 %v592, %v670
  %vm710 = vcmask 1046528
  %v711 = vrot.slane %v684, 1
  %v712 = vrot.slane %v685, 1
  %v713 = vsel %vm710, %v711, %v712
  %v714 = vrot.slane %v686, 1
  %v715 = vsel %vm710, %v712, %v714
  %v716 = vrot.slane %v687, 1
  %v717 = vsel %vm710, %v714, %v716
  %v718 = vrot.slane %v688, 1
  %v719 = vsel %vm710, %v716, %v718
  %v720 = vrot.slane %v689, 1
  %v721 = vsel %vm710, %v718, %v720
  %v722 = vrot.slane %v690, 1
  %v723 = vsel %vm710, %v720, %v722
  %v724 = vrot.slane %v691, 1
  %v725 = vsel %vm710, %v722, %v724
  %v726 = vrot.slane %v692, 1
  %v727 = vsel %vm710, %v724, %v726
  %v728 = vrot.slane %v693, 1
  %v729 = vsel %vm710, %v726, %v728
  %v730 = vrot.slane %v694, 1
  %v731 = vsel %vm710, %v728, %v730
  %v732 = vrot.slane %v695, 1
  %v733 = vsel %vm710, %v730, %v732
  %v734 = vrot.slane %v696, 1
  %v735 = vsel %vm710, %v732, %v734
  %v749 = vadd.f32 %v567, %v713
  %v750 = vadd.f32 %v568, %v715
  %v751 = vadd.f32 %v569, %v717
  %v752 = vadd.f32 %v570, %v719
  %v753 = vadd.f32 %v571, %v721
  %v754 = vadd.f32 %v572, %v723
  %v755 = vadd.f32 %v573, %v725
  %v756 = vadd.f32 %v574, %v727
  %v757 = vadd.f32 %v575, %v729
  %v758 = vadd.f32 %v576, %v731
  %v759 = vadd.f32 %v577, %v733
  %v760 = vadd.f32 %v578, %v735
  %v761 = vadd.f32 %v579, %v734
  %v762 = vld [vmem:[#allocation2 + $0x30] sm:$0x80]
  %v763 = vld [vmem:[#allocation2 + $0x50] sm:$0xff]
  %v764 = vld [vmem:[#allocation2 + $0x70] sm:$0xff]
  %v765 = vld [vmem:[#allocation2 + $0x90] sm:$0xff]
  %v766 = vld [vmem:[#allocation2 + $0xb0] sm:$0xff]
  %v767 = vld [vmem:[#allocation2 + $0xd0] sm:$0xff]
  %v768 = vld [vmem:[#allocation2 + $0xf0] sm:$0xff]
  %v769 = vld [vmem:[#allocation2 + $0x110] sm:$0xff]
  %v770 = vld [vmem:[#allocation2 + $0x130] sm:$0xff]
  %v771 = vld [vmem:[#allocation2 + $0x150] sm:$0xff]
  %v772 = vld [vmem:[#allocation2 + $0x170] sm:$0xff]
  %v773 = vld [vmem:[#allocation2 + $0x190] sm:$0xff]
  %v774 = vld [vmem:[#allocation2 + $0x1b0] sm:$0xff]
  %v775 = vld [vmem:[#allocation2 + $0x1d0] sm:$0x1]
  %776 = vset.pattern.permute.xlu0 2
  %777 = vperm.xlu0 %776, %v37
  %v778 = vpop.permute.xlu0 %777
  %779 = vset.pattern.permute.xlu0 2
  %780 = vperm.xlu0 %779, %v38
  %v781 = vpop.permute.xlu0 %780
  %782 = vset.pattern.permute.xlu0 2
  %783 = vperm.xlu0 %782, %v39
  %v784 = vpop.permute.xlu0 %783
  %785 = vset.pattern.permute.xlu0 2
  %786 = vperm.xlu0 %785, %v40
  %v787 = vpop.permute.xlu0 %786
  %788 = vset.pattern.permute.xlu0 2
  %789 = vperm.xlu0 %788, %v41
  %v790 = vpop.permute.xlu0 %789
  %791 = vset.pattern.permute.xlu0 2
  %792 = vperm.xlu0 %791, %v42
  %v793 = vpop.permute.xlu0 %792
  %794 = vset.pattern.permute.xlu0 2
  %795 = vperm.xlu0 %794, %v43
  %v796 = vpop.permute.xlu0 %795
  %797 = vset.pattern.permute.xlu0 2
  %798 = vperm.xlu0 %797, %v44
  %v799 = vpop.permute.xlu0 %798
  %800 = vset.pattern.permute.xlu0 2
  %801 = vperm.xlu0 %800, %v45
  %v802 = vpop.permute.xlu0 %801
  %803 = vset.pattern.permute.xlu0 2
  %804 = vperm.xlu0 %803, %v46
  %v805 = vpop.permute.xlu0 %804
  %806 = vset.pattern.permute.xlu0 2
  %807 = vperm.xlu0 %806, %v47
  %v808 = vpop.permute.xlu0 %807
  %809 = vset.pattern.permute.xlu0 2
  %810 = vperm.xlu0 %809, %v48
  %v811 = vpop.permute.xlu0 %810
  %812 = vset.pattern.permute.xlu0 2
  %813 = vperm.xlu0 %812, %v49
  %v814 = vpop.permute.xlu0 %813
  %v815 = vrot.slane %v778, 1
  %v816 = vrot.slane %v781, 1
  %v817 = vsel %vm710, %v815, %v816
  %v818 = vrot.slane %v784, 1
  %v819 = vsel %vm710, %v816, %v818
  %v820 = vrot.slane %v787, 1
  %v821 = vsel %vm710, %v818, %v820
  %v822 = vrot.slane %v790, 1
  %v823 = vsel %vm710, %v820, %v822
  %v824 = vrot.slane %v793, 1
  %v825 = vsel %vm710, %v822, %v824
  %v826 = vrot.slane %v796, 1
  %v827 = vsel %vm710, %v824, %v826
  %v828 = vrot.slane %v799, 1
  %v829 = vsel %vm710, %v826, %v828
  %v830 = vrot.slane %v802, 1
  %v831 = vsel %vm710, %v828, %v830
  %v832 = vrot.slane %v805, 1
  %v833 = vsel %vm710, %v830, %v832
  %v834 = vrot.slane %v808, 1
  %v835 = vsel %vm710, %v832, %v834
  %v836 = vrot.slane %v811, 1
  %v837 = vsel %vm710, %v834, %v836
  %v838 = vrot.slane %v814, 1
  %v839 = vsel %vm710, %v836, %v838
  %v854 = vmul.f32 %v762, %v815
  %v855 = vmul.f32 %v763, %v817
  %v856 = vmul.f32 %v764, %v819
  %v857 = vmul.f32 %v765, %v821
  %v858 = vmul.f32 %v766, %v823
  %v859 = vmul.f32 %v767, %v825
  %v860 = vmul.f32 %v768, %v827
  %v861 = vmul.f32 %v769, %v829
  %v862 = vmul.f32 %v770, %v831
  %v863 = vmul.f32 %v771, %v833
  %v864 = vmul.f32 %v772, %v835
  %v865 = vmul.f32 %v773, %v837
  %v866 = vmul.f32 %v774, %v839
  %v867 = vmul.f32 %v775, %v838
  %v882 = vrot.slane %v854, 7
  %v883 = vrot.slane %v855, 7
  %v884 = vsel %vm645, %v882, %v883
  %v885 = vrot.slane %v856, 7
  %v886 = vsel %vm645, %v883, %v885
  %v887 = vrot.slane %v857, 7
  %v888 = vsel %vm645, %v885, %v887
  %v889 = vrot.slane %v858, 7
  %v890 = vsel %vm645, %v887, %v889
  %v891 = vrot.slane %v859, 7
  %v892 = vsel %vm645, %v889, %v891
  %v893 = vrot.slane %v860, 7
  %v894 = vsel %vm645, %v891, %v893
  %v895 = vrot.slane %v861, 7
  %v896 = vsel %vm645, %v893, %v895
  %v897 = vrot.slane %v862, 7
  %v898 = vsel %vm645, %v895, %v897
  %v899 = vrot.slane %v863, 7
  %v900 = vsel %vm645, %v897, %v899
  %v901 = vrot.slane %v864, 7
  %v902 = vsel %vm645, %v899, %v901
  %v903 = vrot.slane %v865, 7
  %v904 = vsel %vm645, %v901, %v903
  %v905 = vrot.slane %v866, 7
  %v906 = vsel %vm645, %v903, %v905
  %v907 = vrot.slane %v867, 7
  %v908 = vsel %vm645, %v905, %v907
  %v922 = vadd.f32 %v749, %v884
  %v923 = vadd.f32 %v750, %v886
  %v924 = vadd.f32 %v751, %v888
  %v925 = vadd.f32 %v752, %v890
  %v926 = vadd.f32 %v753, %v892
  %v927 = vadd.f32 %v754, %v894
  %v928 = vadd.f32 %v755, %v896
  %v929 = vadd.f32 %v756, %v898
  %v930 = vadd.f32 %v757, %v900
  %v931 = vadd.f32 %v758, %v902
  %v932 = vadd.f32 %v759, %v904
  %v933 = vadd.f32 %v760, %v906
  %v934 = vadd.f32 %v761, %v908
  %v935 = vld [vmem:[#allocation2 + $0x58] sm:$0xff]
  %v936 = vld [vmem:[#allocation2 + $0x78] sm:$0xff]
  %v937 = vld [vmem:[#allocation2 + $0x98] sm:$0xff]
  %v938 = vld [vmem:[#allocation2 + $0xb8] sm:$0xff]
  %v939 = vld [vmem:[#allocation2 + $0xd8] sm:$0xff]
  %v940 = vld [vmem:[#allocation2 + $0xf8] sm:$0xff]
  %v941 = vld [vmem:[#allocation2 + $0x118] sm:$0xff]
  %v942 = vld [vmem:[#allocation2 + $0x138] sm:$0xff]
  %v943 = vld [vmem:[#allocation2 + $0x158] sm:$0xff]
  %v944 = vld [vmem:[#allocation2 + $0x178] sm:$0xff]
  %v945 = vld [vmem:[#allocation2 + $0x198] sm:$0xff]
  %v946 = vld [vmem:[#allocation2 + $0x1b8] sm:$0xff]
  %v947 = vld [vmem:[#allocation2 + $0x1d8] sm:$0x3]
  %948 = vset.pattern.permute.xlu0 3
  %949 = vperm.xlu0 %948, %v37
  %v950 = vpop.permute.xlu0 %949
  %952 = vset.pattern.permute.xlu0 3
  %953 = vperm.xlu0 %952, %v38
  %v954 = vpop.permute.xlu0 %953
  %956 = vset.pattern.permute.xlu0 3
  %957 = vperm.xlu0 %956, %v39
  %v958 = vpop.permute.xlu0 %957
  %960 = vset.pattern.permute.xlu0 3
  %961 = vperm.xlu0 %960, %v40
  %v962 = vpop.permute.xlu0 %961
  %964 = vset.pattern.permute.xlu0 3
  %965 = vperm.xlu0 %964, %v41
  %v966 = vpop.permute.xlu0 %965
  %968 = vset.pattern.permute.xlu0 3
  %969 = vperm.xlu0 %968, %v42
  %v970 = vpop.permute.xlu0 %969
  %972 = vset.pattern.permute.xlu0 3
  %973 = vperm.xlu0 %972, %v43
  %v974 = vpop.permute.xlu0 %973
  %976 = vset.pattern.permute.xlu0 3
  %977 = vperm.xlu0 %976, %v44
  %v978 = vpop.permute.xlu0 %977
  %980 = vset.pattern.permute.xlu0 3
  %981 = vperm.xlu0 %980, %v45
  %v982 = vpop.permute.xlu0 %981
  %984 = vset.pattern.permute.xlu0 3
  %985 = vperm.xlu0 %984, %v46
  %v986 = vpop.permute.xlu0 %985
  %988 = vset.pattern.permute.xlu0 3
  %989 = vperm.xlu0 %988, %v47
  %v990 = vpop.permute.xlu0 %989
  %992 = vset.pattern.permute.xlu0 3
  %993 = vperm.xlu0 %992, %v48
  %v994 = vpop.permute.xlu0 %993
  %996 = vset.pattern.permute.xlu0 3
  %997 = vperm.xlu0 %996, %v49
  %v998 = vpop.permute.xlu0 %997
  %v1000 = vmul.f32 %v935, %v950
  %v1001 = vmul.f32 %v936, %v954
  %v1002 = vmul.f32 %v937, %v958
  %v1003 = vmul.f32 %v938, %v962
  %v1004 = vmul.f32 %v939, %v966
  %v1005 = vmul.f32 %v940, %v970
  %v1006 = vmul.f32 %v941, %v974
  %v1007 = vmul.f32 %v942, %v978
  %v1008 = vmul.f32 %v943, %v982
  %v1009 = vmul.f32 %v944, %v986
  %v1010 = vmul.f32 %v945, %v990
  %v1011 = vmul.f32 %v946, %v994
  %v1012 = vmul.f32 %v947, %v998
  %v1013 = vadd.f32 %v922, %v1000
  %v1014 = vadd.f32 %v923, %v1001
  %v1015 = vadd.f32 %v924, %v1002
  %v1016 = vadd.f32 %v925, %v1003
  %v1017 = vadd.f32 %v926, %v1004
  %v1018 = vadd.f32 %v927, %v1005
  %v1019 = vadd.f32 %v928, %v1006
  %v1020 = vadd.f32 %v929, %v1007
  %v1021 = vadd.f32 %v930, %v1008
  %v1022 = vadd.f32 %v931, %v1009
  %v1023 = vadd.f32 %v932, %v1010
  %v1024 = vadd.f32 %v933, %v1011
  %v1025 = vadd.f32 %v934, %v1012
  %s1026 = scalar_lea.vmem %s0, 52
  %v1027 = vld [vmem:[%s1026] sm:$0xf]
  %v1028 = vld [vmem:[%s1026 + $0x4] sm:$0xf]
  %v1029 = vld [vmem:[%s1026 + $0x8] sm:$0xf]
  %v1030 = vld [vmem:[%s1026 + $0xc] sm:$0xf]
  %v1031 = vld [vmem:[%s1026 + $0x10] sm:$0xf]
  %v1032 = vld [vmem:[%s1026 + $0x14] sm:$0xf]
  %v1033 = vld [vmem:[%s1026 + $0x18] sm:$0xf]
  %v1034 = vld [vmem:[%s1026 + $0x1c] sm:$0xf]
  %v1035 = vld [vmem:[%s1026 + $0x20] sm:$0xf]
  %v1036 = vld [vmem:[%s1026 + $0x24] sm:$0xf]
  %v1037 = vld [vmem:[%s1026 + $0x28] sm:$0xf]
  %v1038 = vld [vmem:[%s1026 + $0x2c] sm:$0xf]
  %v1039 = vld [vmem:[%s1026 + $0x30] sm:$0x1]
  %v1053 = vunpack.c.l.b16 %v1027
  %v1054 = vunpack.c.l.b16 %v1028
  %v1055 = vunpack.c.l.b16 %v1029
  %v1056 = vunpack.c.l.b16 %v1030
  %v1057 = vunpack.c.l.b16 %v1031
  %v1058 = vunpack.c.l.b16 %v1032
  %v1059 = vunpack.c.l.b16 %v1033
  %v1060 = vunpack.c.l.b16 %v1034
  %v1061 = vunpack.c.l.b16 %v1035
  %v1062 = vunpack.c.l.b16 %v1036
  %v1063 = vunpack.c.l.b16 %v1037
  %v1064 = vunpack.c.l.b16 %v1038
  %v1065 = vunpack.c.l.b16 %v1039
  %v1066 = vpack.c.b16 %v1054, %v1053
  %v1067 = vpack.c.b16 %v1056, %v1055
  %v1068 = vpack.c.b16 %v1058, %v1057
  %v1069 = vpack.c.b16 %v1060, %v1059
  %v1070 = vpack.c.b16 %v1062, %v1061
  %v1071 = vpack.c.b16 %v1064, %v1063
  %v1072 = vpack.c.b16 %v1065, %v1065
  %v1074 = vsel %vm114, %v1066, 0
  %v1077 = vsel %vm114, %v1067, 0
  %v1080 = vsel %vm114, %v1068, 0
  %v1083 = vsel %vm114, %v1069, 0
  %v1086 = vsel %vm114, %v1070, 0
  %v1089 = vsel %vm114, %v1071, 0
  %v1092 = vsel %vm114, %v1072, 0
  %1094 = vmatpush.bf16.msra.mxu0 0
  %1095 = vmatpush.bf16.msra.mxu0 0
  %1096 = vmatpush.bf16.msra.mxu0 0
  %1097 = vmatpush.bf16.msra.mxu0 0
  %1098 = vmatpush.bf16.msra.mxu0 0
  %1099 = vmatpush.bf16.msra.mxu0 0
  %1100 = vmatpush.bf16.msra.mxu0 0
  %1101 = vmatpush.bf16.msra.mxu0 %v112
  %1102 = vmatmul.bf16.gmra.mxu0 %v1074
  %v1103 = vpop.f32.mrf.mxu0
  %v1104 = vadd.f32 0.0, %v1103
  %v1105 = vpop.f32.mrf.mxu0
  %v1106 = vadd.f32 0.0, %v1105
  %1107 = vmatmul.bf16.gmra.mxu0 %v1077
  %v1108 = vpop.f32.mrf.mxu0
  %v1109 = vadd.f32 0.0, %v1108
  %v1110 = vpop.f32.mrf.mxu0
  %v1111 = vadd.f32 0.0, %v1110
  %1112 = vmatmul.bf16.gmra.mxu0 %v1080
  %v1113 = vpop.f32.mrf.mxu0
  %v1114 = vadd.f32 0.0, %v1113
  %v1115 = vpop.f32.mrf.mxu0
  %v1116 = vadd.f32 0.0, %v1115
  %1117 = vmatmul.bf16.gmra.mxu0 %v1083
  %v1118 = vpop.f32.mrf.mxu0
  %v1119 = vadd.f32 0.0, %v1118
  %v1120 = vpop.f32.mrf.mxu0
  %v1121 = vadd.f32 0.0, %v1120
  %1122 = vmatmul.bf16.gmra.mxu0 %v1086
  %v1123 = vpop.f32.mrf.mxu0
  %v1124 = vadd.f32 0.0, %v1123
  %v1125 = vpop.f32.mrf.mxu0
  %v1126 = vadd.f32 0.0, %v1125
  %1127 = vmatmul.bf16.gmra.mxu0 %v1089
  %v1128 = vpop.f32.mrf.mxu0
  %v1129 = vadd.f32 0.0, %v1128
  %v1130 = vpop.f32.mrf.mxu0
  %v1131 = vadd.f32 0.0, %v1130
  %1132 = vmatmul.bf16.gmra.mxu0 %v1092
  %v1133 = vpop.f32.mrf.mxu0
  %v1134 = vadd.f32 0.0, %v1133
  %v1135 = vpop.f32.mrf.mxu0
  %1136 = vdwg.mxu0
  %v1137 = vmul.f32 %v1104, 0.2
  %v1138 = vmul.f32 %v1106, 0.2
  %v1139 = vmul.f32 %v1109, 0.2
  %v1140 = vmul.f32 %v1111, 0.2
  %v1141 = vmul.f32 %v1114, 0.2
  %v1142 = vmul.f32 %v1116, 0.2
  %v1143 = vmul.f32 %v1119, 0.2
  %v1144 = vmul.f32 %v1121, 0.2
  %v1145 = vmul.f32 %v1124, 0.2
  %v1146 = vmul.f32 %v1126, 0.2
  %v1147 = vmul.f32 %v1129, 0.2
  %v1148 = vmul.f32 %v1131, 0.2
  %v1149 = vmul.f32 %v1134, 0.2
  %v1150 = vmax.f32 %v1104, %v1137
  %v1151 = vmax.f32 %v1106, %v1138
  %v1152 = vmax.f32 %v1109, %v1139
  %v1153 = vmax.f32 %v1111, %v1140
  %v1154 = vmax.f32 %v1114, %v1141
  %v1155 = vmax.f32 %v1116, %v1142
  %v1156 = vmax.f32 %v1119, %v1143
  %v1157 = vmax.f32 %v1121, %v1144
  %v1158 = vmax.f32 %v1124, %v1145
  %v1159 = vmax.f32 %v1126, %v1146
  %v1160 = vmax.f32 %v1129, %v1147
  %v1161 = vmax.f32 %v1131, %v1148
  %v1162 = vmax.f32 %v1134, %v1149
  %v1163 = vpack.c.bf16 %v1151, %v1150
  %v1164 = vpack.c.bf16 %v1153, %v1152
  %v1165 = vpack.c.bf16 %v1155, %v1154
  %v1166 = vpack.c.bf16 %v1157, %v1156
  %v1167 = vpack.c.bf16 %v1159, %v1158
  %v1168 = vpack.c.bf16 %v1161, %v1160
  %v1169 = vpack.c.bf16 %v1162, %v1162
  %s1170 = scalar_lea.vmem %s2, 128
  %v1171 = vld [vmem:[%s1170] sm:$0xff]
  %v1172 = vld [vmem:[%s1170 + $0x8] sm:$0xff]
  %v1173 = vld [vmem:[%s1170 + $0x10] sm:$0xff]
  %v1174 = vld [vmem:[%s1170 + $0x18] sm:$0xff]
  %v1175 = vld [vmem:[%s1170 + $0x20] sm:$0xff]
  %v1176 = vld [vmem:[%s1170 + $0x28] sm:$0xff]
  %v1177 = vld [vmem:[%s1170 + $0x30] sm:$0xff]
  %v1178 = vld [vmem:[%s1170 + $0x38] sm:$0xff]
  %v1179 = vld [vmem:[%s1170 + $0x40] sm:$0xff]
  %v1180 = vld [vmem:[%s1170 + $0x48] sm:$0xff]
  %v1181 = vld [vmem:[%s1170 + $0x50] sm:$0xff]
  %v1182 = vld [vmem:[%s1170 + $0x58] sm:$0xff]
  %v1183 = vld [vmem:[%s1170 + $0x60] sm:$0xff]
  %v1184 = vld [vmem:[%s1170 + $0x68] sm:$0xff]
  %v1185 = vld [vmem:[%s1170 + $0x70] sm:$0xff]
  %v1186 = vld [vmem:[%s1170 + $0x78] sm:$0xff]
  %v1203 = vunpack.c.l.b16 %v1171
  %v1204 = vunpack.c.h.b16 %v1171
  %v1205 = vunpack.c.l.b16 %v1172
  %v1206 = vunpack.c.h.b16 %v1172
  %v1207 = vunpack.c.l.b16 %v1173
  %v1208 = vunpack.c.h.b16 %v1173
  %v1209 = vunpack.c.l.b16 %v1174
  %v1210 = vunpack.c.h.b16 %v1174
  %v1211 = vunpack.c.l.b16 %v1175
  %v1212 = vunpack.c.h.b16 %v1175
  %v1213 = vunpack.c.l.b16 %v1176
  %v1214 = vunpack.c.h.b16 %v1176
  %v1215 = vunpack.c.l.b16 %v1177
  %v1216 = vunpack.c.h.b16 %v1177
  %v1217 = vunpack.c.l.b16 %v1178
  %v1218 = vunpack.c.h.b16 %v1178
  %v1219 = vunpack.c.l.b16 %v1179
  %v1220 = vunpack.c.h.b16 %v1179
  %v1221 = vunpack.c.l.b16 %v1180
  %v1222 = vunpack.c.h.b16 %v1180
  %v1223 = vunpack.c.l.b16 %v1181
  %v1224 = vunpack.c.h.b16 %v1181
  %v1225 = vunpack.c.l.b16 %v1182
  %v1226 = vunpack.c.h.b16 %v1182
  %v1227 = vunpack.c.l.b16 %v1183
  %v1228 = vunpack.c.h.b16 %v1183
  %v1229 = vunpack.c.l.b16 %v1184
  %v1230 = vunpack.c.h.b16 %v1184
  %v1231 = vunpack.c.l.b16 %v1185
  %v1232 = vunpack.c.h.b16 %v1185
  %v1233 = vunpack.c.l.b16 %v1186
  %v1234 = vunpack.c.h.b16 %v1186
  %v1235 = vpack.c.b16 %v1207, %v1203
  %v1236 = vpack.c.b16 %v1208, %v1204
  %v1237 = vpack.c.b16 %v1209, %v1205
  %v1238 = vpack.c.b16 %v1210, %v1206
  %v1239 = vpack.c.b16 %v1215, %v1211
  %v1240 = vpack.c.b16 %v1216, %v1212
  %v1241 = vpack.c.b16 %v1217, %v1213
  %v1242 = vpack.c.b16 %v1218, %v1214
  %v1243 = vpack.c.b16 %v1223, %v1219
  %v1244 = vpack.c.b16 %v1224, %v1220
  %v1245 = vpack.c.b16 %v1225, %v1221
  %v1246 = vpack.c.b16 %v1226, %v1222
  %v1247 = vpack.c.b16 %v1231, %v1227
  %v1248 = vpack.c.b16 %v1232, %v1228
  %v1249 = vpack.c.b16 %v1233, %v1229
  %v1250 = vpack.c.b16 %v1234, %v1230
  %v1268 = vsel %vm308, %v1163, 0
  %v1271 = vsel %vm308, %v1164, 0
  %v1274 = vsel %vm308, %v1165, 0
  %v1277 = vsel %vm308, %v1166, 0
  %v1280 = vsel %vm308, %v1167, 0
  %v1283 = vsel %vm308, %v1168, 0
  %v1286 = vsel %vm308, %v1169, 0
  %1288 = vmatpush.bf16.msra.mxu0 0
  %1289 = vmatpush.bf16.msra.mxu0 0
  %1290 = vmatpush.bf16.msra.mxu0 0
  %1291 = vmatpush.bf16.msra.mxu0 0
  %1292 = vmatpush.bf16.msra.mxu0 %v1247
  %1293 = vmatpush.bf16.msra.mxu0 %v1243
  %1294 = vmatpush.bf16.msra.mxu0 %v1239
  %1295 = vmatpush.bf16.msra.mxu0 %v1235
  %1296 = vmatmul.bf16.gmra.mxu0 %v1268
  %v1297 = vpop.f32.mrf.mxu0
  %v1298 = vadd.f32 0.0, %v1297
  %v1299 = vpop.f32.mrf.mxu0
  %v1300 = vadd.f32 0.0, %v1299
  %1301 = vmatmul.bf16.gmra.mxu0 %v1271
  %v1302 = vpop.f32.mrf.mxu0
  %v1303 = vadd.f32 0.0, %v1302
  %v1304 = vpop.f32.mrf.mxu0
  %v1305 = vadd.f32 0.0, %v1304
  %1306 = vmatmul.bf16.gmra.mxu0 %v1274
  %v1307 = vpop.f32.mrf.mxu0
  %v1308 = vadd.f32 0.0, %v1307
  %v1309 = vpop.f32.mrf.mxu0
  %v1310 = vadd.f32 0.0, %v1309
  %1311 = vmatmul.bf16.gmra.mxu0 %v1277
  %v1312 = vpop.f32.mrf.mxu0
  %v1313 = vadd.f32 0.0, %v1312
  %v1314 = vpop.f32.mrf.mxu0
  %v1315 = vadd.f32 0.0, %v1314
  %1316 = vmatmul.bf16.gmra.mxu0 %v1280
  %v1317 = vpop.f32.mrf.mxu0
  %v1318 = vadd.f32 0.0, %v1317
  %v1319 = vpop.f32.mrf.mxu0
  %v1320 = vadd.f32 0.0, %v1319
  %1321 = vmatmul.bf16.gmra.mxu0 %v1283
  %v1322 = vpop.f32.mrf.mxu0
  %v1323 = vadd.f32 0.0, %v1322
  %v1324 = vpop.f32.mrf.mxu0
  %v1325 = vadd.f32 0.0, %v1324
  %1326 = vmatmul.bf16.gmra.mxu0 %v1286
  %v1327 = vpop.f32.mrf.mxu0
  %v1328 = vadd.f32 0.0, %v1327
  %v1329 = vpop.f32.mrf.mxu0
  %1330 = vdwg.mxu0
  %1331 = vmatpush.bf16.msra.mxu0 0
  %1332 = vmatpush.bf16.msra.mxu0 0
  %1333 = vmatpush.bf16.msra.mxu0 0
  %1334 = vmatpush.bf16.msra.mxu0 0
  %1335 = vmatpush.bf16.msra.mxu0 %v1248
  %1336 = vmatpush.bf16.msra.mxu0 %v1244
  %1337 = vmatpush.bf16.msra.mxu0 %v1240
  %1338 = vmatpush.bf16.msra.mxu0 %v1236
  %1339 = vmatmul.bf16.gmra.mxu0 %v1268
  %v1340 = vpop.f32.mrf.mxu0
  %v1341 = vadd.f32 0.0, %v1340
  %v1342 = vpop.f32.mrf.mxu0
  %v1343 = vadd.f32 0.0, %v1342
  %1344 = vmatmul.bf16.gmra.mxu0 %v1271
  %v1345 = vpop.f32.mrf.mxu0
  %v1346 = vadd.f32 0.0, %v1345
  %v1347 = vpop.f32.mrf.mxu0
  %v1348 = vadd.f32 0.0, %v1347
  %1349 = vmatmul.bf16.gmra.mxu0 %v1274
  %v1350 = vpop.f32.mrf.mxu0
  %v1351 = vadd.f32 0.0, %v1350
  %v1352 = vpop.f32.mrf.mxu0
  %v1353 = vadd.f32 0.0, %v1352
  %1354 = vmatmul.bf16.gmra.mxu0 %v1277
  %v1355 = vpop.f32.mrf.mxu0
  %v1356 = vadd.f32 0.0, %v1355
  %v1357 = vpop.f32.mrf.mxu0
  %v1358 = vadd.f32 0.0, %v1357
  %1359 = vmatmul.bf16.gmra.mxu0 %v1280
  %v1360 = vpop.f32.mrf.mxu0
  %v1361 = vadd.f32 0.0, %v1360
  %v1362 = vpop.f32.mrf.mxu0
  %v1363 = vadd.f32 0.0, %v1362
  %1364 = vmatmul.bf16.gmra.mxu0 %v1283
  %v1365 = vpop.f32.mrf.mxu0
  %v1366 = vadd.f32 0.0, %v1365
  %v1367 = vpop.f32.mrf.mxu0
  %v1368 = vadd.f32 0.0, %v1367
  %1369 = vmatmul.bf16.gmra.mxu0 %v1286
  %v1370 = vpop.f32.mrf.mxu0
  %v1371 = vadd.f32 0.0, %v1370
  %v1372 = vpop.f32.mrf.mxu0
  %1373 = vdwg.mxu0
  %1374 = vmatpush.bf16.msra.mxu0 0
  %1375 = vmatpush.bf16.msra.mxu0 0
  %1376 = vmatpush.bf16.msra.mxu0 0
  %1377 = vmatpush.bf16.msra.mxu0 0
  %1378 = vmatpush.bf16.msra.mxu0 %v1249
  %1379 = vmatpush.bf16.msra.mxu0 %v1245
  %1380 = vmatpush.bf16.msra.mxu0 %v1241
  %1381 = vmatpush.bf16.msra.mxu0 %v1237
  %1382 = vmatmul.bf16.gmra.mxu0 %v1268
  %v1383 = vpop.f32.mrf.mxu0
  %v1384 = vadd.f32 0.0, %v1383
  %v1385 = vpop.f32.mrf.mxu0
  %v1386 = vadd.f32 0.0, %v1385
  %1387 = vmatmul.bf16.gmra.mxu0 %v1271
  %v1388 = vpop.f32.mrf.mxu0
  %v1389 = vadd.f32 0.0, %v1388
  %v1390 = vpop.f32.mrf.mxu0
  %v1391 = vadd.f32 0.0, %v1390
  %1392 = vmatmul.bf16.gmra.mxu0 %v1274
  %v1393 = vpop.f32.mrf.mxu0
  %v1394 = vadd.f32 0.0, %v1393
  %v1395 = vpop.f32.mrf.mxu0
  %v1396 = vadd.f32 0.0, %v1395
  %1397 = vmatmul.bf16.gmra.mxu0 %v1277
  %v1398 = vpop.f32.mrf.mxu0
  %v1399 = vadd.f32 0.0, %v1398
  %v1400 = vpop.f32.mrf.mxu0
  %v1401 = vadd.f32 0.0, %v1400
  %1402 = vmatmul.bf16.gmra.mxu0 %v1280
  %v1403 = vpop.f32.mrf.mxu0
  %v1404 = vadd.f32 0.0, %v1403
  %v1405 = vpop.f32.mrf.mxu0
  %v1406 = vadd.f32 0.0, %v1405
  %1407 = vmatmul.bf16.gmra.mxu0 %v1283
  %v1408 = vpop.f32.mrf.mxu0
  %v1409 = vadd.f32 0.0, %v1408
  %v1410 = vpop.f32.mrf.mxu0
  %v1411 = vadd.f32 0.0, %v1410
  %1412 = vmatmul.bf16.gmra.mxu0 %v1286
  %v1413 = vpop.f32.mrf.mxu0
  %v1414 = vadd.f32 0.0, %v1413
  %v1415 = vpop.f32.mrf.mxu0
  %1416 = vdwg.mxu0
  %1417 = vmatpush.bf16.msra.mxu0 0
  %1418 = vmatpush.bf16.msra.mxu0 0
  %1419 = vmatpush.bf16.msra.mxu0 0
  %1420 = vmatpush.bf16.msra.mxu0 0
  %1421 = vmatpush.bf16.msra.mxu0 %v1250
  %1422 = vmatpush.bf16.msra.mxu0 %v1246
  %1423 = vmatpush.bf16.msra.mxu0 %v1242
  %1424 = vmatpush.bf16.msra.mxu0 %v1238
  %1425 = vmatmul.bf16.gmra.mxu0 %v1268
  %v1426 = vpop.f32.mrf.mxu0
  %v1427 = vadd.f32 0.0, %v1426
  %v1428 = vpop.f32.mrf.mxu0
  %v1429 = vadd.f32 0.0, %v1428
  %1430 = vmatmul.bf16.gmra.mxu0 %v1271
  %v1431 = vpop.f32.mrf.mxu0
  %v1432 = vadd.f32 0.0, %v1431
  %v1433 = vpop.f32.mrf.mxu0
  %v1434 = vadd.f32 0.0, %v1433
  %1435 = vmatmul.bf16.gmra.mxu0 %v1274
  %v1436 = vpop.f32.mrf.mxu0
  %v1437 = vadd.f32 0.0, %v1436
  %v1438 = vpop.f32.mrf.mxu0
  %v1439 = vadd.f32 0.0, %v1438
  %1440 = vmatmul.bf16.gmra.mxu0 %v1277
  %v1441 = vpop.f32.mrf.mxu0
  %v1442 = vadd.f32 0.0, %v1441
  %v1443 = vpop.f32.mrf.mxu0
  %v1444 = vadd.f32 0.0, %v1443
  %1445 = vmatmul.bf16.gmra.mxu0 %v1280
  %v1446 = vpop.f32.mrf.mxu0
  %v1447 = vadd.f32 0.0, %v1446
  %v1448 = vpop.f32.mrf.mxu0
  %v1449 = vadd.f32 0.0, %v1448
  %1450 = vmatmul.bf16.gmra.mxu0 %v1283
  %v1451 = vpop.f32.mrf.mxu0
  %v1452 = vadd.f32 0.0, %v1451
  %v1453 = vpop.f32.mrf.mxu0
  %v1454 = vadd.f32 0.0, %v1453
  %1455 = vmatmul.bf16.gmra.mxu0 %v1286
  %v1456 = vpop.f32.mrf.mxu0
  %v1457 = vadd.f32 0.0, %v1456
  %v1458 = vpop.f32.mrf.mxu0
  %1459 = vdwg.mxu0
  %1460 = vst [vmem:[#allocation2 + $0x20] sm:$0xff] %v1298
  %1461 = vst [vmem:[#allocation2 + $0x28] sm:$0xff] %v1341
  %1462 = vst [vmem:[#allocation2 + $0x30] sm:$0xff] %v1384
  %1463 = vst [vmem:[#allocation2 + $0x38] sm:$0xff] %v1427
  %1464 = vst [vmem:[#allocation2 + $0x40] sm:$0xff] %v1300
  %1465 = vst [vmem:[#allocation2 + $0x48] sm:$0xff] %v1343
  %1466 = vst [vmem:[#allocation2 + $0x50] sm:$0xff] %v1386
  %1467 = vst [vmem:[#allocation2 + $0x58] sm:$0xff] %v1429
  %1468 = vst [vmem:[#allocation2 + $0x60] sm:$0xff] %v1303
  %1469 = vst [vmem:[#allocation2 + $0x68] sm:$0xff] %v1346
  %1470 = vst [vmem:[#allocation2 + $0x70] sm:$0xff] %v1389
  %1471 = vst [vmem:[#allocation2 + $0x78] sm:$0xff] %v1432
  %1472 = vst [vmem:[#allocation2 + $0x80] sm:$0xff] %v1305
  %1473 = vst [vmem:[#allocation2 + $0x88] sm:$0xff] %v1348
  %1474 = vst [vmem:[#allocation2 + $0x90] sm:$0xff] %v1391
  %1475 = vst [vmem:[#allocation2 + $0x98] sm:$0xff] %v1434
  %1476 = vst [vmem:[#allocation2 + $0xa0] sm:$0xff] %v1308
  %1477 = vst [vmem:[#allocation2 + $0xa8] sm:$0xff] %v1351
  %1478 = vst [vmem:[#allocation2 + $0xb0] sm:$0xff] %v1394
  %1479 = vst [vmem:[#allocation2 + $0xb8] sm:$0xff] %v1437
  %1480 = vst [vmem:[#allocation2 + $0xc0] sm:$0xff] %v1310
  %1481 = vst [vmem:[#allocation2 + $0xc8] sm:$0xff] %v1353
  %1482 = vst [vmem:[#allocation2 + $0xd0] sm:$0xff] %v1396
  %1483 = vst [vmem:[#allocation2 + $0xd8] sm:$0xff] %v1439
  %1484 = vst [vmem:[#allocation2 + $0xe0] sm:$0xff] %v1313
  %1485 = vst [vmem:[#allocation2 + $0xe8] sm:$0xff] %v1356
  %1486 = vst [vmem:[#allocation2 + $0xf0] sm:$0xff] %v1399
  %1487 = vst [vmem:[#allocation2 + $0xf8] sm:$0xff] %v1442
  %1488 = vst [vmem:[#allocation2 + $0x100] sm:$0xff] %v1315
  %1489 = vst [vmem:[#allocation2 + $0x108] sm:$0xff] %v1358
  %1490 = vst [vmem:[#allocation2 + $0x110] sm:$0xff] %v1401
  %1491 = vst [vmem:[#allocation2 + $0x118] sm:$0xff] %v1444
  %1492 = vst [vmem:[#allocation2 + $0x120] sm:$0xff] %v1318
  %1493 = vst [vmem:[#allocation2 + $0x128] sm:$0xff] %v1361
  %1494 = vst [vmem:[#allocation2 + $0x130] sm:$0xff] %v1404
  %1495 = vst [vmem:[#allocation2 + $0x138] sm:$0xff] %v1447
  %1496 = vst [vmem:[#allocation2 + $0x140] sm:$0xff] %v1320
  %1497 = vst [vmem:[#allocation2 + $0x148] sm:$0xff] %v1363
  %1498 = vst [vmem:[#allocation2 + $0x150] sm:$0xff] %v1406
  %1499 = vst [vmem:[#allocation2 + $0x158] sm:$0xff] %v1449
  %1500 = vst [vmem:[#allocation2 + $0x160] sm:$0xff] %v1323
  %1501 = vst [vmem:[#allocation2 + $0x168] sm:$0xff] %v1366
  %1502 = vst [vmem:[#allocation2 + $0x170] sm:$0xff] %v1409
  %1503 = vst [vmem:[#allocation2 + $0x178] sm:$0xff] %v1452
  %1504 = vst [vmem:[#allocation2 + $0x180] sm:$0xff] %v1325
  %1505 = vst [vmem:[#allocation2 + $0x188] sm:$0xff] %v1368
  %1506 = vst [vmem:[#allocation2 + $0x190] sm:$0xff] %v1411
  %1507 = vst [vmem:[#allocation2 + $0x198] sm:$0xff] %v1454
  %1508 = vst [vmem:[#allocation2 + $0x1a0] sm:$0x3] %v1328
  %1509 = vst [vmem:[#allocation2 + $0x1a8] sm:$0x3] %v1371
  %1510 = vst [vmem:[#allocation2 + $0x1b0] sm:$0x3] %v1414
  %1511 = vst [vmem:[#allocation2 + $0x1b8] sm:$0x3] %v1457
  %v1512 = vld [vmem:[#allocation2] sm:$0x80]
  %v1513 = vld [vmem:[#allocation2 + $0x20] sm:$0xff]
  %v1514 = vld [vmem:[#allocation2 + $0x40] sm:$0xff]
  %v1515 = vld [vmem:[#allocation2 + $0x60] sm:$0xff]
  %v1516 = vld [vmem:[#allocation2 + $0x80] sm:$0xff]
  %v1517 = vld [vmem:[#allocation2 + $0xa0] sm:$0xff]
  %v1518 = vld [vmem:[#allocation2 + $0xc0] sm:$0xff]
  %v1519 = vld [vmem:[#allocation2 + $0xe0] sm:$0xff]
  %v1520 = vld [vmem:[#allocation2 + $0x100] sm:$0xff]
  %v1521 = vld [vmem:[#allocation2 + $0x120] sm:$0xff]
  %v1522 = vld [vmem:[#allocation2 + $0x140] sm:$0xff]
  %v1523 = vld [vmem:[#allocation2 + $0x160] sm:$0xff]
  %v1524 = vld [vmem:[#allocation2 + $0x180] sm:$0xff]
  %v1525 = vld [vmem:[#allocation2 + $0x1a0] sm:$0x1]
  %1526 = vset.pattern.permute.xlu0 4
  %1527 = vperm.xlu0 %1526, %v37
  %v1528 = vpop.permute.xlu0 %1527
  %1529 = vset.pattern.permute.xlu0 4
  %1530 = vperm.xlu0 %1529, %v38
  %v1531 = vpop.permute.xlu0 %1530
  %1532 = vset.pattern.permute.xlu0 4
  %1533 = vperm.xlu0 %1532, %v39
  %v1534 = vpop.permute.xlu0 %1533
  %1535 = vset.pattern.permute.xlu0 4
  %1536 = vperm.xlu0 %1535, %v40
  %v1537 = vpop.permute.xlu0 %1536
  %1538 = vset.pattern.permute.xlu0 4
  %1539 = vperm.xlu0 %1538, %v41
  %v1540 = vpop.permute.xlu0 %1539
  %1541 = vset.pattern.permute.xlu0 4
  %1542 = vperm.xlu0 %1541, %v42
  %v1543 = vpop.permute.xlu0 %1542
  %1544 = vset.pattern.permute.xlu0 4
  %1545 = vperm.xlu0 %1544, %v43
  %v1546 = vpop.permute.xlu0 %1545
  %1547 = vset.pattern.permute.xlu0 4
  %1548 = vperm.xlu0 %1547, %v44
  %v1549 = vpop.permute.xlu0 %1548
  %1550 = vset.pattern.permute.xlu0 4
  %1551 = vperm.xlu0 %1550, %v45
  %v1552 = vpop.permute.xlu0 %1551
  %1553 = vset.pattern.permute.xlu0 4
  %1554 = vperm.xlu0 %1553, %v46
  %v1555 = vpop.permute.xlu0 %1554
  %1556 = vset.pattern.permute.xlu0 4
  %1557 = vperm.xlu0 %1556, %v47
  %v1558 = vpop.permute.xlu0 %1557
  %1559 = vset.pattern.permute.xlu0 4
  %1560 = vperm.xlu0 %1559, %v48
  %v1561 = vpop.permute.xlu0 %1560
  %1562 = vset.pattern.permute.xlu0 4
  %1563 = vperm.xlu0 %1562, %v49
  %v1564 = vpop.permute.xlu0 %1563
  %v1565 = vrot.slane %v1528, 1
  %v1566 = vrot.slane %v1531, 1
  %v1567 = vsel %vm710, %v1565, %v1566
  %v1568 = vrot.slane %v1534, 1
  %v1569 = vsel %vm710, %v1566, %v1568
  %v1570 = vrot.slane %v1537, 1
  %v1571 = vsel %vm710, %v1568, %v1570
  %v1572 = vrot.slane %v1540, 1
  %v1573 = vsel %vm710, %v1570, %v1572
  %v1574 = vrot.slane %v1543, 1
  %v1575 = vsel %vm710, %v1572, %v1574
  %v1576 = vrot.slane %v1546, 1
  %v1577 = vsel %vm710, %v1574, %v1576
  %v1578 = vrot.slane %v1549, 1
  %v1579 = vsel %vm710, %v1576, %v1578
  %v1580 = vrot.slane %v1552, 1
  %v1581 = vsel %vm710, %v1578, %v1580
  %v1582 = vrot.slane %v1555, 1
  %v1583 = vsel %vm710, %v1580, %v1582
  %v1584 = vrot.slane %v1558, 1
  %v1585 = vsel %vm710, %v1582, %v1584
  %v1586 = vrot.slane %v1561, 1
  %v1587 = vsel %vm710, %v1584, %v1586
  %v1588 = vrot.slane %v1564, 1
  %v1589 = vsel %vm710, %v1586, %v1588
  %v1604 = vmul.f32 %v1512, %v1565
  %v1605 = vmul.f32 %v1513, %v1567
  %v1606 = vmul.f32 %v1514, %v1569
  %v1607 = vmul.f32 %v1515, %v1571
  %v1608 = vmul.f32 %v1516, %v1573
  %v1609 = vmul.f32 %v1517, %v1575
  %v1610 = vmul.f32 %v1518, %v1577
  %v1611 = vmul.f32 %v1519, %v1579
  %v1612 = vmul.f32 %v1520, %v1581
  %v1613 = vmul.f32 %v1521, %v1583
  %v1614 = vmul.f32 %v1522, %v1585
  %v1615 = vmul.f32 %v1523, %v1587
  %v1616 = vmul.f32 %v1524, %v1589
  %v1617 = vmul.f32 %v1525, %v1588
  %v1632 = vrot.slane %v1604, 7
  %v1633 = vrot.slane %v1605, 7
  %v1634 = vsel %vm645, %v1632, %v1633
  %v1635 = vrot.slane %v1606, 7
  %v1636 = vsel %vm645, %v1633, %v1635
  %v1637 = vrot.slane %v1607, 7
  %v1638 = vsel %vm645, %v1635, %v1637
  %v1639 = vrot.slane %v1608, 7
  %v1640 = vsel %vm645, %v1637, %v1639
  %v1641 = vrot.slane %v1609, 7
  %v1642 = vsel %vm645, %v1639, %v1641
  %v1643 = vrot.slane %v1610, 7
  %v1644 = vsel %vm645, %v1641, %v1643
  %v1645 = vrot.slane %v1611, 7
  %v1646 = vsel %vm645, %v1643, %v1645
  %v1647 = vrot.slane %v1612, 7
  %v1648 = vsel %vm645, %v1645, %v1647
  %v1649 = vrot.slane %v1613, 7
  %v1650 = vsel %vm645, %v1647, %v1649
  %v1651 = vrot.slane %v1614, 7
  %v1652 = vsel %vm645, %v1649, %v1651
  %v1653 = vrot.slane %v1615, 7
  %v1654 = vsel %vm645, %v1651, %v1653
  %v1655 = vrot.slane %v1616, 7
  %v1656 = vsel %vm645, %v1653, %v1655
  %v1657 = vrot.slane %v1617, 7
  %v1658 = vsel %vm645, %v1655, %v1657
  %v1672 = vadd.f32 %v1013, %v1634
  %v1673 = vadd.f32 %v1014, %v1636
  %v1674 = vadd.f32 %v1015, %v1638
  %v1675 = vadd.f32 %v1016, %v1640
  %v1676 = vadd.f32 %v1017, %v1642
  %v1677 = vadd.f32 %v1018, %v1644
  %v1678 = vadd.f32 %v1019, %v1646
  %v1679 = vadd.f32 %v1020, %v1648
  %v1680 = vadd.f32 %v1021, %v1650
  %v1681 = vadd.f32 %v1022, %v1652
  %v1682 = vadd.f32 %v1023, %v1654
  %v1683 = vadd.f32 %v1024, %v1656
  %v1684 = vadd.f32 %v1025, %v1658
  %v1685 = vld [vmem:[#allocation2 + $0x28] sm:$0xff]
  %v1686 = vld [vmem:[#allocation2 + $0x48] sm:$0xff]
  %v1687 = vld [vmem:[#allocation2 + $0x68] sm:$0xff]
  %v1688 = vld [vmem:[#allocation2 + $0x88] sm:$0xff]
  %v1689 = vld [vmem:[#allocation2 + $0xa8] sm:$0xff]
  %v1690 = vld [vmem:[#allocation2 + $0xc8] sm:$0xff]
  %v1691 = vld [vmem:[#allocation2 + $0xe8] sm:$0xff]
  %v1692 = vld [vmem:[#allocation2 + $0x108] sm:$0xff]
  %v1693 = vld [vmem:[#allocation2 + $0x128] sm:$0xff]
  %v1694 = vld [vmem:[#allocation2 + $0x148] sm:$0xff]
  %v1695 = vld [vmem:[#allocation2 + $0x168] sm:$0xff]
  %v1696 = vld [vmem:[#allocation2 + $0x188] sm:$0xff]
  %v1697 = vld [vmem:[#allocation2 + $0x1a8] sm:$0x3]
  %v1698 = vadd.f32 %v1672, %v1685
  %v1699 = vadd.f32 %v1673, %v1686
  %v1700 = vadd.f32 %v1674, %v1687
  %v1701 = vadd.f32 %v1675, %v1688
  %v1702 = vadd.f32 %v1676, %v1689
  %v1703 = vadd.f32 %v1677, %v1690
  %v1704 = vadd.f32 %v1678, %v1691
  %v1705 = vadd.f32 %v1679, %v1692
  %v1706 = vadd.f32 %v1680, %v1693
  %v1707 = vadd.f32 %v1681, %v1694
  %v1708 = vadd.f32 %v1682, %v1695
  %v1709 = vadd.f32 %v1683, %v1696
  %v1710 = vadd.f32 %v1684, %v1697
  %v1711 = vld [vmem:[#allocation2 + $0x30] sm:$0xc0]
  %v1712 = vld [vmem:[#allocation2 + $0x50] sm:$0xff]
  %v1713 = vld [vmem:[#allocation2 + $0x70] sm:$0xff]
  %v1714 = vld [vmem:[#allocation2 + $0x90] sm:$0xff]
  %v1715 = vld [vmem:[#allocation2 + $0xb0] sm:$0xff]
  %v1716 = vld [vmem:[#allocation2 + $0xd0] sm:$0xff]
  %v1717 = vld [vmem:[#allocation2 + $0xf0] sm:$0xff]
  %v1718 = vld [vmem:[#allocation2 + $0x110] sm:$0xff]
  %v1719 = vld [vmem:[#allocation2 + $0x130] sm:$0xff]
  %v1720 = vld [vmem:[#allocation2 + $0x150] sm:$0xff]
  %v1721 = vld [vmem:[#allocation2 + $0x170] sm:$0xff]
  %v1722 = vld [vmem:[#allocation2 + $0x190] sm:$0xff]
  %v1723 = vld [vmem:[#allocation2 + $0x1b0] sm:$0xff]
  %1724 = vset.pattern.permute.xlu0 6
  %1725 = vperm.xlu0 %1724, %v37
  %v1726 = vpop.permute.xlu0 %1725
  %1727 = vset.pattern.permute.xlu0 6
  %1728 = vperm.xlu0 %1727, %v38
  %v1729 = vpop.permute.xlu0 %1728
  %1730 = vset.pattern.permute.xlu0 6
  %1731 = vperm.xlu0 %1730, %v39
  %v1732 = vpop.permute.xlu0 %1731
  %1733 = vset.pattern.permute.xlu0 6
  %1734 = vperm.xlu0 %1733, %v40
  %v1735 = vpop.permute.xlu0 %1734
  %1736 = vset.pattern.permute.xlu0 6
  %1737 = vperm.xlu0 %1736, %v41
  %v1738 = vpop.permute.xlu0 %1737
  %1739 = vset.pattern.permute.xlu0 6
  %1740 = vperm.xlu0 %1739, %v42
  %v1741 = vpop.permute.xlu0 %1740
  %1742 = vset.pattern.permute.xlu0 6
  %1743 = vperm.xlu0 %1742, %v43
  %v1744 = vpop.permute.xlu0 %1743
  %1745 = vset.pattern.permute.xlu0 6
  %1746 = vperm.xlu0 %1745, %v44
  %v1747 = vpop.permute.xlu0 %1746
  %1748 = vset.pattern.permute.xlu0 6
  %1749 = vperm.xlu0 %1748, %v45
  %v1750 = vpop.permute.xlu0 %1749
  %1751 = vset.pattern.permute.xlu0 6
  %1752 = vperm.xlu0 %1751, %v46
  %v1753 = vpop.permute.xlu0 %1752
  %1754 = vset.pattern.permute.xlu0 6
  %1755 = vperm.xlu0 %1754, %v47
  %v1756 = vpop.permute.xlu0 %1755
  %1757 = vset.pattern.permute.xlu0 6
  %1758 = vperm.xlu0 %1757, %v48
  %v1759 = vpop.permute.xlu0 %1758
  %1760 = vset.pattern.permute.xlu0 6
  %1761 = vperm.xlu0 %1760, %v49
  %v1762 = vpop.permute.xlu0 %1761
  %vm1763 = vcmask 1045504
  %v1764 = vrot.slane %v1726, 2
  %v1765 = vrot.slane %v1729, 2
  %v1766 = vsel %vm1763, %v1764, %v1765
  %v1767 = vrot.slane %v1732, 2
  %v1768 = vsel %vm1763, %v1765, %v1767
  %v1769 = vrot.slane %v1735, 2
  %v1770 = vsel %vm1763, %v1767, %v1769
  %v1771 = vrot.slane %v1738, 2
  %v1772 = vsel %vm1763, %v1769, %v1771
  %v1773 = vrot.slane %v1741, 2
  %v1774 = vsel %vm1763, %v1771, %v1773
  %v1775 = vrot.slane %v1744, 2
  %v1776 = vsel %vm1763, %v1773, %v1775
  %v1777 = vrot.slane %v1747, 2
  %v1778 = vsel %vm1763, %v1775, %v1777
  %v1779 = vrot.slane %v1750, 2
  %v1780 = vsel %vm1763, %v1777, %v1779
  %v1781 = vrot.slane %v1753, 2
  %v1782 = vsel %vm1763, %v1779, %v1781
  %v1783 = vrot.slane %v1756, 2
  %v1784 = vsel %vm1763, %v1781, %v1783
  %v1785 = vrot.slane %v1759, 2
  %v1786 = vsel %vm1763, %v1783, %v1785
  %v1787 = vrot.slane %v1762, 2
  %v1788 = vsel %vm1763, %v1785, %v1787
  %v1802 = vmul.f32 %v1711, %v1764
  %v1803 = vmul.f32 %v1712, %v1766
  %v1804 = vmul.f32 %v1713, %v1768
  %v1805 = vmul.f32 %v1714, %v1770
  %v1806 = vmul.f32 %v1715, %v1772
  %v1807 = vmul.f32 %v1716, %v1774
  %v1808 = vmul.f32 %v1717, %v1776
  %v1809 = vmul.f32 %v1718, %v1778
  %v1810 = vmul.f32 %v1719, %v1780
  %v1811 = vmul.f32 %v1720, %v1782
  %v1812 = vmul.f32 %v1721, %v1784
  %v1813 = vmul.f32 %v1722, %v1786
  %v1814 = vmul.f32 %v1723, %v1788
  %vm1828 = vcmask 1041408
  %v1829 = vrot.slane %v1802, 6
  %v1830 = vrot.slane %v1803, 6
  %v1831 = vsel %vm1828, %v1829, %v1830
  %v1832 = vrot.slane %v1804, 6
  %v1833 = vsel %vm1828, %v1830, %v1832
  %v1834 = vrot.slane %v1805, 6
  %v1835 = vsel %vm1828, %v1832, %v1834
  %v1836 = vrot.slane %v1806, 6
  %v1837 = vsel %vm1828, %v1834, %v1836
  %v1838 = vrot.slane %v1807, 6
  %v1839 = vsel %vm1828, %v1836, %v1838
  %v1840 = vrot.slane %v1808, 6
  %v1841 = vsel %vm1828, %v1838, %v1840
  %v1842 = vrot.slane %v1809, 6
  %v1843 = vsel %vm1828, %v1840, %v1842
  %v1844 = vrot.slane %v1810, 6
  %v1845 = vsel %vm1828, %v1842, %v1844
  %v1846 = vrot.slane %v1811, 6
  %v1847 = vsel %vm1828, %v1844, %v1846
  %v1848 = vrot.slane %v1812, 6
  %v1849 = vsel %vm1828, %v1846, %v1848
  %v1850 = vrot.slane %v1813, 6
  %v1851 = vsel %vm1828, %v1848, %v1850
  %v1852 = vrot.slane %v1814, 6
  %v1853 = vsel %vm1828, %v1850, %v1852
  %v1867 = vadd.f32 %v1698, %v1831
  %v1868 = vadd.f32 %v1699, %v1833
  %v1869 = vadd.f32 %v1700, %v1835
  %v1870 = vadd.f32 %v1701, %v1837
  %v1871 = vadd.f32 %v1702, %v1839
  %v1872 = vadd.f32 %v1703, %v1841
  %v1873 = vadd.f32 %v1704, %v1843
  %v1874 = vadd.f32 %v1705, %v1845
  %v1875 = vadd.f32 %v1706, %v1847
  %v1876 = vadd.f32 %v1707, %v1849
  %v1877 = vadd.f32 %v1708, %v1851
  %v1878 = vadd.f32 %v1709, %v1853
  %v1879 = vadd.f32 %v1710, %v1852
  %v1880 = vld [vmem:[#allocation2 + $0x38] sm:$0x80]
  %v1881 = vld [vmem:[#allocation2 + $0x58] sm:$0xff]
  %v1882 = vld [vmem:[#allocation2 + $0x78] sm:$0xff]
  %v1883 = vld [vmem:[#allocation2 + $0x98] sm:$0xff]
  %v1884 = vld [vmem:[#allocation2 + $0xb8] sm:$0xff]
  %v1885 = vld [vmem:[#allocation2 + $0xd8] sm:$0xff]
  %v1886 = vld [vmem:[#allocation2 + $0xf8] sm:$0xff]
  %v1887 = vld [vmem:[#allocation2 + $0x118] sm:$0xff]
  %v1888 = vld [vmem:[#allocation2 + $0x138] sm:$0xff]
  %v1889 = vld [vmem:[#allocation2 + $0x158] sm:$0xff]
  %v1890 = vld [vmem:[#allocation2 + $0x178] sm:$0xff]
  %v1891 = vld [vmem:[#allocation2 + $0x198] sm:$0xff]
  %v1892 = vld [vmem:[#allocation2 + $0x1b8] sm:$0xff]
  %v1893 = vld [vmem:[#allocation2 + $0x1d8] sm:$0x1]
  %1894 = vset.pattern.permute.xlu0 7
  %1895 = vperm.xlu0 %1894, %v37
  %v1896 = vpop.permute.xlu0 %1895
  %1897 = vset.pattern.permute.xlu0 7
  %1898 = vperm.xlu0 %1897, %v38
  %v1899 = vpop.permute.xlu0 %1898
  %1900 = vset.pattern.permute.xlu0 7
  %1901 = vperm.xlu0 %1900, %v39
  %v1902 = vpop.permute.xlu0 %1901
  %1903 = vset.pattern.permute.xlu0 7
  %1904 = vperm.xlu0 %1903, %v40
  %v1905 = vpop.permute.xlu0 %1904
  %1906 = vset.pattern.permute.xlu0 7
  %1907 = vperm.xlu0 %1906, %v41
  %v1908 = vpop.permute.xlu0 %1907
  %1909 = vset.pattern.permute.xlu0 7
  %1910 = vperm.xlu0 %1909, %v42
  %v1911 = vpop.permute.xlu0 %1910
  %1912 = vset.pattern.permute.xlu0 7
  %1913 = vperm.xlu0 %1912, %v43
  %v1914 = vpop.permute.xlu0 %1913
  %1915 = vset.pattern.permute.xlu0 7
  %1916 = vperm.xlu0 %1915, %v44
  %v1917 = vpop.permute.xlu0 %1916
  %1918 = vset.pattern.permute.xlu0 7
  %1919 = vperm.xlu0 %1918, %v45
  %v1920 = vpop.permute.xlu0 %1919
  %1921 = vset.pattern.permute.xlu0 7
  %1922 = vperm.xlu0 %1921, %v46
  %v1923 = vpop.permute.xlu0 %1922
  %1924 = vset.pattern.permute.xlu0 7
  %1925 = vperm.xlu0 %1924, %v47
  %v1926 = vpop.permute.xlu0 %1925
  %1927 = vset.pattern.permute.xlu0 7
  %1928 = vperm.xlu0 %1927, %v48
  %v1929 = vpop.permute.xlu0 %1928
  %1930 = vset.pattern.permute.xlu0 7
  %1931 = vperm.xlu0 %1930, %v49
  %v1932 = vpop.permute.xlu0 %1931
  %v1933 = vrot.slane %v1896, 1
  %v1934 = vrot.slane %v1899, 1
  %v1935 = vsel %vm710, %v1933, %v1934
  %v1936 = vrot.slane %v1902, 1
  %v1937 = vsel %vm710, %v1934, %v1936
  %v1938 = vrot.slane %v1905, 1
  %v1939 = vsel %vm710, %v1936, %v1938
  %v1940 = vrot.slane %v1908, 1
  %v1941 = vsel %vm710, %v1938, %v1940
  %v1942 = vrot.slane %v1911, 1
  %v1943 = vsel %vm710, %v1940, %v1942
  %v1944 = vrot.slane %v1914, 1
  %v1945 = vsel %vm710, %v1942, %v1944
  %v1946 = vrot.slane %v1917, 1
  %v1947 = vsel %vm710, %v1944, %v1946
  %v1948 = vrot.slane %v1920, 1
  %v1949 = vsel %vm710, %v1946, %v1948
  %v1950 = vrot.slane %v1923, 1
  %v1951 = vsel %vm710, %v1948, %v1950
  %v1952 = vrot.slane %v1926, 1
  %v1953 = vsel %vm710, %v1950, %v1952
  %v1954 = vrot.slane %v1929, 1
  %v1955 = vsel %vm710, %v1952, %v1954
  %v1956 = vrot.slane %v1932, 1
  %v1957 = vsel %vm710, %v1954, %v1956
  %v1972 = vmul.f32 %v1880, %v1933
  %v1973 = vmul.f32 %v1881, %v1935
  %v1974 = vmul.f32 %v1882, %v1937
  %v1975 = vmul.f32 %v1883, %v1939
  %v1976 = vmul.f32 %v1884, %v1941
  %v1977 = vmul.f32 %v1885, %v1943
  %v1978 = vmul.f32 %v1886, %v1945
  %v1979 = vmul.f32 %v1887, %v1947
  %v1980 = vmul.f32 %v1888, %v1949
  %v1981 = vmul.f32 %v1889, %v1951
  %v1982 = vmul.f32 %v1890, %v1953
  %v1983 = vmul.f32 %v1891, %v1955
  %v1984 = vmul.f32 %v1892, %v1957
  %v1985 = vmul.f32 %v1893, %v1956
  %v2000 = vrot.slane %v1972, 7
  %v2001 = vrot.slane %v1973, 7
  %v2002 = vsel %vm645, %v2000, %v2001
  %v2003 = vrot.slane %v1974, 7
  %v2004 = vsel %vm645, %v2001, %v2003
  %v2005 = vrot.slane %v1975, 7
  %v2006 = vsel %vm645, %v2003, %v2005
  %v2007 = vrot.slane %v1976, 7
  %v2008 = vsel %vm645, %v2005, %v2007
  %v2009 = vrot.slane %v1977, 7
  %v2010 = vsel %vm645, %v2007, %v2009
  %v2011 = vrot.slane %v1978, 7
  %v2012 = vsel %vm645, %v2009, %v2011
  %v2013 = vrot.slane %v1979, 7
  %v2014 = vsel %vm645, %v2011, %v2013
  %v2015 = vrot.slane %v1980, 7
  %v2016 = vsel %vm645, %v2013, %v2015
  %v2017 = vrot.slane %v1981, 7
  %v2018 = vsel %vm645, %v2015, %v2017
  %v2019 = vrot.slane %v1982, 7
  %v2020 = vsel %vm645, %v2017, %v2019
  %v2021 = vrot.slane %v1983, 7
  %v2022 = vsel %vm645, %v2019, %v2021
  %v2023 = vrot.slane %v1984, 7
  %v2024 = vsel %vm645, %v2021, %v2023
  %v2025 = vrot.slane %v1985, 7
  %v2026 = vsel %vm645, %v2023, %v2025
  %v2040 = vadd.f32 %v1867, %v2002
  %v2041 = vadd.f32 %v1868, %v2004
  %v2042 = vadd.f32 %v1869, %v2006
  %v2043 = vadd.f32 %v1870, %v2008
  %v2044 = vadd.f32 %v1871, %v2010
  %v2045 = vadd.f32 %v1872, %v2012
  %v2046 = vadd.f32 %v1873, %v2014
  %v2047 = vadd.f32 %v1874, %v2016
  %v2048 = vadd.f32 %v1875, %v2018
  %v2049 = vadd.f32 %v1876, %v2020
  %v2050 = vadd.f32 %v1877, %v2022
  %v2051 = vadd.f32 %v1878, %v2024
  %v2052 = vadd.f32 %v1879, %v2026
  %s2053 = scalar_lea.vmem %s0, 104
  %v2054 = vld [vmem:[%s2053] sm:$0xf]
  %v2055 = vld [vmem:[%s2053 + $0x4] sm:$0xf]
  %v2056 = vld [vmem:[%s2053 + $0x8] sm:$0xf]
  %v2057 = vld [vmem:[%s2053 + $0xc] sm:$0xf]
  %v2058 = vld [vmem:[%s2053 + $0x10] sm:$0xf]
  %v2059 = vld [vmem:[%s2053 + $0x14] sm:$0xf]
  %v2060 = vld [vmem:[%s2053 + $0x18] sm:$0xf]
  %v2061 = vld [vmem:[%s2053 + $0x1c] sm:$0xf]
  %v2062 = vld [vmem:[%s2053 + $0x20] sm:$0xf]
  %v2063 = vld [vmem:[%s2053 + $0x24] sm:$0xf]
  %v2064 = vld [vmem:[%s2053 + $0x28] sm:$0xf]
  %v2065 = vld [vmem:[%s2053 + $0x2c] sm:$0xf]
  %v2066 = vld [vmem:[%s2053 + $0x30] sm:$0x1]
  %v2080 = vunpack.c.l.b16 %v2054
  %v2081 = vunpack.c.l.b16 %v2055
  %v2082 = vunpack.c.l.b16 %v2056
  %v2083 = vunpack.c.l.b16 %v2057
  %v2084 = vunpack.c.l.b16 %v2058
  %v2085 = vunpack.c.l.b16 %v2059
  %v2086 = vunpack.c.l.b16 %v2060
  %v2087 = vunpack.c.l.b16 %v2061
  %v2088 = vunpack.c.l.b16 %v2062
  %v2089 = vunpack.c.l.b16 %v2063
  %v2090 = vunpack.c.l.b16 %v2064
  %v2091 = vunpack.c.l.b16 %v2065
  %v2092 = vunpack.c.l.b16 %v2066
  %v2093 = vpack.c.b16 %v2081, %v2080
  %v2094 = vpack.c.b16 %v2083, %v2082
  %v2095 = vpack.c.b16 %v2085, %v2084
  %v2096 = vpack.c.b16 %v2087, %v2086
  %v2097 = vpack.c.b16 %v2089, %v2088
  %v2098 = vpack.c.b16 %v2091, %v2090
  %v2099 = vpack.c.b16 %v2092, %v2092
  %v2101 = vsel %vm114, %v2093, 0
  %v2104 = vsel %vm114, %v2094, 0
  %v2107 = vsel %vm114, %v2095, 0
  %v2110 = vsel %vm114, %v2096, 0
  %v2113 = vsel %vm114, %v2097, 0
  %v2116 = vsel %vm114, %v2098, 0
  %v2119 = vsel %vm114, %v2099, 0
  %2121 = vmatpush.bf16.msra.mxu0 0
  %2122 = vmatpush.bf16.msra.mxu0 0
  %2123 = vmatpush.bf16.msra.mxu0 0
  %2124 = vmatpush.bf16.msra.mxu0 0
  %2125 = vmatpush.bf16.msra.mxu0 0
  %2126 = vmatpush.bf16.msra.mxu0 0
  %2127 = vmatpush.bf16.msra.mxu0 0
  %2128 = vmatpush.bf16.msra.mxu0 %v112
  %2129 = vmatmul.bf16.gmra.mxu0 %v2101
  %v2130 = vpop.f32.mrf.mxu0
  %v2131 = vadd.f32 0.0, %v2130
  %v2132 = vpop.f32.mrf.mxu0
  %v2133 = vadd.f32 0.0, %v2132
  %2134 = vmatmul.bf16.gmra.mxu0 %v2104
  %v2135 = vpop.f32.mrf.mxu0
  %v2136 = vadd.f32 0.0, %v2135
  %v2137 = vpop.f32.mrf.mxu0
  %v2138 = vadd.f32 0.0, %v2137
  %2139 = vmatmul.bf16.gmra.mxu0 %v2107
  %v2140 = vpop.f32.mrf.mxu0
  %v2141 = vadd.f32 0.0, %v2140
  %v2142 = vpop.f32.mrf.mxu0
  %v2143 = vadd.f32 0.0, %v2142
  %2144 = vmatmul.bf16.gmra.mxu0 %v2110
  %v2145 = vpop.f32.mrf.mxu0
  %v2146 = vadd.f32 0.0, %v2145
  %v2147 = vpop.f32.mrf.mxu0
  %v2148 = vadd.f32 0.0, %v2147
  %2149 = vmatmul.bf16.gmra.mxu0 %v2113
  %v2150 = vpop.f32.mrf.mxu0
  %v2151 = vadd.f32 0.0, %v2150
  %v2152 = vpop.f32.mrf.mxu0
  %v2153 = vadd.f32 0.0, %v2152
  %2154 = vmatmul.bf16.gmra.mxu0 %v2116
  %v2155 = vpop.f32.mrf.mxu0
  %v2156 = vadd.f32 0.0, %v2155
  %v2157 = vpop.f32.mrf.mxu0
  %v2158 = vadd.f32 0.0, %v2157
  %2159 = vmatmul.bf16.gmra.mxu0 %v2119
  %v2160 = vpop.f32.mrf.mxu0
  %v2161 = vadd.f32 0.0, %v2160
  %v2162 = vpop.f32.mrf.mxu0
  %2163 = vdwg.mxu0
  %v2164 = vmul.f32 %v2131, 0.2
  %v2165 = vmul.f32 %v2133, 0.2
  %v2166 = vmul.f32 %v2136, 0.2
  %v2167 = vmul.f32 %v2138, 0.2
  %v2168 = vmul.f32 %v2141, 0.2
  %v2169 = vmul.f32 %v2143, 0.2
  %v2170 = vmul.f32 %v2146, 0.2
  %v2171 = vmul.f32 %v2148, 0.2
  %v2172 = vmul.f32 %v2151, 0.2
  %v2173 = vmul.f32 %v2153, 0.2
  %v2174 = vmul.f32 %v2156, 0.2
  %v2175 = vmul.f32 %v2158, 0.2
  %v2176 = vmul.f32 %v2161, 0.2
  %v2177 = vmax.f32 %v2131, %v2164
  %v2178 = vmax.f32 %v2133, %v2165
  %v2179 = vmax.f32 %v2136, %v2166
  %v2180 = vmax.f32 %v2138, %v2167
  %v2181 = vmax.f32 %v2141, %v2168
  %v2182 = vmax.f32 %v2143, %v2169
  %v2183 = vmax.f32 %v2146, %v2170
  %v2184 = vmax.f32 %v2148, %v2171
  %v2185 = vmax.f32 %v2151, %v2172
  %v2186 = vmax.f32 %v2153, %v2173
  %v2187 = vmax.f32 %v2156, %v2174
  %v2188 = vmax.f32 %v2158, %v2175
  %v2189 = vmax.f32 %v2161, %v2176
  %v2190 = vpack.c.bf16 %v2178, %v2177
  %v2191 = vpack.c.bf16 %v2180, %v2179
  %v2192 = vpack.c.bf16 %v2182, %v2181
  %v2193 = vpack.c.bf16 %v2184, %v2183
  %v2194 = vpack.c.bf16 %v2186, %v2185
  %v2195 = vpack.c.bf16 %v2188, %v2187
  %v2196 = vpack.c.bf16 %v2189, %v2189
  %s2197 = scalar_lea.vmem %s2, 256
  %v2198 = vld [vmem:[%s2197] sm:$0xff]
  %v2199 = vld [vmem:[%s2197 + $0x8] sm:$0xff]
  %v2200 = vld [vmem:[%s2197 + $0x10] sm:$0xff]
  %v2201 = vld [vmem:[%s2197 + $0x18] sm:$0xff]
  %v2202 = vld [vmem:[%s2197 + $0x20] sm:$0xff]
  %v2203 = vld [vmem:[%s2197 + $0x28] sm:$0xff]
  %v2204 = vld [vmem:[%s2197 + $0x30] sm:$0xff]
  %v2205 = vld [vmem:[%s2197 + $0x38] sm:$0xff]
  %v2206 = vld [vmem:[%s2197 + $0x40] sm:$0xff]
  %v2207 = vld [vmem:[%s2197 + $0x48] sm:$0xff]
  %v2208 = vld [vmem:[%s2197 + $0x50] sm:$0xff]
  %v2209 = vld [vmem:[%s2197 + $0x58] sm:$0xff]
  %v2210 = vld [vmem:[%s2197 + $0x60] sm:$0xff]
  %v2211 = vld [vmem:[%s2197 + $0x68] sm:$0xff]
  %v2212 = vld [vmem:[%s2197 + $0x70] sm:$0xff]
  %v2213 = vld [vmem:[%s2197 + $0x78] sm:$0xff]
  %v2230 = vunpack.c.l.b16 %v2198
  %v2231 = vunpack.c.h.b16 %v2198
  %v2232 = vunpack.c.l.b16 %v2199
  %v2233 = vunpack.c.h.b16 %v2199
  %v2234 = vunpack.c.l.b16 %v2200
  %v2235 = vunpack.c.h.b16 %v2200
  %v2236 = vunpack.c.l.b16 %v2201
  %v2237 = vunpack.c.h.b16 %v2201
  %v2238 = vunpack.c.l.b16 %v2202
  %v2239 = vunpack.c.h.b16 %v2202
  %v2240 = vunpack.c.l.b16 %v2203
  %v2241 = vunpack.c.h.b16 %v2203
  %v2242 = vunpack.c.l.b16 %v2204
  %v2243 = vunpack.c.h.b16 %v2204
  %v2244 = vunpack.c.l.b16 %v2205
  %v2245 = vunpack.c.h.b16 %v2205
  %v2246 = vunpack.c.l.b16 %v2206
  %v2247 = vunpack.c.h.b16 %v2206
  %v2248 = vunpack.c.l.b16 %v2207
  %v2249 = vunpack.c.h.b16 %v2207
  %v2250 = vunpack.c.l.b16 %v2208
  %v2251 = vunpack.c.h.b16 %v2208
  %v2252 = vunpack.c.l.b16 %v2209
  %v2253 = vunpack.c.h.b16 %v2209
  %v2254 = vunpack.c.l.b16 %v2210
  %v2255 = vunpack.c.h.b16 %v2210
  %v2256 = vunpack.c.l.b16 %v2211
  %v2257 = vunpack.c.h.b16 %v2211
  %v2258 = vunpack.c.l.b16 %v2212
  %v2259 = vunpack.c.h.b16 %v2212
  %v2260 = vunpack.c.l.b16 %v2213
  %v2261 = vunpack.c.h.b16 %v2213
  %v2262 = vpack.c.b16 %v2234, %v2230
  %v2263 = vpack.c.b16 %v2235, %v2231
  %v2264 = vpack.c.b16 %v2236, %v2232
  %v2265 = vpack.c.b16 %v2237, %v2233
  %v2266 = vpack.c.b16 %v2242, %v2238
  %v2267 = vpack.c.b16 %v2243, %v2239
  %v2268 = vpack.c.b16 %v2244, %v2240
  %v2269 = vpack.c.b16 %v2245, %v2241
  %v2270 = vpack.c.b16 %v2250, %v2246
  %v2271 = vpack.c.b16 %v2251, %v2247
  %v2272 = vpack.c.b16 %v2252, %v2248
  %v2273 = vpack.c.b16 %v2253, %v2249
  %v2274 = vpack.c.b16 %v2258, %v2254
  %v2275 = vpack.c.b16 %v2259, %v2255
  %v2276 = vpack.c.b16 %v2260, %v2256
  %v2277 = vpack.c.b16 %v2261, %v2257
  %v2295 = vsel %vm308, %v2190, 0
  %v2298 = vsel %vm308, %v2191, 0
  %v2301 = vsel %vm308, %v2192, 0
  %v2304 = vsel %vm308, %v2193, 0
  %v2307 = vsel %vm308, %v2194, 0
  %v2310 = vsel %vm308, %v2195, 0
  %v2313 = vsel %vm308, %v2196, 0
  %2315 = vmatpush.bf16.msra.mxu0 0
  %2316 = vmatpush.bf16.msra.mxu0 0
  %2317 = vmatpush.bf16.msra.mxu0 0
  %2318 = vmatpush.bf16.msra.mxu0 0
  %2319 = vmatpush.bf16.msra.mxu0 %v2274
  %2320 = vmatpush.bf16.msra.mxu0 %v2270
  %2321 = vmatpush.bf16.msra.mxu0 %v2266
  %2322 = vmatpush.bf16.msra.mxu0 %v2262
  %2323 = vmatmul.bf16.gmra.mxu0 %v2295
  %v2324 = vpop.f32.mrf.mxu0
  %v2325 = vadd.f32 0.0, %v2324
  %v2326 = vpop.f32.mrf.mxu0
  %v2327 = vadd.f32 0.0, %v2326
  %2328 = vmatmul.bf16.gmra.mxu0 %v2298
  %v2329 = vpop.f32.mrf.mxu0
  %v2330 = vadd.f32 0.0, %v2329
  %v2331 = vpop.f32.mrf.mxu0
  %v2332 = vadd.f32 0.0, %v2331
  %2333 = vmatmul.bf16.gmra.mxu0 %v2301
  %v2334 = vpop.f32.mrf.mxu0
  %v2335 = vadd.f32 0.0, %v2334
  %v2336 = vpop.f32.mrf.mxu0
  %v2337 = vadd.f32 0.0, %v2336
  %2338 = vmatmul.bf16.gmra.mxu0 %v2304
  %v2339 = vpop.f32.mrf.mxu0
  %v2340 = vadd.f32 0.0, %v2339
  %v2341 = vpop.f32.mrf.mxu0
  %v2342 = vadd.f32 0.0, %v2341
  %2343 = vmatmul.bf16.gmra.mxu0 %v2307
  %v2344 = vpop.f32.mrf.mxu0
  %v2345 = vadd.f32 0.0, %v2344
  %v2346 = vpop.f32.mrf.mxu0
  %v2347 = vadd.f32 0.0, %v2346
  %2348 = vmatmul.bf16.gmra.mxu0 %v2310
  %v2349 = vpop.f32.mrf.mxu0
  %v2350 = vadd.f32 0.0, %v2349
  %v2351 = vpop.f32.mrf.mxu0
  %v2352 = vadd.f32 0.0, %v2351
  %2353 = vmatmul.bf16.gmra.mxu0 %v2313
  %v2354 = vpop.f32.mrf.mxu0
  %v2355 = vadd.f32 0.0, %v2354
  %v2356 = vpop.f32.mrf.mxu0
  %2357 = vdwg.mxu0
  %2358 = vmatpush.bf16.msra.mxu0 0
  %2359 = vmatpush.bf16.msra.mxu0 0
  %2360 = vmatpush.bf16.msra.mxu0 0
  %2361 = vmatpush.bf16.msra.mxu0 0
  %2362 = vmatpush.bf16.msra.mxu0 %v2275
  %2363 = vmatpush.bf16.msra.mxu0 %v2271
  %2364 = vmatpush.bf16.msra.mxu0 %v2267
  %2365 = vmatpush.bf16.msra.mxu0 %v2263
  %2366 = vmatmul.bf16.gmra.mxu0 %v2295
  %v2367 = vpop.f32.mrf.mxu0
  %v2368 = vadd.f32 0.0, %v2367
  %v2369 = vpop.f32.mrf.mxu0
  %v2370 = vadd.f32 0.0, %v2369
  %2371 = vmatmul.bf16.gmra.mxu0 %v2298
  %v2372 = vpop.f32.mrf.mxu0
  %v2373 = vadd.f32 0.0, %v2372
  %v2374 = vpop.f32.mrf.mxu0
  %v2375 = vadd.f32 0.0, %v2374
  %2376 = vmatmul.bf16.gmra.mxu0 %v2301
  %v2377 = vpop.f32.mrf.mxu0
  %v2378 = vadd.f32 0.0, %v2377
  %v2379 = vpop.f32.mrf.mxu0
  %v2380 = vadd.f32 0.0, %v2379
  %2381 = vmatmul.bf16.gmra.mxu0 %v2304
  %v2382 = vpop.f32.mrf.mxu0
  %v2383 = vadd.f32 0.0, %v2382
  %v2384 = vpop.f32.mrf.mxu0
  %v2385 = vadd.f32 0.0, %v2384
  %2386 = vmatmul.bf16.gmra.mxu0 %v2307
  %v2387 = vpop.f32.mrf.mxu0
  %v2388 = vadd.f32 0.0, %v2387
  %v2389 = vpop.f32.mrf.mxu0
  %v2390 = vadd.f32 0.0, %v2389
  %2391 = vmatmul.bf16.gmra.mxu0 %v2310
  %v2392 = vpop.f32.mrf.mxu0
  %v2393 = vadd.f32 0.0, %v2392
  %v2394 = vpop.f32.mrf.mxu0
  %v2395 = vadd.f32 0.0, %v2394
  %2396 = vmatmul.bf16.gmra.mxu0 %v2313
  %v2397 = vpop.f32.mrf.mxu0
  %v2398 = vadd.f32 0.0, %v2397
  %v2399 = vpop.f32.mrf.mxu0
  %2400 = vdwg.mxu0
  %2401 = vmatpush.bf16.msra.mxu0 0
  %2402 = vmatpush.bf16.msra.mxu0 0
  %2403 = vmatpush.bf16.msra.mxu0 0
  %2404 = vmatpush.bf16.msra.mxu0 0
  %2405 = vmatpush.bf16.msra.mxu0 %v2276
  %2406 = vmatpush.bf16.msra.mxu0 %v2272
  %2407 = vmatpush.bf16.msra.mxu0 %v2268
  %2408 = vmatpush.bf16.msra.mxu0 %v2264
  %2409 = vmatmul.bf16.gmra.mxu0 %v2295
  %v2410 = vpop.f32.mrf.mxu0
  %v2411 = vadd.f32 0.0, %v2410
  %v2412 = vpop.f32.mrf.mxu0
  %v2413 = vadd.f32 0.0, %v2412
  %2414 = vmatmul.bf16.gmra.mxu0 %v2298
  %v2415 = vpop.f32.mrf.mxu0
  %v2416 = vadd.f32 0.0, %v2415
  %v2417 = vpop.f32.mrf.mxu0
  %v2418 = vadd.f32 0.0, %v2417
  %2419 = vmatmul.bf16.gmra.mxu0 %v2301
  %v2420 = vpop.f32.mrf.mxu0
  %v2421 = vadd.f32 0.0, %v2420
  %v2422 = vpop.f32.mrf.mxu0
  %v2423 = vadd.f32 0.0, %v2422
  %2424 = vmatmul.bf16.gmra.mxu0 %v2304
  %v2425 = vpop.f32.mrf.mxu0
  %v2426 = vadd.f32 0.0, %v2425
  %v2427 = vpop.f32.mrf.mxu0
  %v2428 = vadd.f32 0.0, %v2427
  %2429 = vmatmul.bf16.gmra.mxu0 %v2307
  %v2430 = vpop.f32.mrf.mxu0
  %v2431 = vadd.f32 0.0, %v2430
  %v2432 = vpop.f32.mrf.mxu0
  %v2433 = vadd.f32 0.0, %v2432
  %2434 = vmatmul.bf16.gmra.mxu0 %v2310
  %v2435 = vpop.f32.mrf.mxu0
  %v2436 = vadd.f32 0.0, %v2435
  %v2437 = vpop.f32.mrf.mxu0
  %v2438 = vadd.f32 0.0, %v2437
  %2439 = vmatmul.bf16.gmra.mxu0 %v2313
  %v2440 = vpop.f32.mrf.mxu0
  %v2441 = vadd.f32 0.0, %v2440
  %v2442 = vpop.f32.mrf.mxu0
  %2443 = vdwg.mxu0
  %2444 = vmatpush.bf16.msra.mxu0 0
  %2445 = vmatpush.bf16.msra.mxu0 0
  %2446 = vmatpush.bf16.msra.mxu0 0
  %2447 = vmatpush.bf16.msra.mxu0 0
  %2448 = vmatpush.bf16.msra.mxu0 %v2277
  %2449 = vmatpush.bf16.msra.mxu0 %v2273
  %2450 = vmatpush.bf16.msra.mxu0 %v2269
  %2451 = vmatpush.bf16.msra.mxu0 %v2265
  %2452 = vmatmul.bf16.gmra.mxu0 %v2295
  %v2453 = vpop.f32.mrf.mxu0
  %v2454 = vadd.f32 0.0, %v2453
  %v2455 = vpop.f32.mrf.mxu0
  %v2456 = vadd.f32 0.0, %v2455
  %2457 = vmatmul.bf16.gmra.mxu0 %v2298
  %v2458 = vpop.f32.mrf.mxu0
  %v2459 = vadd.f32 0.0, %v2458
  %v2460 = vpop.f32.mrf.mxu0
  %v2461 = vadd.f32 0.0, %v2460
  %2462 = vmatmul.bf16.gmra.mxu0 %v2301
  %v2463 = vpop.f32.mrf.mxu0
  %v2464 = vadd.f32 0.0, %v2463
  %v2465 = vpop.f32.mrf.mxu0
  %v2466 = vadd.f32 0.0, %v2465
  %2467 = vmatmul.bf16.gmra.mxu0 %v2304
  %v2468 = vpop.f32.mrf.mxu0
  %v2469 = vadd.f32 0.0, %v2468
  %v2470 = vpop.f32.mrf.mxu0
  %v2471 = vadd.f32 0.0, %v2470
  %2472 = vmatmul.bf16.gmra.mxu0 %v2307
  %v2473 = vpop.f32.mrf.mxu0
  %v2474 = vadd.f32 0.0, %v2473
  %v2475 = vpop.f32.mrf.mxu0
  %v2476 = vadd.f32 0.0, %v2475
  %2477 = vmatmul.bf16.gmra.mxu0 %v2310
  %v2478 = vpop.f32.mrf.mxu0
  %v2479 = vadd.f32 0.0, %v2478
  %v2480 = vpop.f32.mrf.mxu0
  %v2481 = vadd.f32 0.0, %v2480
  %2482 = vmatmul.bf16.gmra.mxu0 %v2313
  %v2483 = vpop.f32.mrf.mxu0
  %v2484 = vadd.f32 0.0, %v2483
  %v2485 = vpop.f32.mrf.mxu0
  %2486 = vdwg.mxu0
  %2487 = vst [vmem:[#allocation2 + $0x20] sm:$0xff] %v2325
  %2488 = vst [vmem:[#allocation2 + $0x28] sm:$0xff] %v2368
  %2489 = vst [vmem:[#allocation2 + $0x30] sm:$0xff] %v2411
  %2490 = vst [vmem:[#allocation2 + $0x38] sm:$0xff] %v2454
  %2491 = vst [vmem:[#allocation2 + $0x40] sm:$0xff] %v2327
  %2492 = vst [vmem:[#allocation2 + $0x48] sm:$0xff] %v2370
  %2493 = vst [vmem:[#allocation2 + $0x50] sm:$0xff] %v2413
  %2494 = vst [vmem:[#allocation2 + $0x58] sm:$0xff] %v2456
  %2495 = vst [vmem:[#allocation2 + $0x60] sm:$0xff] %v2330
  %2496 = vst [vmem:[#allocation2 + $0x68] sm:$0xff] %v2373
  %2497 = vst [vmem:[#allocation2 + $0x70] sm:$0xff] %v2416
  %2498 = vst [vmem:[#allocation2 + $0x78] sm:$0xff] %v2459
  %2499 = vst [vmem:[#allocation2 + $0x80] sm:$0xff] %v2332
  %2500 = vst [vmem:[#allocation2 + $0x88] sm:$0xff] %v2375
  %2501 = vst [vmem:[#allocation2 + $0x90] sm:$0xff] %v2418
  %2502 = vst [vmem:[#allocation2 + $0x98] sm:$0xff] %v2461
  %2503 = vst [vmem:[#allocation2 + $0xa0] sm:$0xff] %v2335
  %2504 = vst [vmem:[#allocation2 + $0xa8] sm:$0xff] %v2378
  %2505 = vst [vmem:[#allocation2 + $0xb0] sm:$0xff] %v2421
  %2506 = vst [vmem:[#allocation2 + $0xb8] sm:$0xff] %v2464
  %2507 = vst [vmem:[#allocation2 + $0xc0] sm:$0xff] %v2337
  %2508 = vst [vmem:[#allocation2 + $0xc8] sm:$0xff] %v2380
  %2509 = vst [vmem:[#allocation2 + $0xd0] sm:$0xff] %v2423
  %2510 = vst [vmem:[#allocation2 + $0xd8] sm:$0xff] %v2466
  %2511 = vst [vmem:[#allocation2 + $0xe0] sm:$0xff] %v2340
  %2512 = vst [vmem:[#allocation2 + $0xe8] sm:$0xff] %v2383
  %2513 = vst [vmem:[#allocation2 + $0xf0] sm:$0xff] %v2426
  %2514 = vst [vmem:[#allocation2 + $0xf8] sm:$0xff] %v2469
  %2515 = vst [vmem:[#allocation2 + $0x100] sm:$0xff] %v2342
  %2516 = vst [vmem:[#allocation2 + $0x108] sm:$0xff] %v2385
  %2517 = vst [vmem:[#allocation2 + $0x110] sm:$0xff] %v2428
  %2518 = vst [vmem:[#allocation2 + $0x118] sm:$0xff] %v2471
  %2519 = vst [vmem:[#allocation2 + $0x120] sm:$0xff] %v2345
  %2520 = vst [vmem:[#allocation2 + $0x128] sm:$0xff] %v2388
  %2521 = vst [vmem:[#allocation2 + $0x130] sm:$0xff] %v2431
  %2522 = vst [vmem:[#allocation2 + $0x138] sm:$0xff] %v2474
  %2523 = vst [vmem:[#allocation2 + $0x140] sm:$0xff] %v2347
  %2524 = vst [vmem:[#allocation2 + $0x148] sm:$0xff] %v2390
  %2525 = vst [vmem:[#allocation2 + $0x150] sm:$0xff] %v2433
  %2526 = vst [vmem:[#allocation2 + $0x158] sm:$0xff] %v2476
  %2527 = vst [vmem:[#allocation2 + $0x160] sm:$0xff] %v2350
  %2528 = vst [vmem:[#allocation2 + $0x168] sm:$0xff] %v2393
  %2529 = vst [vmem:[#allocation2 + $0x170] sm:$0xff] %v2436
  %2530 = vst [vmem:[#allocation2 + $0x178] sm:$0xff] %v2479
  %2531 = vst [vmem:[#allocation2 + $0x180] sm:$0xff] %v2352
  %2532 = vst [vmem:[#allocation2 + $0x188] sm:$0xff] %v2395
  %2533 = vst [vmem:[#allocation2 + $0x190] sm:$0xff] %v2438
  %2534 = vst [vmem:[#allocation2 + $0x198] sm:$0xff] %v2481
  %2535 = vst [vmem:[#allocation2 + $0x1a0] sm:$0x3] %v2355
  %2536 = vst [vmem:[#allocation2 + $0x1a8] sm:$0x3] %v2398
  %2537 = vst [vmem:[#allocation2 + $0x1b0] sm:$0x3] %v2441
  %2538 = vst [vmem:[#allocation2 + $0x1b8] sm:$0x3] %v2484
  %v2539 = vld [vmem:[#allocation2] sm:$0xfe]
  %v2540 = vld [vmem:[#allocation2 + $0x20] sm:$0xff]
  %v2541 = vld [vmem:[#allocation2 + $0x40] sm:$0xff]
  %v2542 = vld [vmem:[#allocation2 + $0x60] sm:$0xff]
  %v2543 = vld [vmem:[#allocation2 + $0x80] sm:$0xff]
  %v2544 = vld [vmem:[#allocation2 + $0xa0] sm:$0xff]
  %v2545 = vld [vmem:[#allocation2 + $0xc0] sm:$0xff]
  %v2546 = vld [vmem:[#allocation2 + $0xe0] sm:$0xff]
  %v2547 = vld [vmem:[#allocation2 + $0x100] sm:$0xff]
  %v2548 = vld [vmem:[#allocation2 + $0x120] sm:$0xff]
  %v2549 = vld [vmem:[#allocation2 + $0x140] sm:$0xff]
  %v2550 = vld [vmem:[#allocation2 + $0x160] sm:$0xff]
  %v2551 = vld [vmem:[#allocation2 + $0x180] sm:$0x7]
  %2552 = vset.pattern.permute.xlu0 8
  %2553 = vperm.xlu0 %2552, %v37
  %v2554 = vpop.permute.xlu0 %2553
  %2555 = vset.pattern.permute.xlu0 8
  %2556 = vperm.xlu0 %2555, %v38
  %v2557 = vpop.permute.xlu0 %2556
  %2558 = vset.pattern.permute.xlu0 8
  %2559 = vperm.xlu0 %2558, %v39
  %v2560 = vpop.permute.xlu0 %2559
  %2561 = vset.pattern.permute.xlu0 8
  %2562 = vperm.xlu0 %2561, %v40
  %v2563 = vpop.permute.xlu0 %2562
  %2564 = vset.pattern.permute.xlu0 8
  %2565 = vperm.xlu0 %2564, %v41
  %v2566 = vpop.permute.xlu0 %2565
  %2567 = vset.pattern.permute.xlu0 8
  %2568 = vperm.xlu0 %2567, %v42
  %v2569 = vpop.permute.xlu0 %2568
  %2570 = vset.pattern.permute.xlu0 8
  %2571 = vperm.xlu0 %2570, %v43
  %v2572 = vpop.permute.xlu0 %2571
  %2573 = vset.pattern.permute.xlu0 8
  %2574 = vperm.xlu0 %2573, %v44
  %v2575 = vpop.permute.xlu0 %2574
  %2576 = vset.pattern.permute.xlu0 8
  %2577 = vperm.xlu0 %2576, %v45
  %v2578 = vpop.permute.xlu0 %2577
  %2579 = vset.pattern.permute.xlu0 8
  %2580 = vperm.xlu0 %2579, %v46
  %v2581 = vpop.permute.xlu0 %2580
  %2582 = vset.pattern.permute.xlu0 8
  %2583 = vperm.xlu0 %2582, %v47
  %v2584 = vpop.permute.xlu0 %2583
  %2585 = vset.pattern.permute.xlu0 8
  %2586 = vperm.xlu0 %2585, %v48
  %v2587 = vpop.permute.xlu0 %2586
  %2588 = vset.pattern.permute.xlu0 8
  %2589 = vperm.xlu0 %2588, %v49
  %v2590 = vpop.permute.xlu0 %2589
  %v2591 = vrot.slane %v2554, 7
  %v2592 = vrot.slane %v2557, 7
  %v2593 = vsel %vm645, %v2591, %v2592
  %v2594 = vrot.slane %v2560, 7
  %v2595 = vsel %vm645, %v2592, %v2594
  %v2596 = vrot.slane %v2563, 7
  %v2597 = vsel %vm645, %v2594, %v2596
  %v2598 = vrot.slane %v2566, 7
  %v2599 = vsel %vm645, %v2596, %v2598
  %v2600 = vrot.slane %v2569, 7
  %v2601 = vsel %vm645, %v2598, %v2600
  %v2602 = vrot.slane %v2572, 7
  %v2603 = vsel %vm645, %v2600, %v2602
  %v2604 = vrot.slane %v2575, 7
  %v2605 = vsel %vm645, %v2602, %v2604
  %v2606 = vrot.slane %v2578, 7
  %v2607 = vsel %vm645, %v2604, %v2606
  %v2608 = vrot.slane %v2581, 7
  %v2609 = vsel %vm645, %v2606, %v2608
  %v2610 = vrot.slane %v2584, 7
  %v2611 = vsel %vm645, %v2608, %v2610
  %v2612 = vrot.slane %v2587, 7
  %v2613 = vsel %vm645, %v2610, %v2612
  %v2614 = vrot.slane %v2590, 7
  %v2615 = vsel %vm645, %v2612, %v2614
  %v2629 = vmul.f32 %v2539, %v2591
  %v2630 = vmul.f32 %v2540, %v2593
  %v2631 = vmul.f32 %v2541, %v2595
  %v2632 = vmul.f32 %v2542, %v2597
  %v2633 = vmul.f32 %v2543, %v2599
  %v2634 = vmul.f32 %v2544, %v2601
  %v2635 = vmul.f32 %v2545, %v2603
  %v2636 = vmul.f32 %v2546, %v2605
  %v2637 = vmul.f32 %v2547, %v2607
  %v2638 = vmul.f32 %v2548, %v2609
  %v2639 = vmul.f32 %v2549, %v2611
  %v2640 = vmul.f32 %v2550, %v2613
  %v2641 = vmul.f32 %v2551, %v2615
  %v2655 = vrot.slane %v2629, 1
  %v2656 = vrot.slane %v2630, 1
  %v2657 = vsel %vm710, %v2655, %v2656
  %v2658 = vrot.slane %v2631, 1
  %v2659 = vsel %vm710, %v2656, %v2658
  %v2660 = vrot.slane %v2632, 1
  %v2661 = vsel %vm710, %v2658, %v2660
  %v2662 = vrot.slane %v2633, 1
  %v2663 = vsel %vm710, %v2660, %v2662
  %v2664 = vrot.slane %v2634, 1
  %v2665 = vsel %vm710, %v2662, %v2664
  %v2666 = vrot.slane %v2635, 1
  %v2667 = vsel %vm710, %v2664, %v2666
  %v2668 = vrot.slane %v2636, 1
  %v2669 = vsel %vm710, %v2666, %v2668
  %v2670 = vrot.slane %v2637, 1
  %v2671 = vsel %vm710, %v2668, %v2670
  %v2672 = vrot.slane %v2638, 1
  %v2673 = vsel %vm710, %v2670, %v2672
  %v2674 = vrot.slane %v2639, 1
  %v2675 = vsel %vm710, %v2672, %v2674
  %v2676 = vrot.slane %v2640, 1
  %v2677 = vsel %vm710, %v2674, %v2676
  %v2678 = vrot.slane %v2641, 1
  %v2679 = vsel %vm710, %v2676, %v2678
  %v2693 = vadd.f32 %v2040, %v2657
  %v2694 = vadd.f32 %v2041, %v2659
  %v2695 = vadd.f32 %v2042, %v2661
  %v2696 = vadd.f32 %v2043, %v2663
  %v2697 = vadd.f32 %v2044, %v2665
  %v2698 = vadd.f32 %v2045, %v2667
  %v2699 = vadd.f32 %v2046, %v2669
  %v2700 = vadd.f32 %v2047, %v2671
  %v2701 = vadd.f32 %v2048, %v2673
  %v2702 = vadd.f32 %v2049, %v2675
  %v2703 = vadd.f32 %v2050, %v2677
  %v2704 = vadd.f32 %v2051, %v2679
  %v2705 = vadd.f32 %v2052, %v2678
  %v2706 = vld [vmem:[#allocation2 + $0x8] sm:$0xfc]
  %v2707 = vld [vmem:[#allocation2 + $0x28] sm:$0xff]
  %v2708 = vld [vmem:[#allocation2 + $0x48] sm:$0xff]
  %v2709 = vld [vmem:[#allocation2 + $0x68] sm:$0xff]
  %v2710 = vld [vmem:[#allocation2 + $0x88] sm:$0xff]
  %v2711 = vld [vmem:[#allocation2 + $0xa8] sm:$0xff]
  %v2712 = vld [vmem:[#allocation2 + $0xc8] sm:$0xff]
  %v2713 = vld [vmem:[#allocation2 + $0xe8] sm:$0xff]
  %v2714 = vld [vmem:[#allocation2 + $0x108] sm:$0xff]
  %v2715 = vld [vmem:[#allocation2 + $0x128] sm:$0xff]
  %v2716 = vld [vmem:[#allocation2 + $0x148] sm:$0xff]
  %v2717 = vld [vmem:[#allocation2 + $0x168] sm:$0xff]
  %v2718 = vld [vmem:[#allocation2 + $0x188] sm:$0xf]
  %2719 = vset.pattern.permute.xlu0 9
  %2720 = vperm.xlu0 %2719, %v37
  %v2721 = vpop.permute.xlu0 %2720
  %2722 = vset.pattern.permute.xlu0 9
  %2723 = vperm.xlu0 %2722, %v38
  %v2724 = vpop.permute.xlu0 %2723
  %2725 = vset.pattern.permute.xlu0 9
  %2726 = vperm.xlu0 %2725, %v39
  %v2727 = vpop.permute.xlu0 %2726
  %2728 = vset.pattern.permute.xlu0 9
  %2729 = vperm.xlu0 %2728, %v40
  %v2730 = vpop.permute.xlu0 %2729
  %2731 = vset.pattern.permute.xlu0 9
  %2732 = vperm.xlu0 %2731, %v41
  %v2733 = vpop.permute.xlu0 %2732
  %2734 = vset.pattern.permute.xlu0 9
  %2735 = vperm.xlu0 %2734, %v42
  %v2736 = vpop.permute.xlu0 %2735
  %2737 = vset.pattern.permute.xlu0 9
  %2738 = vperm.xlu0 %2737, %v43
  %v2739 = vpop.permute.xlu0 %2738
  %2740 = vset.pattern.permute.xlu0 9
  %2741 = vperm.xlu0 %2740, %v44
  %v2742 = vpop.permute.xlu0 %2741
  %2743 = vset.pattern.permute.xlu0 9
  %2744 = vperm.xlu0 %2743, %v45
  %v2745 = vpop.permute.xlu0 %2744
  %2746 = vset.pattern.permute.xlu0 9
  %2747 = vperm.xlu0 %2746, %v46
  %v2748 = vpop.permute.xlu0 %2747
  %2749 = vset.pattern.permute.xlu0 9
  %2750 = vperm.xlu0 %2749, %v47
  %v2751 = vpop.permute.xlu0 %2750
  %2752 = vset.pattern.permute.xlu0 9
  %2753 = vperm.xlu0 %2752, %v48
  %v2754 = vpop.permute.xlu0 %2753
  %2755 = vset.pattern.permute.xlu0 9
  %2756 = vperm.xlu0 %2755, %v49
  %v2757 = vpop.permute.xlu0 %2756
  %v2758 = vrot.slane %v2721, 6
  %v2759 = vrot.slane %v2724, 6
  %v2760 = vsel %vm1828, %v2758, %v2759
  %v2761 = vrot.slane %v2727, 6
  %v2762 = vsel %vm1828, %v2759, %v2761
  %v2763 = vrot.slane %v2730, 6
  %v2764 = vsel %vm1828, %v2761, %v2763
  %v2765 = vrot.slane %v2733, 6
  %v2766 = vsel %vm1828, %v2763, %v2765
  %v2767 = vrot.slane %v2736, 6
  %v2768 = vsel %vm1828, %v2765, %v2767
  %v2769 = vrot.slane %v2739, 6
  %v2770 = vsel %vm1828, %v2767, %v2769
  %v2771 = vrot.slane %v2742, 6
  %v2772 = vsel %vm1828, %v2769, %v2771
  %v2773 = vrot.slane %v2745, 6
  %v2774 = vsel %vm1828, %v2771, %v2773
  %v2775 = vrot.slane %v2748, 6
  %v2776 = vsel %vm1828, %v2773, %v2775
  %v2777 = vrot.slane %v2751, 6
  %v2778 = vsel %vm1828, %v2775, %v2777
  %v2779 = vrot.slane %v2754, 6
  %v2780 = vsel %vm1828, %v2777, %v2779
  %v2781 = vrot.slane %v2757, 6
  %v2782 = vsel %vm1828, %v2779, %v2781
  %v2796 = vmul.f32 %v2706, %v2758
  %v2797 = vmul.f32 %v2707, %v2760
  %v2798 = vmul.f32 %v2708, %v2762
  %v2799 = vmul.f32 %v2709, %v2764
  %v2800 = vmul.f32 %v2710, %v2766
  %v2801 = vmul.f32 %v2711, %v2768
  %v2802 = vmul.f32 %v2712, %v2770
  %v2803 = vmul.f32 %v2713, %v2772
  %v2804 = vmul.f32 %v2714, %v2774
  %v2805 = vmul.f32 %v2715, %v2776
  %v2806 = vmul.f32 %v2716, %v2778
  %v2807 = vmul.f32 %v2717, %v2780
  %v2808 = vmul.f32 %v2718, %v2782
  %v2822 = vrot.slane %v2796, 2
  %v2823 = vrot.slane %v2797, 2
  %v2824 = vsel %vm1763, %v2822, %v2823
  %v2825 = vrot.slane %v2798, 2
  %v2826 = vsel %vm1763, %v2823, %v2825
  %v2827 = vrot.slane %v2799, 2
  %v2828 = vsel %vm1763, %v2825, %v2827
  %v2829 = vrot.slane %v2800, 2
  %v2830 = vsel %vm1763, %v2827, %v2829
  %v2831 = vrot.slane %v2801, 2
  %v2832 = vsel %vm1763, %v2829, %v2831
  %v2833 = vrot.slane %v2802, 2
  %v2834 = vsel %vm1763, %v2831, %v2833
  %v2835 = vrot.slane %v2803, 2
  %v2836 = vsel %vm1763, %v2833, %v2835
  %v2837 = vrot.slane %v2804, 2
  %v2838 = vsel %vm1763, %v2835, %v2837
  %v2839 = vrot.slane %v2805, 2
  %v2840 = vsel %vm1763, %v2837, %v2839
  %v2841 = vrot.slane %v2806, 2
  %v2842 = vsel %vm1763, %v2839, %v2841
  %v2843 = vrot.slane %v2807, 2
  %v2844 = vsel %vm1763, %v2841, %v2843
  %v2845 = vrot.slane %v2808, 2
  %v2846 = vsel %vm1763, %v2843, %v2845
  %v2860 = vadd.f32 %v2693, %v2824
  %v2861 = vadd.f32 %v2694, %v2826
  %v2862 = vadd.f32 %v2695, %v2828
  %v2863 = vadd.f32 %v2696, %v2830
  %v2864 = vadd.f32 %v2697, %v2832
  %v2865 = vadd.f32 %v2698, %v2834
  %v2866 = vadd.f32 %v2699, %v2836
  %v2867 = vadd.f32 %v2700, %v2838
  %v2868 = vadd.f32 %v2701, %v2840
  %v2869 = vadd.f32 %v2702, %v2842
  %v2870 = vadd.f32 %v2703, %v2844
  %v2871 = vadd.f32 %v2704, %v2846
  %v2872 = vadd.f32 %v2705, %v2845
  %v2873 = vld [vmem:[#allocation2 + $0x30] sm:$0xff]
  %v2874 = vld [vmem:[#allocation2 + $0x50] sm:$0xff]
  %v2875 = vld [vmem:[#allocation2 + $0x70] sm:$0xff]
  %v2876 = vld [vmem:[#allocation2 + $0x90] sm:$0xff]
  %v2877 = vld [vmem:[#allocation2 + $0xb0] sm:$0xff]
  %v2878 = vld [vmem:[#allocation2 + $0xd0] sm:$0xff]
  %v2879 = vld [vmem:[#allocation2 + $0xf0] sm:$0xff]
  %v2880 = vld [vmem:[#allocation2 + $0x110] sm:$0xff]
  %v2881 = vld [vmem:[#allocation2 + $0x130] sm:$0xff]
  %v2882 = vld [vmem:[#allocation2 + $0x150] sm:$0xff]
  %v2883 = vld [vmem:[#allocation2 + $0x170] sm:$0xff]
  %v2884 = vld [vmem:[#allocation2 + $0x190] sm:$0xff]
  %v2885 = vld [vmem:[#allocation2 + $0x1b0] sm:$0x3]
  %v2886 = vadd.f32 %v2860, %v2873
  %v2887 = vadd.f32 %v2861, %v2874
  %v2888 = vadd.f32 %v2862, %v2875
  %v2889 = vadd.f32 %v2863, %v2876
  %v2890 = vadd.f32 %v2864, %v2877
  %v2891 = vadd.f32 %v2865, %v2878
  %v2892 = vadd.f32 %v2866, %v2879
  %v2893 = vadd.f32 %v2867, %v2880
  %v2894 = vadd.f32 %v2868, %v2881
  %v2895 = vadd.f32 %v2869, %v2882
  %v2896 = vadd.f32 %v2870, %v2883
  %v2897 = vadd.f32 %v2871, %v2884
  %v2898 = vadd.f32 %v2872, %v2885
  %v2899 = vld [vmem:[#allocation2 + $0x38] sm:$0xfe]
  %v2900 = vld [vmem:[#allocation2 + $0x58] sm:$0xff]
  %v2901 = vld [vmem:[#allocation2 + $0x78] sm:$0xff]
  %v2902 = vld [vmem:[#allocation2 + $0x98] sm:$0xff]
  %v2903 = vld [vmem:[#allocation2 + $0xb8] sm:$0xff]
  %v2904 = vld [vmem:[#allocation2 + $0xd8] sm:$0xff]
  %v2905 = vld [vmem:[#allocation2 + $0xf8] sm:$0xff]
  %v2906 = vld [vmem:[#allocation2 + $0x118] sm:$0xff]
  %v2907 = vld [vmem:[#allocation2 + $0x138] sm:$0xff]
  %v2908 = vld [vmem:[#allocation2 + $0x158] sm:$0xff]
  %v2909 = vld [vmem:[#allocation2 + $0x178] sm:$0xff]
  %v2910 = vld [vmem:[#allocation2 + $0x198] sm:$0xff]
  %v2911 = vld [vmem:[#allocation2 + $0x1b8] sm:$0x7]
  %2912 = vset.pattern.permute.xlu0 11
  %2913 = vperm.xlu0 %2912, %v37
  %v2914 = vpop.permute.xlu0 %2913
  %2915 = vset.pattern.permute.xlu0 11
  %2916 = vperm.xlu0 %2915, %v38
  %v2917 = vpop.permute.xlu0 %2916
  %2918 = vset.pattern.permute.xlu0 11
  %2919 = vperm.xlu0 %2918, %v39
  %v2920 = vpop.permute.xlu0 %2919
  %2921 = vset.pattern.permute.xlu0 11
  %2922 = vperm.xlu0 %2921, %v40
  %v2923 = vpop.permute.xlu0 %2922
  %2924 = vset.pattern.permute.xlu0 11
  %2925 = vperm.xlu0 %2924, %v41
  %v2926 = vpop.permute.xlu0 %2925
  %2927 = vset.pattern.permute.xlu0 11
  %2928 = vperm.xlu0 %2927, %v42
  %v2929 = vpop.permute.xlu0 %2928
  %2930 = vset.pattern.permute.xlu0 11
  %2931 = vperm.xlu0 %2930, %v43
  %v2932 = vpop.permute.xlu0 %2931
  %2933 = vset.pattern.permute.xlu0 11
  %2934 = vperm.xlu0 %2933, %v44
  %v2935 = vpop.permute.xlu0 %2934
  %2936 = vset.pattern.permute.xlu0 11
  %2937 = vperm.xlu0 %2936, %v45
  %v2938 = vpop.permute.xlu0 %2937
  %2939 = vset.pattern.permute.xlu0 11
  %2940 = vperm.xlu0 %2939, %v46
  %v2941 = vpop.permute.xlu0 %2940
  %2942 = vset.pattern.permute.xlu0 11
  %2943 = vperm.xlu0 %2942, %v47
  %v2944 = vpop.permute.xlu0 %2943
  %2945 = vset.pattern.permute.xlu0 11
  %2946 = vperm.xlu0 %2945, %v48
  %v2947 = vpop.permute.xlu0 %2946
  %2948 = vset.pattern.permute.xlu0 11
  %2949 = vperm.xlu0 %2948, %v49
  %v2950 = vpop.permute.xlu0 %2949
  %v2951 = vrot.slane %v2914, 7
  %v2952 = vrot.slane %v2917, 7
  %v2953 = vsel %vm645, %v2951, %v2952
  %v2954 = vrot.slane %v2920, 7
  %v2955 = vsel %vm645, %v2952, %v2954
  %v2956 = vrot.slane %v2923, 7
  %v2957 = vsel %vm645, %v2954, %v2956
  %v2958 = vrot.slane %v2926, 7
  %v2959 = vsel %vm645, %v2956, %v2958
  %v2960 = vrot.slane %v2929, 7
  %v2961 = vsel %vm645, %v2958, %v2960
  %v2962 = vrot.slane %v2932, 7
  %v2963 = vsel %vm645, %v2960, %v2962
  %v2964 = vrot.slane %v2935, 7
  %v2965 = vsel %vm645, %v2962, %v2964
  %v2966 = vrot.slane %v2938, 7
  %v2967 = vsel %vm645, %v2964, %v2966
  %v2968 = vrot.slane %v2941, 7
  %v2969 = vsel %vm645, %v2966, %v2968
  %v2970 = vrot.slane %v2944, 7
  %v2971 = vsel %vm645, %v2968, %v2970
  %v2972 = vrot.slane %v2947, 7
  %v2973 = vsel %vm645, %v2970, %v2972
  %v2974 = vrot.slane %v2950, 7
  %v2975 = vsel %vm645, %v2972, %v2974
  %v2989 = vmul.f32 %v2899, %v2951
  %v2990 = vmul.f32 %v2900, %v2953
  %v2991 = vmul.f32 %v2901, %v2955
  %v2992 = vmul.f32 %v2902, %v2957
  %v2993 = vmul.f32 %v2903, %v2959
  %v2994 = vmul.f32 %v2904, %v2961
  %v2995 = vmul.f32 %v2905, %v2963
  %v2996 = vmul.f32 %v2906, %v2965
  %v2997 = vmul.f32 %v2907, %v2967
  %v2998 = vmul.f32 %v2908, %v2969
  %v2999 = vmul.f32 %v2909, %v2971
  %v3000 = vmul.f32 %v2910, %v2973
  %v3001 = vmul.f32 %v2911, %v2975
  %v3015 = vrot.slane %v2989, 1
  %v3016 = vrot.slane %v2990, 1
  %v3017 = vsel %vm710, %v3015, %v3016
  %v3018 = vrot.slane %v2991, 1
  %v3019 = vsel %vm710, %v3016, %v3018
  %v3020 = vrot.slane %v2992, 1
  %v3021 = vsel %vm710, %v3018, %v3020
  %v3022 = vrot.slane %v2993, 1
  %v3023 = vsel %vm710, %v3020, %v3022
  %v3024 = vrot.slane %v2994, 1
  %v3025 = vsel %vm710, %v3022, %v3024
  %v3026 = vrot.slane %v2995, 1
  %v3027 = vsel %vm710, %v3024, %v3026
  %v3028 = vrot.slane %v2996, 1
  %v3029 = vsel %vm710, %v3026, %v3028
  %v3030 = vrot.slane %v2997, 1
  %v3031 = vsel %vm710, %v3028, %v3030
  %v3032 = vrot.slane %v2998, 1
  %v3033 = vsel %vm710, %v3030, %v3032
  %v3034 = vrot.slane %v2999, 1
  %v3035 = vsel %vm710, %v3032, %v3034
  %v3036 = vrot.slane %v3000, 1
  %v3037 = vsel %vm710, %v3034, %v3036
  %v3038 = vrot.slane %v3001, 1
  %v3039 = vsel %vm710, %v3036, %v3038
  %v3053 = vadd.f32 %v2886, %v3017
  %v3054 = vadd.f32 %v2887, %v3019
  %v3055 = vadd.f32 %v2888, %v3021
  %v3056 = vadd.f32 %v2889, %v3023
  %v3057 = vadd.f32 %v2890, %v3025
  %v3058 = vadd.f32 %v2891, %v3027
  %v3059 = vadd.f32 %v2892, %v3029
  %v3060 = vadd.f32 %v2893, %v3031
  %v3061 = vadd.f32 %v2894, %v3033
  %v3062 = vadd.f32 %v2895, %v3035
  %v3063 = vadd.f32 %v2896, %v3037
  %v3064 = vadd.f32 %v2897, %v3039
  %v3065 = vadd.f32 %v2898, %v3038
  %s3066 = scalar_lea.vmem %s0, 156
  %v3067 = vld [vmem:[%s3066] sm:$0xf]
  %v3068 = vld [vmem:[%s3066 + $0x4] sm:$0xf]
  %v3069 = vld [vmem:[%s3066 + $0x8] sm:$0xf]
  %v3070 = vld [vmem:[%s3066 + $0xc] sm:$0xf]
  %v3071 = vld [vmem:[%s3066 + $0x10] sm:$0xf]
  %v3072 = vld [vmem:[%s3066 + $0x14] sm:$0xf]
  %v3073 = vld [vmem:[%s3066 + $0x18] sm:$0xf]
  %v3074 = vld [vmem:[%s3066 + $0x1c] sm:$0xf]
  %v3075 = vld [vmem:[%s3066 + $0x20] sm:$0xf]
  %v3076 = vld [vmem:[%s3066 + $0x24] sm:$0xf]
  %v3077 = vld [vmem:[%s3066 + $0x28] sm:$0xf]
  %v3078 = vld [vmem:[%s3066 + $0x2c] sm:$0xf]
  %v3079 = vld [vmem:[%s3066 + $0x30] sm:$0x1]
  %v3093 = vunpack.c.l.b16 %v3067
  %v3094 = vunpack.c.l.b16 %v3068
  %v3095 = vunpack.c.l.b16 %v3069
  %v3096 = vunpack.c.l.b16 %v3070
  %v3097 = vunpack.c.l.b16 %v3071
  %v3098 = vunpack.c.l.b16 %v3072
  %v3099 = vunpack.c.l.b16 %v3073
  %v3100 = vunpack.c.l.b16 %v3074
  %v3101 = vunpack.c.l.b16 %v3075
  %v3102 = vunpack.c.l.b16 %v3076
  %v3103 = vunpack.c.l.b16 %v3077
  %v3104 = vunpack.c.l.b16 %v3078
  %v3105 = vunpack.c.l.b16 %v3079
  %v3106 = vpack.c.b16 %v3094, %v3093
  %v3107 = vpack.c.b16 %v3096, %v3095
  %v3108 = vpack.c.b16 %v3098, %v3097
  %v3109 = vpack.c.b16 %v3100, %v3099
  %v3110 = vpack.c.b16 %v3102, %v3101
  %v3111 = vpack.c.b16 %v3104, %v3103
  %v3112 = vpack.c.b16 %v3105, %v3105
  %v3114 = vsel %vm114, %v3106, 0
  %v3117 = vsel %vm114, %v3107, 0
  %v3120 = vsel %vm114, %v3108, 0
  %v3123 = vsel %vm114, %v3109, 0
  %v3126 = vsel %vm114, %v3110, 0
  %v3129 = vsel %vm114, %v3111, 0
  %v3132 = vsel %vm114, %v3112, 0
  %3134 = vmatpush.bf16.msra.mxu0 0
  %3135 = vmatpush.bf16.msra.mxu0 0
  %3136 = vmatpush.bf16.msra.mxu0 0
  %3137 = vmatpush.bf16.msra.mxu0 0
  %3138 = vmatpush.bf16.msra.mxu0 0
  %3139 = vmatpush.bf16.msra.mxu0 0
  %3140 = vmatpush.bf16.msra.mxu0 0
  %3141 = vmatpush.bf16.msra.mxu0 %v112
  %3142 = vmatmul.bf16.gmra.mxu0 %v3114
  %v3143 = vpop.f32.mrf.mxu0
  %v3144 = vadd.f32 0.0, %v3143
  %v3145 = vpop.f32.mrf.mxu0
  %v3146 = vadd.f32 0.0, %v3145
  %3147 = vmatmul.bf16.gmra.mxu0 %v3117
  %v3148 = vpop.f32.mrf.mxu0
  %v3149 = vadd.f32 0.0, %v3148
  %v3150 = vpop.f32.mrf.mxu0
  %v3151 = vadd.f32 0.0, %v3150
  %3152 = vmatmul.bf16.gmra.mxu0 %v3120
  %v3153 = vpop.f32.mrf.mxu0
  %v3154 = vadd.f32 0.0, %v3153
  %v3155 = vpop.f32.mrf.mxu0
  %v3156 = vadd.f32 0.0, %v3155
  %3157 = vmatmul.bf16.gmra.mxu0 %v3123
  %v3158 = vpop.f32.mrf.mxu0
  %v3159 = vadd.f32 0.0, %v3158
  %v3160 = vpop.f32.mrf.mxu0
  %v3161 = vadd.f32 0.0, %v3160
  %3162 = vmatmul.bf16.gmra.mxu0 %v3126
  %v3163 = vpop.f32.mrf.mxu0
  %v3164 = vadd.f32 0.0, %v3163
  %v3165 = vpop.f32.mrf.mxu0
  %v3166 = vadd.f32 0.0, %v3165
  %3167 = vmatmul.bf16.gmra.mxu0 %v3129
  %v3168 = vpop.f32.mrf.mxu0
  %v3169 = vadd.f32 0.0, %v3168
  %v3170 = vpop.f32.mrf.mxu0
  %v3171 = vadd.f32 0.0, %v3170
  %3172 = vmatmul.bf16.gmra.mxu0 %v3132
  %v3173 = vpop.f32.mrf.mxu0
  %v3174 = vadd.f32 0.0, %v3173
  %v3175 = vpop.f32.mrf.mxu0
  %3176 = vdwg.mxu0
  %v3177 = vmul.f32 %v3144, 0.2
  %v3178 = vmul.f32 %v3146, 0.2
  %v3179 = vmul.f32 %v3149, 0.2
  %v3180 = vmul.f32 %v3151, 0.2
  %v3181 = vmul.f32 %v3154, 0.2
  %v3182 = vmul.f32 %v3156, 0.2
  %v3183 = vmul.f32 %v3159, 0.2
  %v3184 = vmul.f32 %v3161, 0.2
  %v3185 = vmul.f32 %v3164, 0.2
  %v3186 = vmul.f32 %v3166, 0.2
  %v3187 = vmul.f32 %v3169, 0.2
  %v3188 = vmul.f32 %v3171, 0.2
  %v3189 = vmul.f32 %v3174, 0.2
  %v3190 = vmax.f32 %v3144, %v3177
  %v3191 = vmax.f32 %v3146, %v3178
  %v3192 = vmax.f32 %v3149, %v3179
  %v3193 = vmax.f32 %v3151, %v3180
  %v3194 = vmax.f32 %v3154, %v3181
  %v3195 = vmax.f32 %v3156, %v3182
  %v3196 = vmax.f32 %v3159, %v3183
  %v3197 = vmax.f32 %v3161, %v3184
  %v3198 = vmax.f32 %v3164, %v3185
  %v3199 = vmax.f32 %v3166, %v3186
  %v3200 = vmax.f32 %v3169, %v3187
  %v3201 = vmax.f32 %v3171, %v3188
  %v3202 = vmax.f32 %v3174, %v3189
  %v3203 = vpack.c.bf16 %v3191, %v3190
  %v3204 = vpack.c.bf16 %v3193, %v3192
  %v3205 = vpack.c.bf16 %v3195, %v3194
  %v3206 = vpack.c.bf16 %v3197, %v3196
  %v3207 = vpack.c.bf16 %v3199, %v3198
  %v3208 = vpack.c.bf16 %v3201, %v3200
  %v3209 = vpack.c.bf16 %v3202, %v3202
  %s3210 = scalar_lea.vmem %s2, 384
  %v3211 = vld [vmem:[%s3210] sm:$0xff]
  %v3212 = vld [vmem:[%s3210 + $0x8] sm:$0xff]
  %v3213 = vld [vmem:[%s3210 + $0x10] sm:$0xff]
  %v3214 = vld [vmem:[%s3210 + $0x18] sm:$0xff]
  %v3215 = vld [vmem:[%s3210 + $0x20] sm:$0xff]
  %v3216 = vld [vmem:[%s3210 + $0x28] sm:$0xff]
  %v3217 = vld [vmem:[%s3210 + $0x30] sm:$0xff]
  %v3218 = vld [vmem:[%s3210 + $0x38] sm:$0xff]
  %v3219 = vld [vmem:[%s3210 + $0x40] sm:$0xff]
  %v3220 = vld [vmem:[%s3210 + $0x48] sm:$0xff]
  %v3221 = vld [vmem:[%s3210 + $0x50] sm:$0xff]
  %v3222 = vld [vmem:[%s3210 + $0x58] sm:$0xff]
  %v3223 = vld [vmem:[%s3210 + $0x60] sm:$0xff]
  %v3224 = vld [vmem:[%s3210 + $0x68] sm:$0xff]
  %v3225 = vld [vmem:[%s3210 + $0x70] sm:$0xff]
  %v3226 = vld [vmem:[%s3210 + $0x78] sm:$0xff]
  %v3243 = vunpack.c.l.b16 %v3211
  %v3244 = vunpack.c.h.b16 %v3211
  %v3245 = vunpack.c.l.b16 %v3212
  %v3246 = vunpack.c.h.b16 %v3212
  %v3247 = vunpack.c.l.b16 %v3213
  %v3248 = vunpack.c.h.b16 %v3213
  %v3249 = vunpack.c.l.b16 %v3214
  %v3250 = vunpack.c.h.b16 %v3214
  %v3251 = vunpack.c.l.b16 %v3215
  %v3252 = vunpack.c.h.b16 %v3215
  %v3253 = vunpack.c.l.b16 %v3216
  %v3254 = vunpack.c.h.b16 %v3216
  %v3255 = vunpack.c.l.b16 %v3217
  %v3256 = vunpack.c.h.b16 %v3217
  %v3257 = vunpack.c.l.b16 %v3218
  %v3258 = vunpack.c.h.b16 %v3218
  %v3259 = vunpack.c.l.b16 %v3219
  %v3260 = vunpack.c.h.b16 %v3219
  %v3261 = vunpack.c.l.b16 %v3220
  %v3262 = vunpack.c.h.b16 %v3220
  %v3263 = vunpack.c.l.b16 %v3221
  %v3264 = vunpack.c.h.b16 %v3221
  %v3265 = vunpack.c.l.b16 %v3222
  %v3266 = vunpack.c.h.b16 %v3222
  %v3267 = vunpack.c.l.b16 %v3223
  %v3268 = vunpack.c.h.b16 %v3223
  %v3269 = vunpack.c.l.b16 %v3224
  %v3270 = vunpack.c.h.b16 %v3224
  %v3271 = vunpack.c.l.b16 %v3225
  %v3272 = vunpack.c.h.b16 %v3225
  %v3273 = vunpack.c.l.b16 %v3226
  %v3274 = vunpack.c.h.b16 %v3226
  %v3275 = vpack.c.b16 %v3247, %v3243
  %v3276 = vpack.c.b16 %v3248, %v3244
  %v3277 = vpack.c.b16 %v3249, %v3245
  %v3278 = vpack.c.b16 %v3250, %v3246
  %v3279 = vpack.c.b16 %v3255, %v3251
  %v3280 = vpack.c.b16 %v3256, %v3252
  %v3281 = vpack.c.b16 %v3257, %v3253
  %v3282 = vpack.c.b16 %v3258, %v3254
  %v3283 = vpack.c.b16 %v3263, %v3259
  %v3284 = vpack.c.b16 %v3264, %v3260
  %v3285 = vpack.c.b16 %v3265, %v3261
  %v3286 = vpack.c.b16 %v3266, %v3262
  %v3287 = vpack.c.b16 %v3271, %v3267
  %v3288 = vpack.c.b16 %v3272, %v3268
  %v3289 = vpack.c.b16 %v3273, %v3269
  %v3290 = vpack.c.b16 %v3274, %v3270
  %v3308 = vsel %vm308, %v3203, 0
  %v3311 = vsel %vm308, %v3204, 0
  %v3314 = vsel %vm308, %v3205, 0
  %v3317 = vsel %vm308, %v3206, 0
  %v3320 = vsel %vm308, %v3207, 0
  %v3323 = vsel %vm308, %v3208, 0
  %v3326 = vsel %vm308, %v3209, 0
  %3328 = vmatpush.bf16.msra.mxu0 0
  %3329 = vmatpush.bf16.msra.mxu0 0
  %3330 = vmatpush.bf16.msra.mxu0 0
  %3331 = vmatpush.bf16.msra.mxu0 0
  %3332 = vmatpush.bf16.msra.mxu0 %v3287
  %3333 = vmatpush.bf16.msra.mxu0 %v3283
  %3334 = vmatpush.bf16.msra.mxu0 %v3279
  %3335 = vmatpush.bf16.msra.mxu0 %v3275
  %3336 = vmatmul.bf16.gmra.mxu0 %v3308
  %v3337 = vpop.f32.mrf.mxu0
  %v3338 = vadd.f32 0.0, %v3337
  %v3339 = vpop.f32.mrf.mxu0
  %v3340 = vadd.f32 0.0, %v3339
  %3341 = vmatmul.bf16.gmra.mxu0 %v3311
  %v3342 = vpop.f32.mrf.mxu0
  %v3343 = vadd.f32 0.0, %v3342
  %v3344 = vpop.f32.mrf.mxu0
  %v3345 = vadd.f32 0.0, %v3344
  %3346 = vmatmul.bf16.gmra.mxu0 %v3314
  %v3347 = vpop.f32.mrf.mxu0
  %v3348 = vadd.f32 0.0, %v3347
  %v3349 = vpop.f32.mrf.mxu0
  %v3350 = vadd.f32 0.0, %v3349
  %3351 = vmatmul.bf16.gmra.mxu0 %v3317
  %v3352 = vpop.f32.mrf.mxu0
  %v3353 = vadd.f32 0.0, %v3352
  %v3354 = vpop.f32.mrf.mxu0
  %v3355 = vadd.f32 0.0, %v3354
  %3356 = vmatmul.bf16.gmra.mxu0 %v3320
  %v3357 = vpop.f32.mrf.mxu0
  %v3358 = vadd.f32 0.0, %v3357
  %v3359 = vpop.f32.mrf.mxu0
  %v3360 = vadd.f32 0.0, %v3359
  %3361 = vmatmul.bf16.gmra.mxu0 %v3323
  %v3362 = vpop.f32.mrf.mxu0
  %v3363 = vadd.f32 0.0, %v3362
  %v3364 = vpop.f32.mrf.mxu0
  %v3365 = vadd.f32 0.0, %v3364
  %3366 = vmatmul.bf16.gmra.mxu0 %v3326
  %v3367 = vpop.f32.mrf.mxu0
  %v3368 = vadd.f32 0.0, %v3367
  %v3369 = vpop.f32.mrf.mxu0
  %3370 = vdwg.mxu0
  %3371 = vmatpush.bf16.msra.mxu0 0
  %3372 = vmatpush.bf16.msra.mxu0 0
  %3373 = vmatpush.bf16.msra.mxu0 0
  %3374 = vmatpush.bf16.msra.mxu0 0
  %3375 = vmatpush.bf16.msra.mxu0 %v3288
  %3376 = vmatpush.bf16.msra.mxu0 %v3284
  %3377 = vmatpush.bf16.msra.mxu0 %v3280
  %3378 = vmatpush.bf16.msra.mxu0 %v3276
  %3379 = vmatmul.bf16.gmra.mxu0 %v3308
  %v3380 = vpop.f32.mrf.mxu0
  %v3381 = vadd.f32 0.0, %v3380
  %v3382 = vpop.f32.mrf.mxu0
  %v3383 = vadd.f32 0.0, %v3382
  %3384 = vmatmul.bf16.gmra.mxu0 %v3311
  %v3385 = vpop.f32.mrf.mxu0
  %v3386 = vadd.f32 0.0, %v3385
  %v3387 = vpop.f32.mrf.mxu0
  %v3388 = vadd.f32 0.0, %v3387
  %3389 = vmatmul.bf16.gmra.mxu0 %v3314
  %v3390 = vpop.f32.mrf.mxu0
  %v3391 = vadd.f32 0.0, %v3390
  %v3392 = vpop.f32.mrf.mxu0
  %v3393 = vadd.f32 0.0, %v3392
  %3394 = vmatmul.bf16.gmra.mxu0 %v3317
  %v3395 = vpop.f32.mrf.mxu0
  %v3396 = vadd.f32 0.0, %v3395
  %v3397 = vpop.f32.mrf.mxu0
  %v3398 = vadd.f32 0.0, %v3397
  %3399 = vmatmul.bf16.gmra.mxu0 %v3320
  %v3400 = vpop.f32.mrf.mxu0
  %v3401 = vadd.f32 0.0, %v3400
  %v3402 = vpop.f32.mrf.mxu0
  %v3403 = vadd.f32 0.0, %v3402
  %3404 = vmatmul.bf16.gmra.mxu0 %v3323
  %v3405 = vpop.f32.mrf.mxu0
  %v3406 = vadd.f32 0.0, %v3405
  %v3407 = vpop.f32.mrf.mxu0
  %v3408 = vadd.f32 0.0, %v3407
  %3409 = vmatmul.bf16.gmra.mxu0 %v3326
  %v3410 = vpop.f32.mrf.mxu0
  %v3411 = vadd.f32 0.0, %v3410
  %v3412 = vpop.f32.mrf.mxu0
  %3413 = vdwg.mxu0
  %3414 = vmatpush.bf16.msra.mxu0 0
  %3415 = vmatpush.bf16.msra.mxu0 0
  %3416 = vmatpush.bf16.msra.mxu0 0
  %3417 = vmatpush.bf16.msra.mxu0 0
  %3418 = vmatpush.bf16.msra.mxu0 %v3289
  %3419 = vmatpush.bf16.msra.mxu0 %v3285
  %3420 = vmatpush.bf16.msra.mxu0 %v3281
  %3421 = vmatpush.bf16.msra.mxu0 %v3277
  %3422 = vmatmul.bf16.gmra.mxu0 %v3308
  %v3423 = vpop.f32.mrf.mxu0
  %v3424 = vadd.f32 0.0, %v3423
  %v3425 = vpop.f32.mrf.mxu0
  %v3426 = vadd.f32 0.0, %v3425
  %3427 = vmatmul.bf16.gmra.mxu0 %v3311
  %v3428 = vpop.f32.mrf.mxu0
  %v3429 = vadd.f32 0.0, %v3428
  %v3430 = vpop.f32.mrf.mxu0
  %v3431 = vadd.f32 0.0, %v3430
  %3432 = vmatmul.bf16.gmra.mxu0 %v3314
  %v3433 = vpop.f32.mrf.mxu0
  %v3434 = vadd.f32 0.0, %v3433
  %v3435 = vpop.f32.mrf.mxu0
  %v3436 = vadd.f32 0.0, %v3435
  %3437 = vmatmul.bf16.gmra.mxu0 %v3317
  %v3438 = vpop.f32.mrf.mxu0
  %v3439 = vadd.f32 0.0, %v3438
  %v3440 = vpop.f32.mrf.mxu0
  %v3441 = vadd.f32 0.0, %v3440
  %3442 = vmatmul.bf16.gmra.mxu0 %v3320
  %v3443 = vpop.f32.mrf.mxu0
  %v3444 = vadd.f32 0.0, %v3443
  %v3445 = vpop.f32.mrf.mxu0
  %v3446 = vadd.f32 0.0, %v3445
  %3447 = vmatmul.bf16.gmra.mxu0 %v3323
  %v3448 = vpop.f32.mrf.mxu0
  %v3449 = vadd.f32 0.0, %v3448
  %v3450 = vpop.f32.mrf.mxu0
  %v3451 = vadd.f32 0.0, %v3450
  %3452 = vmatmul.bf16.gmra.mxu0 %v3326
  %v3453 = vpop.f32.mrf.mxu0
  %v3454 = vadd.f32 0.0, %v3453
  %v3455 = vpop.f32.mrf.mxu0
  %3456 = vdwg.mxu0
  %3457 = vmatpush.bf16.msra.mxu0 0
  %3458 = vmatpush.bf16.msra.mxu0 0
  %3459 = vmatpush.bf16.msra.mxu0 0
  %3460 = vmatpush.bf16.msra.mxu0 0
  %3461 = vmatpush.bf16.msra.mxu0 %v3290
  %3462 = vmatpush.bf16.msra.mxu0 %v3286
  %3463 = vmatpush.bf16.msra.mxu0 %v3282
  %3464 = vmatpush.bf16.msra.mxu0 %v3278
  %3465 = vmatmul.bf16.gmra.mxu0 %v3308
  %v3466 = vpop.f32.mrf.mxu0
  %v3467 = vadd.f32 0.0, %v3466
  %v3468 = vpop.f32.mrf.mxu0
  %v3469 = vadd.f32 0.0, %v3468
  %3470 = vmatmul.bf16.gmra.mxu0 %v3311
  %v3471 = vpop.f32.mrf.mxu0
  %v3472 = vadd.f32 0.0, %v3471
  %v3473 = vpop.f32.mrf.mxu0
  %v3474 = vadd.f32 0.0, %v3473
  %3475 = vmatmul.bf16.gmra.mxu0 %v3314
  %v3476 = vpop.f32.mrf.mxu0
  %v3477 = vadd.f32 0.0, %v3476
  %v3478 = vpop.f32.mrf.mxu0
  %v3479 = vadd.f32 0.0, %v3478
  %3480 = vmatmul.bf16.gmra.mxu0 %v3317
  %v3481 = vpop.f32.mrf.mxu0
  %v3482 = vadd.f32 0.0, %v3481
  %v3483 = vpop.f32.mrf.mxu0
  %v3484 = vadd.f32 0.0, %v3483
  %3485 = vmatmul.bf16.gmra.mxu0 %v3320
  %v3486 = vpop.f32.mrf.mxu0
  %v3487 = vadd.f32 0.0, %v3486
  %v3488 = vpop.f32.mrf.mxu0
  %v3489 = vadd.f32 0.0, %v3488
  %3490 = vmatmul.bf16.gmra.mxu0 %v3323
  %v3491 = vpop.f32.mrf.mxu0
  %v3492 = vadd.f32 0.0, %v3491
  %v3493 = vpop.f32.mrf.mxu0
  %v3494 = vadd.f32 0.0, %v3493
  %3495 = vmatmul.bf16.gmra.mxu0 %v3326
  %v3496 = vpop.f32.mrf.mxu0
  %v3497 = vadd.f32 0.0, %v3496
  %v3498 = vpop.f32.mrf.mxu0
  %3499 = vdwg.mxu0
  %3500 = vst [vmem:[#allocation2 + $0x20] sm:$0xff] %v3338
  %3501 = vst [vmem:[#allocation2 + $0x28] sm:$0xff] %v3381
  %3502 = vst [vmem:[#allocation2 + $0x30] sm:$0xff] %v3424
  %3503 = vst [vmem:[#allocation2 + $0x38] sm:$0xff] %v3467
  %3504 = vst [vmem:[#allocation2 + $0x40] sm:$0xff] %v3340
  %3505 = vst [vmem:[#allocation2 + $0x48] sm:$0xff] %v3383
  %3506 = vst [vmem:[#allocation2 + $0x50] sm:$0xff] %v3426
  %3507 = vst [vmem:[#allocation2 + $0x58] sm:$0xff] %v3469
  %3508 = vst [vmem:[#allocation2 + $0x60] sm:$0xff] %v3343
  %3509 = vst [vmem:[#allocation2 + $0x68] sm:$0xff] %v3386
  %3510 = vst [vmem:[#allocation2 + $0x70] sm:$0xff] %v3429
  %3511 = vst [vmem:[#allocation2 + $0x78] sm:$0xff] %v3472
  %3512 = vst [vmem:[#allocation2 + $0x80] sm:$0xff] %v3345
  %3513 = vst [vmem:[#allocation2 + $0x88] sm:$0xff] %v3388
  %3514 = vst [vmem:[#allocation2 + $0x90] sm:$0xff] %v3431
  %3515 = vst [vmem:[#allocation2 + $0x98] sm:$0xff] %v3474
  %3516 = vst [vmem:[#allocation2 + $0xa0] sm:$0xff] %v3348
  %3517 = vst [vmem:[#allocation2 + $0xa8] sm:$0xff] %v3391
  %3518 = vst [vmem:[#allocation2 + $0xb0] sm:$0xff] %v3434
  %3519 = vst [vmem:[#allocation2 + $0xb8] sm:$0xff] %v3477
  %3520 = vst [vmem:[#allocation2 + $0xc0] sm:$0xff] %v3350
  %3521 = vst [vmem:[#allocation2 + $0xc8] sm:$0xff] %v3393
  %3522 = vst [vmem:[#allocation2 + $0xd0] sm:$0xff] %v3436
  %3523 = vst [vmem:[#allocation2 + $0xd8] sm:$0xff] %v3479
  %3524 = vst [vmem:[#allocation2 + $0xe0] sm:$0xff] %v3353
  %3525 = vst [vmem:[#allocation2 + $0xe8] sm:$0xff] %v3396
  %3526 = vst [vmem:[#allocation2 + $0xf0] sm:$0xff] %v3439
  %3527 = vst [vmem:[#allocation2 + $0xf8] sm:$0xff] %v3482
  %3528 = vst [vmem:[#allocation2 + $0x100] sm:$0xff] %v3355
  %3529 = vst [vmem:[#allocation2 + $0x108] sm:$0xff] %v3398
  %3530 = vst [vmem:[#allocation2 + $0x110] sm:$0xff] %v3441
  %3531 = vst [vmem:[#allocation2 + $0x118] sm:$0xff] %v3484
  %3532 = vst [vmem:[#allocation2 + $0x120] sm:$0xff] %v3358
  %3533 = vst [vmem:[#allocation2 + $0x128] sm:$0xff] %v3401
  %3534 = vst [vmem:[#allocation2 + $0x130] sm:$0xff] %v3444
  %3535 = vst [vmem:[#allocation2 + $0x138] sm:$0xff] %v3487
  %3536 = vst [vmem:[#allocation2 + $0x140] sm:$0xff] %v3360
  %3537 = vst [vmem:[#allocation2 + $0x148] sm:$0xff] %v3403
  %3538 = vst [vmem:[#allocation2 + $0x150] sm:$0xff] %v3446
  %3539 = vst [vmem:[#allocation2 + $0x158] sm:$0xff] %v3489
  %3540 = vst [vmem:[#allocation2 + $0x160] sm:$0xff] %v3363
  %3541 = vst [vmem:[#allocation2 + $0x168] sm:$0xff] %v3406
  %3542 = vst [vmem:[#allocation2 + $0x170] sm:$0xff] %v3449
  %3543 = vst [vmem:[#allocation2 + $0x178] sm:$0xff] %v3492
  %3544 = vst [vmem:[#allocation2 + $0x180] sm:$0xff] %v3365
  %3545 = vst [vmem:[#allocation2 + $0x188] sm:$0xff] %v3408
  %3546 = vst [vmem:[#allocation2 + $0x190] sm:$0xff] %v3451
  %3547 = vst [vmem:[#allocation2 + $0x198] sm:$0xff] %v3494
  %3548 = vst [vmem:[#allocation2 + $0x1a0] sm:$0x3] %v3368
  %3549 = vst [vmem:[#allocation2 + $0x1a8] sm:$0x3] %v3411
  %3550 = vst [vmem:[#allocation2 + $0x1b0] sm:$0x3] %v3454
  %3551 = vst [vmem:[#allocation2 + $0x1b8] sm:$0x3] %v3497
  %v3552 = vld [vmem:[#allocation2] sm:$0xff]
  %v3553 = vld [vmem:[#allocation2 + $0x20] sm:$0xff]
  %v3554 = vld [vmem:[#allocation2 + $0x40] sm:$0xff]
  %v3555 = vld [vmem:[#allocation2 + $0x60] sm:$0xff]
  %v3556 = vld [vmem:[#allocation2 + $0x80] sm:$0xff]
  %v3557 = vld [vmem:[#allocation2 + $0xa0] sm:$0xff]
  %v3558 = vld [vmem:[#allocation2 + $0xc0] sm:$0xff]
  %v3559 = vld [vmem:[#allocation2 + $0xe0] sm:$0xff]
  %v3560 = vld [vmem:[#allocation2 + $0x100] sm:$0xff]
  %v3561 = vld [vmem:[#allocation2 + $0x120] sm:$0xff]
  %v3562 = vld [vmem:[#allocation2 + $0x140] sm:$0xff]
  %v3563 = vld [vmem:[#allocation2 + $0x160] sm:$0xff]
  %v3564 = vld [vmem:[#allocation2 + $0x180] sm:$0x3]
  %3565 = vset.pattern.permute.xlu0 12
  %3566 = vperm.xlu0 %3565, %v37
  %v3567 = vpop.permute.xlu0 %3566
  %3569 = vset.pattern.permute.xlu0 12
  %3570 = vperm.xlu0 %3569, %v38
  %v3571 = vpop.permute.xlu0 %3570
  %3573 = vset.pattern.permute.xlu0 12
  %3574 = vperm.xlu0 %3573, %v39
  %v3575 = vpop.permute.xlu0 %3574
  %3577 = vset.pattern.permute.xlu0 12
  %3578 = vperm.xlu0 %3577, %v40
  %v3579 = vpop.permute.xlu0 %3578
  %3581 = vset.pattern.permute.xlu0 12
  %3582 = vperm.xlu0 %3581, %v41
  %v3583 = vpop.permute.xlu0 %3582
  %3585 = vset.pattern.permute.xlu0 12
  %3586 = vperm.xlu0 %3585, %v42
  %v3587 = vpop.permute.xlu0 %3586
  %3589 = vset.pattern.permute.xlu0 12
  %3590 = vperm.xlu0 %3589, %v43
  %v3591 = vpop.permute.xlu0 %3590
  %3593 = vset.pattern.permute.xlu0 12
  %3594 = vperm.xlu0 %3593, %v44
  %v3595 = vpop.permute.xlu0 %3594
  %3597 = vset.pattern.permute.xlu0 12
  %3598 = vperm.xlu0 %3597, %v45
  %v3599 = vpop.permute.xlu0 %3598
  %3601 = vset.pattern.permute.xlu0 12
  %3602 = vperm.xlu0 %3601, %v46
  %v3603 = vpop.permute.xlu0 %3602
  %3605 = vset.pattern.permute.xlu0 12
  %3606 = vperm.xlu0 %3605, %v47
  %v3607 = vpop.permute.xlu0 %3606
  %3609 = vset.pattern.permute.xlu0 12
  %3610 = vperm.xlu0 %3609, %v48
  %v3611 = vpop.permute.xlu0 %3610
  %3613 = vset.pattern.permute.xlu0 12
  %3614 = vperm.xlu0 %3613, %v49
  %v3615 = vpop.permute.xlu0 %3614
  %v3617 = vmul.f32 %v3552, %v3567
  %v3618 = vmul.f32 %v3553, %v3571
  %v3619 = vmul.f32 %v3554, %v3575
  %v3620 = vmul.f32 %v3555, %v3579
  %v3621 = vmul.f32 %v3556, %v3583
  %v3622 = vmul.f32 %v3557, %v3587
  %v3623 = vmul.f32 %v3558, %v3591
  %v3624 = vmul.f32 %v3559, %v3595
  %v3625 = vmul.f32 %v3560, %v3599
  %v3626 = vmul.f32 %v3561, %v3603
  %v3627 = vmul.f32 %v3562, %v3607
  %v3628 = vmul.f32 %v3563, %v3611
  %v3629 = vmul.f32 %v3564, %v3615
  %v3630 = vadd.f32 %v3053, %v3617
  %v3631 = vadd.f32 %v3054, %v3618
  %v3632 = vadd.f32 %v3055, %v3619
  %v3633 = vadd.f32 %v3056, %v3620
  %v3634 = vadd.f32 %v3057, %v3621
  %v3635 = vadd.f32 %v3058, %v3622
  %v3636 = vadd.f32 %v3059, %v3623
  %v3637 = vadd.f32 %v3060, %v3624
  %v3638 = vadd.f32 %v3061, %v3625
  %v3639 = vadd.f32 %v3062, %v3626
  %v3640 = vadd.f32 %v3063, %v3627
  %v3641 = vadd.f32 %v3064, %v3628
  %v3642 = vadd.f32 %v3065, %v3629
  %v3643 = vld [vmem:[#allocation2 + $0x8] sm:$0xfe]
  %v3644 = vld [vmem:[#allocation2 + $0x28] sm:$0xff]
  %v3645 = vld [vmem:[#allocation2 + $0x48] sm:$0xff]
  %v3646 = vld [vmem:[#allocation2 + $0x68] sm:$0xff]
  %v3647 = vld [vmem:[#allocation2 + $0x88] sm:$0xff]
  %v3648 = vld [vmem:[#allocation2 + $0xa8] sm:$0xff]
  %v3649 = vld [vmem:[#allocation2 + $0xc8] sm:$0xff]
  %v3650 = vld [vmem:[#allocation2 + $0xe8] sm:$0xff]
  %v3651 = vld [vmem:[#allocation2 + $0x108] sm:$0xff]
  %v3652 = vld [vmem:[#allocation2 + $0x128] sm:$0xff]
  %v3653 = vld [vmem:[#allocation2 + $0x148] sm:$0xff]
  %v3654 = vld [vmem:[#allocation2 + $0x168] sm:$0xff]
  %v3655 = vld [vmem:[#allocation2 + $0x188] sm:$0x7]
  %3656 = vset.pattern.permute.xlu0 13
  %3657 = vperm.xlu0 %3656, %v37
  %v3658 = vpop.permute.xlu0 %3657
  %3659 = vset.pattern.permute.xlu0 13
  %3660 = vperm.xlu0 %3659, %v38
  %v3661 = vpop.permute.xlu0 %3660
  %3662 = vset.pattern.permute.xlu0 13
  %3663 = vperm.xlu0 %3662, %v39
  %v3664 = vpop.permute.xlu0 %3663
  %3665 = vset.pattern.permute.xlu0 13
  %3666 = vperm.xlu0 %3665, %v40
  %v3667 = vpop.permute.xlu0 %3666
  %3668 = vset.pattern.permute.xlu0 13
  %3669 = vperm.xlu0 %3668, %v41
  %v3670 = vpop.permute.xlu0 %3669
  %3671 = vset.pattern.permute.xlu0 13
  %3672 = vperm.xlu0 %3671, %v42
  %v3673 = vpop.permute.xlu0 %3672
  %3674 = vset.pattern.permute.xlu0 13
  %3675 = vperm.xlu0 %3674, %v43
  %v3676 = vpop.permute.xlu0 %3675
  %3677 = vset.pattern.permute.xlu0 13
  %3678 = vperm.xlu0 %3677, %v44
  %v3679 = vpop.permute.xlu0 %3678
  %3680 = vset.pattern.permute.xlu0 13
  %3681 = vperm.xlu0 %3680, %v45
  %v3682 = vpop.permute.xlu0 %3681
  %3683 = vset.pattern.permute.xlu0 13
  %3684 = vperm.xlu0 %3683, %v46
  %v3685 = vpop.permute.xlu0 %3684
  %3686 = vset.pattern.permute.xlu0 13
  %3687 = vperm.xlu0 %3686, %v47
  %v3688 = vpop.permute.xlu0 %3687
  %3689 = vset.pattern.permute.xlu0 13
  %3690 = vperm.xlu0 %3689, %v48
  %v3691 = vpop.permute.xlu0 %3690
  %3692 = vset.pattern.permute.xlu0 13
  %3693 = vperm.xlu0 %3692, %v49
  %v3694 = vpop.permute.xlu0 %3693
  %v3695 = vrot.slane %v3658, 7
  %v3696 = vrot.slane %v3661, 7
  %v3697 = vsel %vm645, %v3695, %v3696
  %v3698 = vrot.slane %v3664, 7
  %v3699 = vsel %vm645, %v3696, %v3698
  %v3700 = vrot.slane %v3667, 7
  %v3701 = vsel %vm645, %v3698, %v3700
  %v3702 = vrot.slane %v3670, 7
  %v3703 = vsel %vm645, %v3700, %v3702
  %v3704 = vrot.slane %v3673, 7
  %v3705 = vsel %vm645, %v3702, %v3704
  %v3706 = vrot.slane %v3676, 7
  %v3707 = vsel %vm645, %v3704, %v3706
  %v3708 = vrot.slane %v3679, 7
  %v3709 = vsel %vm645, %v3706, %v3708
  %v3710 = vrot.slane %v3682, 7
  %v3711 = vsel %vm645, %v3708, %v3710
  %v3712 = vrot.slane %v3685, 7
  %v3713 = vsel %vm645, %v3710, %v3712
  %v3714 = vrot.slane %v3688, 7
  %v3715 = vsel %vm645, %v3712, %v3714
  %v3716 = vrot.slane %v3691, 7
  %v3717 = vsel %vm645, %v3714, %v3716
  %v3718 = vrot.slane %v3694, 7
  %v3719 = vsel %vm645, %v3716, %v3718
  %v3733 = vmul.f32 %v3643, %v3695
  %v3734 = vmul.f32 %v3644, %v3697
  %v3735 = vmul.f32 %v3645, %v3699
  %v3736 = vmul.f32 %v3646, %v3701
  %v3737 = vmul.f32 %v3647, %v3703
  %v3738 = vmul.f32 %v3648, %v3705
  %v3739 = vmul.f32 %v3649, %v3707
  %v3740 = vmul.f32 %v3650, %v3709
  %v3741 = vmul.f32 %v3651, %v3711
  %v3742 = vmul.f32 %v3652, %v3713
  %v3743 = vmul.f32 %v3653, %v3715
  %v3744 = vmul.f32 %v3654, %v3717
  %v3745 = vmul.f32 %v3655, %v3719
  %v3759 = vrot.slane %v3733, 1
  %v3760 = vrot.slane %v3734, 1
  %v3761 = vsel %vm710, %v3759, %v3760
  %v3762 = vrot.slane %v3735, 1
  %v3763 = vsel %vm710, %v3760, %v3762
  %v3764 = vrot.slane %v3736, 1
  %v3765 = vsel %vm710, %v3762, %v3764
  %v3766 = vrot.slane %v3737, 1
  %v3767 = vsel %vm710, %v3764, %v3766
  %v3768 = vrot.slane %v3738, 1
  %v3769 = vsel %vm710, %v3766, %v3768
  %v3770 = vrot.slane %v3739, 1
  %v3771 = vsel %vm710, %v3768, %v3770
  %v3772 = vrot.slane %v3740, 1
  %v3773 = vsel %vm710, %v3770, %v3772
  %v3774 = vrot.slane %v3741, 1
  %v3775 = vsel %vm710, %v3772, %v3774
  %v3776 = vrot.slane %v3742, 1
  %v3777 = vsel %vm710, %v3774, %v3776
  %v3778 = vrot.slane %v3743, 1
  %v3779 = vsel %vm710, %v3776, %v3778
  %v3780 = vrot.slane %v3744, 1
  %v3781 = vsel %vm710, %v3778, %v3780
  %v3782 = vrot.slane %v3745, 1
  %v3783 = vsel %vm710, %v3780, %v3782
  %v3797 = vadd.f32 %v3630, %v3761
  %v3798 = vadd.f32 %v3631, %v3763
  %v3799 = vadd.f32 %v3632, %v3765
  %v3800 = vadd.f32 %v3633, %v3767
  %v3801 = vadd.f32 %v3634, %v3769
  %v3802 = vadd.f32 %v3635, %v3771
  %v3803 = vadd.f32 %v3636, %v3773
  %v3804 = vadd.f32 %v3637, %v3775
  %v3805 = vadd.f32 %v3638, %v3777
  %v3806 = vadd.f32 %v3639, %v3779
  %v3807 = vadd.f32 %v3640, %v3781
  %v3808 = vadd.f32 %v3641, %v3783
  %v3809 = vadd.f32 %v3642, %v3782
  %v3810 = vld [vmem:[#allocation2 + $0x10] sm:$0x80]
  %v3811 = vld [vmem:[#allocation2 + $0x30] sm:$0xff]
  %v3812 = vld [vmem:[#allocation2 + $0x50] sm:$0xff]
  %v3813 = vld [vmem:[#allocation2 + $0x70] sm:$0xff]
  %v3814 = vld [vmem:[#allocation2 + $0x90] sm:$0xff]
  %v3815 = vld [vmem:[#allocation2 + $0xb0] sm:$0xff]
  %v3816 = vld [vmem:[#allocation2 + $0xd0] sm:$0xff]
  %v3817 = vld [vmem:[#allocation2 + $0xf0] sm:$0xff]
  %v3818 = vld [vmem:[#allocation2 + $0x110] sm:$0xff]
  %v3819 = vld [vmem:[#allocation2 + $0x130] sm:$0xff]
  %v3820 = vld [vmem:[#allocation2 + $0x150] sm:$0xff]
  %v3821 = vld [vmem:[#allocation2 + $0x170] sm:$0xff]
  %v3822 = vld [vmem:[#allocation2 + $0x190] sm:$0xff]
  %v3823 = vld [vmem:[#allocation2 + $0x1b0] sm:$0x1]
  %3824 = vset.pattern.permute.xlu0 14
  %3825 = vperm.xlu0 %3824, %v37
  %v3826 = vpop.permute.xlu0 %3825
  %3827 = vset.pattern.permute.xlu0 14
  %3828 = vperm.xlu0 %3827, %v38
  %v3829 = vpop.permute.xlu0 %3828
  %3830 = vset.pattern.permute.xlu0 14
  %3831 = vperm.xlu0 %3830, %v39
  %v3832 = vpop.permute.xlu0 %3831
  %3833 = vset.pattern.permute.xlu0 14
  %3834 = vperm.xlu0 %3833, %v40
  %v3835 = vpop.permute.xlu0 %3834
  %3836 = vset.pattern.permute.xlu0 14
  %3837 = vperm.xlu0 %3836, %v41
  %v3838 = vpop.permute.xlu0 %3837
  %3839 = vset.pattern.permute.xlu0 14
  %3840 = vperm.xlu0 %3839, %v42
  %v3841 = vpop.permute.xlu0 %3840
  %3842 = vset.pattern.permute.xlu0 14
  %3843 = vperm.xlu0 %3842, %v43
  %v3844 = vpop.permute.xlu0 %3843
  %3845 = vset.pattern.permute.xlu0 14
  %3846 = vperm.xlu0 %3845, %v44
  %v3847 = vpop.permute.xlu0 %3846
  %3848 = vset.pattern.permute.xlu0 14
  %3849 = vperm.xlu0 %3848, %v45
  %v3850 = vpop.permute.xlu0 %3849
  %3851 = vset.pattern.permute.xlu0 14
  %3852 = vperm.xlu0 %3851, %v46
  %v3853 = vpop.permute.xlu0 %3852
  %3854 = vset.pattern.permute.xlu0 14
  %3855 = vperm.xlu0 %3854, %v47
  %v3856 = vpop.permute.xlu0 %3855
  %3857 = vset.pattern.permute.xlu0 14
  %3858 = vperm.xlu0 %3857, %v48
  %v3859 = vpop.permute.xlu0 %3858
  %3860 = vset.pattern.permute.xlu0 14
  %3861 = vperm.xlu0 %3860, %v49
  %v3862 = vpop.permute.xlu0 %3861
  %v3863 = vrot.slane %v3826, 1
  %v3864 = vrot.slane %v3829, 1
  %v3865 = vsel %vm710, %v3863, %v3864
  %v3866 = vrot.slane %v3832, 1
  %v3867 = vsel %vm710, %v3864, %v3866
  %v3868 = vrot.slane %v3835, 1
  %v3869 = vsel %vm710, %v3866, %v3868
  %v3870 = vrot.slane %v3838, 1
  %v3871 = vsel %vm710, %v3868, %v3870
  %v3872 = vrot.slane %v3841, 1
  %v3873 = vsel %vm710, %v3870, %v3872
  %v3874 = vrot.slane %v3844, 1
  %v3875 = vsel %vm710, %v3872, %v3874
  %v3876 = vrot.slane %v3847, 1
  %v3877 = vsel %vm710, %v3874, %v3876
  %v3878 = vrot.slane %v3850, 1
  %v3879 = vsel %vm710, %v3876, %v3878
  %v3880 = vrot.slane %v3853, 1
  %v3881 = vsel %vm710, %v3878, %v3880
  %v3882 = vrot.slane %v3856, 1
  %v3883 = vsel %vm710, %v3880, %v3882
  %v3884 = vrot.slane %v3859, 1
  %v3885 = vsel %vm710, %v3882, %v3884
  %v3886 = vrot.slane %v3862, 1
  %v3887 = vsel %vm710, %v3884, %v3886
  %v3902 = vmul.f32 %v3810, %v3863
  %v3903 = vmul.f32 %v3811, %v3865
  %v3904 = vmul.f32 %v3812, %v3867
  %v3905 = vmul.f32 %v3813, %v3869
  %v3906 = vmul.f32 %v3814, %v3871
  %v3907 = vmul.f32 %v3815, %v3873
  %v3908 = vmul.f32 %v3816, %v3875
  %v3909 = vmul.f32 %v3817, %v3877
  %v3910 = vmul.f32 %v3818, %v3879
  %v3911 = vmul.f32 %v3819, %v3881
  %v3912 = vmul.f32 %v3820, %v3883
  %v3913 = vmul.f32 %v3821, %v3885
  %v3914 = vmul.f32 %v3822, %v3887
  %v3915 = vmul.f32 %v3823, %v3886
  %v3930 = vrot.slane %v3902, 7
  %v3931 = vrot.slane %v3903, 7
  %v3932 = vsel %vm645, %v3930, %v3931
  %v3933 = vrot.slane %v3904, 7
  %v3934 = vsel %vm645, %v3931, %v3933
  %v3935 = vrot.slane %v3905, 7
  %v3936 = vsel %vm645, %v3933, %v3935
  %v3937 = vrot.slane %v3906, 7
  %v3938 = vsel %vm645, %v3935, %v3937
  %v3939 = vrot.slane %v3907, 7
  %v3940 = vsel %vm645, %v3937, %v3939
  %v3941 = vrot.slane %v3908, 7
  %v3942 = vsel %vm645, %v3939, %v3941
  %v3943 = vrot.slane %v3909, 7
  %v3944 = vsel %vm645, %v3941, %v3943
  %v3945 = vrot.slane %v3910, 7
  %v3946 = vsel %vm645, %v3943, %v3945
  %v3947 = vrot.slane %v3911, 7
  %v3948 = vsel %vm645, %v3945, %v3947
  %v3949 = vrot.slane %v3912, 7
  %v3950 = vsel %vm645, %v3947, %v3949
  %v3951 = vrot.slane %v3913, 7
  %v3952 = vsel %vm645, %v3949, %v3951
  %v3953 = vrot.slane %v3914, 7
  %v3954 = vsel %vm645, %v3951, %v3953
  %v3955 = vrot.slane %v3915, 7
  %v3956 = vsel %vm645, %v3953, %v3955
  %v3970 = vadd.f32 %v3797, %v3932
  %v3971 = vadd.f32 %v3798, %v3934
  %v3972 = vadd.f32 %v3799, %v3936
  %v3973 = vadd.f32 %v3800, %v3938
  %v3974 = vadd.f32 %v3801, %v3940
  %v3975 = vadd.f32 %v3802, %v3942
  %v3976 = vadd.f32 %v3803, %v3944
  %v3977 = vadd.f32 %v3804, %v3946
  %v3978 = vadd.f32 %v3805, %v3948
  %v3979 = vadd.f32 %v3806, %v3950
  %v3980 = vadd.f32 %v3807, %v3952
  %v3981 = vadd.f32 %v3808, %v3954
  %v3982 = vadd.f32 %v3809, %v3956
  %v3983 = vld [vmem:[#allocation2 + $0x38] sm:$0xff]
  %v3984 = vld [vmem:[#allocation2 + $0x58] sm:$0xff]
  %v3985 = vld [vmem:[#allocation2 + $0x78] sm:$0xff]
  %v3986 = vld [vmem:[#allocation2 + $0x98] sm:$0xff]
  %v3987 = vld [vmem:[#allocation2 + $0xb8] sm:$0xff]
  %v3988 = vld [vmem:[#allocation2 + $0xd8] sm:$0xff]
  %v3989 = vld [vmem:[#allocation2 + $0xf8] sm:$0xff]
  %v3990 = vld [vmem:[#allocation2 + $0x118] sm:$0xff]
  %v3991 = vld [vmem:[#allocation2 + $0x138] sm:$0xff]
  %v3992 = vld [vmem:[#allocation2 + $0x158] sm:$0xff]
  %v3993 = vld [vmem:[#allocation2 + $0x178] sm:$0xff]
  %v3994 = vld [vmem:[#allocation2 + $0x198] sm:$0xff]
  %v3995 = vld [vmem:[#allocation2 + $0x1b8] sm:$0x3]
  %v3996 = vadd.f32 %v3970, %v3983
  %v3997 = vadd.f32 %v3971, %v3984
  %v3998 = vadd.f32 %v3972, %v3985
  %v3999 = vadd.f32 %v3973, %v3986
  %v4000 = vadd.f32 %v3974, %v3987
  %v4001 = vadd.f32 %v3975, %v3988
  %v4002 = vadd.f32 %v3976, %v3989
  %v4003 = vadd.f32 %v3977, %v3990
  %v4004 = vadd.f32 %v3978, %v3991
  %v4005 = vadd.f32 %v3979, %v3992
  %v4006 = vadd.f32 %v3980, %v3993
  %v4007 = vadd.f32 %v3981, %v3994
  %v4008 = vadd.f32 %v3982, %v3995
  %v4009 = vadd.f32 %v3996, %v3997
  %v4010 = vadd.f32 %v4009, %v3998
  %v4011 = vadd.f32 %v4010, %v3999
  %v4012 = vadd.f32 %v4011, %v4000
  %v4013 = vadd.f32 %v4012, %v4001
  %v4014 = vadd.f32 %v4013, %v4002
  %v4015 = vadd.f32 %v4014, %v4003
  %v4016 = vadd.f32 %v4015, %v4004
  %v4017 = vadd.f32 %v4016, %v4005
  %v4018 = vadd.f32 %v4017, %v4006
  %v4019 = vadd.f32 %v4018, %v4007
  %v4020 = vsel %vm1828, %v4008, 0.0
  %v4021 = vadd.f32 %v4019, %v4020
  %v4022 = vrot.slane %v4021, 4
  %v4023 = vadd.f32 %v4021, %v4022
  %v4024 = vrot.slane %v4023, 2
  %v4025 = vadd.f32 %v4023, %v4024
  %v4026 = vrot.slane %v4025, 1
  %v4027 = vadd.f32 %v4025, %v4026
  %v4028 = vmul.f32 %v4027, 0.010204081
  %v4029 = vsub.f32 %v3996, %v4028
  %v4030 = vsub.f32 %v3997, %v4028
  %v4031 = vsub.f32 %v3998, %v4028
  %v4032 = vsub.f32 %v3999, %v4028
  %v4033 = vsub.f32 %v4000, %v4028
  %v4034 = vsub.f32 %v4001, %v4028
  %v4035 = vsub.f32 %v4002, %v4028
  %v4036 = vsub.f32 %v4003, %v4028
  %v4037 = vsub.f32 %v4004, %v4028
  %v4038 = vsub.f32 %v4005, %v4028
  %v4039 = vsub.f32 %v4006, %v4028
  %v4040 = vsub.f32 %v4007, %v4028
  %v4041 = vsub.f32 %v4008, %v4028
  %v4042 = vmul.f32 %v4029, %v4029
  %v4043 = vmul.f32 %v4030, %v4030
  %v4044 = vmul.f32 %v4031, %v4031
  %v4045 = vmul.f32 %v4032, %v4032
  %v4046 = vmul.f32 %v4033, %v4033
  %v4047 = vmul.f32 %v4034, %v4034
  %v4048 = vmul.f32 %v4035, %v4035
  %v4049 = vmul.f32 %v4036, %v4036
  %v4050 = vmul.f32 %v4037, %v4037
  %v4051 = vmul.f32 %v4038, %v4038
  %v4052 = vmul.f32 %v4039, %v4039
  %v4053 = vmul.f32 %v4040, %v4040
  %v4054 = vmul.f32 %v4041, %v4041
  %v4055 = vadd.f32 %v4042, %v4043
  %v4056 = vadd.f32 %v4055, %v4044
  %v4057 = vadd.f32 %v4056, %v4045
  %v4058 = vadd.f32 %v4057, %v4046
  %v4059 = vadd.f32 %v4058, %v4047
  %v4060 = vadd.f32 %v4059, %v4048
  %v4061 = vadd.f32 %v4060, %v4049
  %v4062 = vadd.f32 %v4061, %v4050
  %v4063 = vadd.f32 %v4062, %v4051
  %v4064 = vadd.f32 %v4063, %v4052
  %v4065 = vadd.f32 %v4064, %v4053
  %v4066 = vsel %vm1828, %v4054, 0.0
  %v4067 = vadd.f32 %v4065, %v4066
  %v4068 = vrot.slane %v4067, 4
  %v4069 = vadd.f32 %v4067, %v4068
  %v4070 = vrot.slane %v4069, 2
  %v4071 = vadd.f32 %v4069, %v4070
  %v4072 = vrot.slane %v4071, 1
  %v4073 = vadd.f32 %v4071, %v4072
  %v4074 = vmul.f32 %v4073, 0.010204081
  %v4075 = vadd.f32 %v4074, 1e-05
  %v4076 = vrsqrt.pop %v4075
  %v4077 = vmul.f32 %v4076, %v4075
  %v4078 = vmul.f32 %v4077, %v4076
  %v4079 = vmul.f32 0.5, %v4078
  %v4080 = vsub.f32 1.5, %v4079
  %v4081 = vmul.f32 %v4076, %v4080
  %vm4082 = vweird.f32 %v4075
  %vm4083 = vweird.f32 %v4076
  %vm4084 = vmor %vm4082, %vm4083
  %v4085 = vsel %vm4084, %v4076, %v4081
  %v4086 = vmul.f32 %v4029, %v4085
  %v4087 = vmul.f32 %v4030, %v4085
  %v4088 = vmul.f32 %v4031, %v4085
  %v4089 = vmul.f32 %v4032, %v4085
  %v4090 = vmul.f32 %v4033, %v4085
  %v4091 = vmul.f32 %v4034, %v4085
  %v4092 = vmul.f32 %v4035, %v4085
  %v4093 = vmul.f32 %v4036, %v4085
  %v4094 = vmul.f32 %v4037, %v4085
  %v4095 = vmul.f32 %v4038, %v4085
  %v4096 = vmul.f32 %v4039, %v4085
  %v4097 = vmul.f32 %v4040, %v4085
  %v4098 = vmul.f32 %v4041, %v4085
  %v4099 = vld [vmem:[%s4] sm:$0x1]
  %v4101 = vperm.slane %v4099, 0
  %v4103 = vmul.f32 %v4086, %v4101
  %v4104 = vmul.f32 %v4087, %v4101
  %v4105 = vmul.f32 %v4088, %v4101
  %v4106 = vmul.f32 %v4089, %v4101
  %v4107 = vmul.f32 %v4090, %v4101
  %v4108 = vmul.f32 %v4091, %v4101
  %v4109 = vmul.f32 %v4092, %v4101
  %v4110 = vmul.f32 %v4093, %v4101
  %v4111 = vmul.f32 %v4094, %v4101
  %v4112 = vmul.f32 %v4095, %v4101
  %v4113 = vmul.f32 %v4096, %v4101
  %v4114 = vmul.f32 %v4097, %v4101
  %v4115 = vmul.f32 %v4098, %v4101
  %v4116 = vld [vmem:[%s5] sm:$0x1]
  %v4118 = vperm.slane %v4116, 0
  %v4120 = vadd.f32 %v4103, %v4118
  %v4121 = vadd.f32 %v4104, %v4118
  %v4122 = vadd.f32 %v4105, %v4118
  %v4123 = vadd.f32 %v4106, %v4118
  %v4124 = vadd.f32 %v4107, %v4118
  %v4125 = vadd.f32 %v4108, %v4118
  %v4126 = vadd.f32 %v4109, %v4118
  %v4127 = vadd.f32 %v4110, %v4118
  %v4128 = vadd.f32 %v4111, %v4118
  %v4129 = vadd.f32 %v4112, %v4118
  %v4130 = vadd.f32 %v4113, %v4118
  %v4131 = vadd.f32 %v4114, %v4118
  %v4132 = vadd.f32 %v4115, %v4118
  %v4133 = vmul.f32 %v4120, 0.2
  %v4134 = vmul.f32 %v4121, 0.2
  %v4135 = vmul.f32 %v4122, 0.2
  %v4136 = vmul.f32 %v4123, 0.2
  %v4137 = vmul.f32 %v4124, 0.2
  %v4138 = vmul.f32 %v4125, 0.2
  %v4139 = vmul.f32 %v4126, 0.2
  %v4140 = vmul.f32 %v4127, 0.2
  %v4141 = vmul.f32 %v4128, 0.2
  %v4142 = vmul.f32 %v4129, 0.2
  %v4143 = vmul.f32 %v4130, 0.2
  %v4144 = vmul.f32 %v4131, 0.2
  %v4145 = vmul.f32 %v4132, 0.2
  %v4146 = vmax.f32 %v4120, %v4133
  %v4147 = vmax.f32 %v4121, %v4134
  %v4148 = vmax.f32 %v4122, %v4135
  %v4149 = vmax.f32 %v4123, %v4136
  %v4150 = vmax.f32 %v4124, %v4137
  %v4151 = vmax.f32 %v4125, %v4138
  %v4152 = vmax.f32 %v4126, %v4139
  %v4153 = vmax.f32 %v4127, %v4140
  %v4154 = vmax.f32 %v4128, %v4141
  %v4155 = vmax.f32 %v4129, %v4142
  %v4156 = vmax.f32 %v4130, %v4143
  %v4157 = vmax.f32 %v4131, %v4144
  %v4158 = vmax.f32 %v4132, %v4145
  %v4159 = vld [vmem:[%s6] sm:$0xff]
  %v4160 = vld [vmem:[%s6 + $0x8] sm:$0xff]
  %v4161 = vld [vmem:[%s6 + $0x10] sm:$0xff]
  %v4162 = vld [vmem:[%s6 + $0x18] sm:$0xff]
  %v4163 = vld [vmem:[%s6 + $0x20] sm:$0xff]
  %v4164 = vld [vmem:[%s6 + $0x28] sm:$0xff]
  %v4165 = vld [vmem:[%s6 + $0x30] sm:$0xff]
  %v4166 = vld [vmem:[%s6 + $0x38] sm:$0xff]
  %v4167 = vld [vmem:[%s6 + $0x40] sm:$0xff]
  %v4168 = vld [vmem:[%s6 + $0x48] sm:$0xff]
  %v4169 = vld [vmem:[%s6 + $0x50] sm:$0xff]
  %v4170 = vld [vmem:[%s6 + $0x58] sm:$0xff]
  %v4171 = vld [vmem:[%s6 + $0x60] sm:$0x3]
  %v4172 = vmul.f32 %v4146, %v4159
  %v4173 = vmul.f32 %v4147, %v4160
  %v4174 = vmul.f32 %v4148, %v4161
  %v4175 = vmul.f32 %v4149, %v4162
  %v4176 = vmul.f32 %v4150, %v4163
  %v4177 = vmul.f32 %v4151, %v4164
  %v4178 = vmul.f32 %v4152, %v4165
  %v4179 = vmul.f32 %v4153, %v4166
  %v4180 = vmul.f32 %v4154, %v4167
  %v4181 = vmul.f32 %v4155, %v4168
  %v4182 = vmul.f32 %v4156, %v4169
  %v4183 = vmul.f32 %v4157, %v4170
  %v4184 = vmul.f32 %v4158, %v4171
  %v4185 = vld [vmem:[%s7] sm:$0x3]
  %vm4186 = vcmask 801792
  %v4188 = vsel %vm4186, %v4185, 0
  %v4191 = vsel %vm1828, %v4184, 0
  %4193 = vmatpush.msra.mxu0 0.0
  %4194 = vmatpush.msra.mxu0 0.0
  %4195 = vmatpush.msra.mxu0 0.0
  %4196 = vmatpush.msra.mxu0 %v4191
  %4197 = vmatpush.msra.mxu0 %v4183
  %4198 = vmatpush.msra.mxu0 %v4182
  %4199 = vmatpush.msra.mxu0 %v4181
  %4200 = vmatpush.msra.mxu0 %v4180
  %4201 = vmatpush.msra.mxu0 %v4179
  %4202 = vmatpush.msra.mxu0 %v4178
  %4203 = vmatpush.msra.mxu0 %v4177
  %4204 = vmatpush.msra.mxu0 %v4176
  %4205 = vmatpush.msra.mxu0 %v4175
  %4206 = vmatpush.msra.mxu0 %v4174
  %4207 = vmatpush.msra.mxu0 %v4173
  %4208 = vmatpush.msra.mxu0 %v4172
  %4209 = vmatmul.f32.gmra.mxu0 %v4188
  %v4210 = vpop.f32.mrf.mxu0
  %v4211 = vadd.f32 0.0, %v4210
  %4212 = vdwg.mxu0
  %v4213 = vsel %vm1828, %v4211, 0.0
  %4214 = vadd.xlane.f32.xlu0 %v4213
  %v4215 = vpop.xlane.xlu0 %4214
  %v4216 = vld [vmem:[#allocation3] sm:$0x1]
  %v4218 = vperm.slane %v4216, 0
  %v4220 = vadd.f32 %v4215, %v4218
  %v4221 = vxor.u32 %v4220, 2147483648
  %v4222 = vmul.f32 %v4221, 1.442695
  %v4223 = vpow.pop %v4222
  %v4224 = vadd.f32 %v4223, 1.0
  %v4225 = vrcp.pop %v4224
  %v4226 = vmul.f32 %v4224, %v4225
  %v4227 = vsub.f32 1.0, %v4226
  %v4228 = vmul.f32 %v4225, %v4227
  %v4229 = vadd.f32 %v4225, %v4228
  %vm4230 = vweird.f32 %v4224
  %vm4231 = vweird.f32 %v4225
  %vm4232 = vmor %vm4230, %vm4231
  %v4233 = vsel %vm4232, %v4225, %v4229
  %v4234 = vand.u32 2147483647, %v4224
  %vm4235 = vcmp.eq.f32.partialorder %v4234, 8.507059e+37
  %v4236 = vand.u32 %v4224, 2147483648
  %v4237 = vor.u32 1.1754944e-38, %v4236
  %v4238 = vsel %vm4235, %v4237, %v4233
  %v4239 = vmul.f32 1.0, %v4238
  %vm4240 = vcmask 1024
  %4241 = vst.msk [vmem:[%s9] sm:$0x3] %vm4240, %v4239
  // Predicated region
  $region38: #{discriminator_forward.1} parent=0 // pred_check
    _
  $region39: #{discriminator_forward.1} parent=0 // pred_check_branch
    %4243 = sbr.rel (0) target = $region41
  $region40: #{discriminator_forward.1} parent=0 // pred_region
    _
  $region41: #{discriminator_forward.1} parent=0 // pred_fallthru
    _
  // Predicated region
  $region42: #{discriminator_forward.1} parent=0 // pred_check
    _
  $region43: #{discriminator_forward.1} parent=0 // pred_check_branch
    %4245 = sbr.rel (0) target = $region45
  $region44: #{discriminator_forward.1} parent=0 // pred_region
    _
  $region45: #{discriminator_forward.1} parent=0 // pred_fallthru
    _

</llo_original>
